<compile_context>
chip_gen: v7x
topology: tpu7x:2x2x1
jax: 0.10.0
libtpu: 0.0.40
codegen_flags: <defaults>
</compile_context>

<pallas_src>
import functools

import numpy as np
import jax
import jax.numpy as jnp
from jax.experimental import pallas as pl
from jax.experimental.pallas import tpu as pltpu


# ----------------------------------------------------------------------------
# Fused generator kernel (one batch tile per grid step).
#
# Activation layout inside the kernel:
#   rows = (spatial_row, sample_in_tile)   cols = (spatial_col * Cin + cin)
# With this layout the stride-2 H-upsample is a set of static, contiguous
# bt-row block copies, and the W-upsample + channel mixing is a single matmul
# against a host-precomputed banded matrix G_cat.
# ----------------------------------------------------------------------------
def _generator_kernel(z_ref, w1_ref, g2_ref, g3_ref, g4_ref, out_ref,
                      s2_ref, s3_ref, s4_ref, *, bt):
    f32 = jnp.float32

    def relu_bf16(v):
        return jnp.maximum(v, 0.0).astype(jnp.bfloat16)

    def split_rows(a, h_in):
        return [a[h * bt:(h + 1) * bt, :] for h in range(h_in)]

    def deconv_s2(blocks, g_ref, s_ref):
        """ConvTranspose2d(k=4, stride=2, pad=1) as ONE MXU matmul.

        blocks[h] : (bt, W_in*Cin) bf16 rows of the input at spatial row h.
        s_ref     : (2*H_in*bt, 4*W_in*Cin) bf16 scratch; lane block i holds
                    input row h scattered to output row y = 2h - 1 + i.
        g_ref     : (4*W_in*Cin, W_out*Cout) bf16, vstack of the 4 row taps.
        """
        h_in = len(blocks)
        wc = blocks[0].shape[1]
        s_ref[...] = jnp.zeros_like(s_ref)          # ~half of S stays zero
        for i in range(4):
            for h in range(h_in):
                y = 2 * h - 1 + i                   # stride=2, pad=1
                if 0 <= y < 2 * h_in:
                    s_ref[pl.ds(y * bt, bt), pl.ds(i * wc, wc)] = blocks[h]
        # Single K = 4*W_in*Cin matmul; accumulation of the 4 taps happens
        # inside the MXU result buffer (f32 accumulation of bf16 products).
        return jnp.dot(s_ref[...], g_ref[...], preferred_element_type=f32)

    # deconv1: 1x1 -> 4x4 (stride 1, pad 0): one dense matmul per output row h.
    z = z_ref[...].astype(jnp.bfloat16)                                   # (bt, nz)
    blocks = [relu_bf16(jnp.dot(z, w1_ref[h], preferred_element_type=f32))
              for h in range(4)]                                          # 4 x (bt, 4*C1)

    # deconv2: 4x4 -> 8x8
    a = relu_bf16(deconv_s2(blocks, g2_ref, s2_ref))                      # (8*bt,  8*C2)
    # deconv3: 8x8 -> 16x16
    a = relu_bf16(deconv_s2(split_rows(a, 8), g3_ref, s3_ref))            # (16*bt, 16*C3)
    # deconv4: 16x16 -> 32x32 + tanh; lane dim already zero-padded to 128.
    out_ref[...] = jnp.tanh(deconv_s2(split_rows(a, 16), g4_ref, s4_ref)) # (32*bt, wpad)


# ----------------------------------------------------------------------------
# Host-side, one-time weight expansion.
# ----------------------------------------------------------------------------
def _round_up(x, m):
    return (x + m - 1) // m * m


def _expand_g_cat(w, stride, pad, w_in, n_cols):
    """PyTorch ConvTranspose2d weight (Cin, Cout, kh, kw) ->
       G_cat of shape (kh * w_in * Cin, n_cols): row block i, row (w, cin)
       maps to output column (x, cout) with j = x - stride*w + pad in [0, kw).
       n_cols may exceed W_out*Cout (zero lane padding for dense stores)."""
    w = np.asarray(w, np.float32)
    cin, cout, kh, kw = w.shape
    wo = (w_in - 1) * stride - 2 * pad + kw
    assert n_cols >= wo * cout
    g = np.zeros((kh, w_in * cin, n_cols), np.float32)
    for i in range(kh):
        for wc in range(w_in):
            for x in range(wo):
                j = x - stride * wc + pad
                if 0 <= j < kw:
                    g[i, wc * cin:(wc + 1) * cin, x * cout:(x + 1) * cout] = w[:, :, i, j]
    return g.reshape(kh * w_in * cin, n_cols)


def prepare_generator(params, n_out=3):
    """params: w1..w4 in PyTorch ConvTranspose2d layout (Cin, Cout, 4, 4)."""
    w1 = np.asarray(params["w1"], np.float32)              # (nz, 4*nf, 4, 4)
    nz, c1 = w1.shape[0], w1.shape[1]
    c2 = int(np.asarray(params["w2"]).shape[1])
    c3 = int(np.asarray(params["w3"]).shape[1])
    wpad = _round_up(32 * n_out, 128)                      # lane-dense output width

    # Layer 1: out[(h, b), j*C1 + co] = sum_cin z[b, cin] * W1[cin, co, h, j]
    w1b = np.transpose(w1, (2, 0, 3, 1)).reshape(4, nz, 4 * c1)

    return {
        "w1": jnp.asarray(w1b, jnp.bfloat16),
        "g2": jnp.asarray(_expand_g_cat(params["w2"], 2, 1, 4, 8 * c2), jnp.bfloat16),
        "g3": jnp.asarray(_expand_g_cat(params["w3"], 2, 1, 8, 16 * c3), jnp.bfloat16),
        "g4": jnp.asarray(_expand_g_cat(params["w4"], 2, 1, 16, wpad), jnp.bfloat16),
    }


# ----------------------------------------------------------------------------
# Per-chip VMEM budgeting and batch-tile selection.
# ----------------------------------------------------------------------------
def _vmem_budget_bytes():
    cap = None
    try:
        info = pltpu.get_tpu_info()
        for name in ("vmem_capacity_bytes", "vmem_size_bytes", "vmem_bytes"):
            cap = getattr(info, name, None)
            if cap:
                break
    except Exception:
        cap = None
    if not cap:
        cap = 64 * 1024 * 1024               # v7x has the smallest VMEM: assume it
    budget = int(0.70 * cap)                 # headroom for Mosaic internals
    return max(32 * 1024 * 1024, min(budget, 96 * 1024 * 1024))


def _vmem_estimate_bytes(prepared, bt, nz, wpad):
    # Weights are VMEM-resident; constant index_maps mean they are DMA'd only
    # once, but the auto-pipeline still allocates 2 buffers for each input.
    w = 2 * sum(int(v.size) * v.dtype.itemsize for v in prepared.values())
    io = 2 * (bt * nz * 4 + bt * 32 * wpad * 4)                    # z / out blocks
    scr = bt * (8 * prepared["g2"].shape[0] + 16 * prepared["g3"].shape[0]
                + 32 * prepared["g4"].shape[0]) * 2                # bf16 scratches
    act = bt * (8 * prepared["g2"].shape[1] + 16 * prepared["g3"].shape[1]
                + 32 * wpad) * 6                                   # f32 result + bf16 copy
    return w + io + scr + act


def _pick_batch_tile(batch, prepared, nz, wpad, budget):
    # Largest tile (cap 16 -> last-layer matmul M = bt*32 = 512 rows) that fits
    # the VMEM budget.  grid == 1 is fine (v5e/v6e single-TC); batches that are
    # multiples of 32 still leave >= 2 "parallel" steps for v7x megacore.
    cands = [bt for bt in (16, 8) if batch % bt == 0]
    cands += [bt for bt in range(min(batch, 16), 0, -1)
              if batch % bt == 0 and bt not in cands]
    for bt in cands:
        if _vmem_estimate_bytes(prepared, bt, nz, wpad) <= budget:
            return bt
    return cands[-1]


# ----------------------------------------------------------------------------
# Forward wrapper.
# ----------------------------------------------------------------------------
def dcgan_generator_forward(x, prepared, *, n_out=3, bt=8,
                            vmem_limit=48 * 1024 * 1024):
    w1b, g2, g3, g4 = (prepared[k] for k in ("w1", "g2", "g3", "g4"))
    z = x.reshape(x.shape[0], -1).astype(jnp.float32)    # matches x.view(-1, n_z, 1, 1)
    batch, nz = z.shape
    assert batch % bt == 0
    grid = batch // bt
    wpad = g4.shape[1]

    out = pl.pallas_call(
        functools.partial(_generator_kernel, bt=bt),
        out_shape=jax.ShapeDtypeStruct((batch * 32, wpad), jnp.float32),
        grid=(grid,),
        in_specs=[
            pl.BlockSpec((bt, nz), lambda g: (g, 0)),        # noise tile
            pl.BlockSpec(w1b.shape, lambda g: (0, 0, 0)),    # weights: constant
            pl.BlockSpec(g2.shape, lambda g: (0, 0)),        #   index maps ->
            pl.BlockSpec(g3.shape, lambda g: (0, 0)),        #   DMA'd once and
            pl.BlockSpec(g4.shape, lambda g: (0, 0)),        #   VMEM-resident
        ],
        out_specs=pl.BlockSpec((bt * 32, wpad), lambda g: (g, 0)),
        scratch_shapes=[
            pltpu.VMEM((bt * 8, g2.shape[0]), jnp.bfloat16),   # S for deconv2
            pltpu.VMEM((bt * 16, g3.shape[0]), jnp.bfloat16),  # S for deconv3
            pltpu.VMEM((bt * 32, g4.shape[0]), jnp.bfloat16),  # S for deconv4
        ],
        compiler_params=pltpu.CompilerParams(
            dimension_semantics=("parallel",),
            vmem_limit_bytes=int(vmem_limit)),
    )(z, w1b, g2, g3, g4)

    # (batch*32, wpad): rows = (tile, y, b_in_tile), cols = (x, o) + lane pad.
    img = out[:, :32 * n_out].reshape(grid, 32, bt, 32, n_out)   # (g, y, b, x, o)
    img = jnp.transpose(img, (0, 2, 4, 1, 3))                    # (g, b, o, y, x)
    return img.reshape(batch, n_out, 32, 32)


# ----------------------------------------------------------------------------
# Pure-JAX reference (lax dilated conv == ConvTranspose2d) for validation.
# ----------------------------------------------------------------------------
def _conv_transpose_nchw(x, w, stride, pad):
    kh, kw = w.shape[2], w.shape[3]
    w_oihw = jnp.transpose(jnp.flip(w, (2, 3)), (1, 0, 2, 3))
    return jax.lax.conv_general_dilated(
        x, w_oihw, window_strides=(1, 1),
        padding=[(kh - 1 - pad, kh - 1 - pad), (kw - 1 - pad, kw - 1 - pad)],
        lhs_dilation=(stride, stride),
        dimension_numbers=("NCHW", "OIHW", "NCHW"),
        preferred_element_type=jnp.float32)


def _ref_forward(x, params):
    def layer(h, w, s, p, act):
        y = _conv_transpose_nchw(h.astype(jnp.bfloat16), w.astype(jnp.bfloat16), s, p)
        return act(y)

    relu = lambda v: jnp.maximum(v, 0.0)
    h = x.reshape(x.shape[0], -1, 1, 1).astype(jnp.float32)
    h = layer(h, params["w1"], 1, 0, relu)
    h = layer(h, params["w2"], 2, 1, relu)
    h = layer(h, params["w3"], 2, 1, relu)
    h = layer(h, params["w4"], 2, 1, jnp.tanh)
    return h


def init_params(key, n_z, n_filters, n_out=3):
    ks = jax.random.split(key, 4)

    def w(k, cin, cout):   # PyTorch ConvTranspose2d layout: (Cin, Cout, kh, kw)
        return jax.random.normal(k, (cin, cout, 4, 4), jnp.float32) / np.sqrt(cin * 16)

    return {
        "w1": w(ks[0], n_z, n_filters * 4),
        "w2": w(ks[1], n_filters * 4, n_filters * 2),
        "w3": w(ks[2], n_filters * 2, n_filters),
        "w4": w(ks[3], n_filters, n_out),
    }


if __name__ == "__main__":
    key = jax.random.PRNGKey(0)
    k_x, k_p = jax.random.split(key)

    batch, n_z, n_filters, n_out = 32, 16, 8, 3
    x = jax.random.normal(k_x, (batch, n_z, 1, 1), jnp.float32)   # noise [bs, nz, 1, 1]
    params = init_params(k_p, n_z, n_filters, n_out)

    prepared = prepare_generator(params, n_out=n_out)
    budget = _vmem_budget_bytes()
    wpad = prepared["g4"].shape[1]
    bt = _pick_batch_tile(batch, prepared, n_z, wpad, budget)     # -> 16, grid = 2

    fwd = jax.jit(functools.partial(dcgan_generator_forward,
                                    n_out=n_out, bt=bt, vmem_limit=budget))
    out = jax.block_until_ready(fwd(x, prepared))
    assert out.shape == (batch, n_out, 32, 32)

    ref = _ref_forward(x, params)
    np.testing.assert_allclose(np.asarray(out), np.asarray(ref), rtol=2e-2, atol=2e-2)
    print("KERNEL_OK")
</pallas_src>

<mosaic_0001>
module attributes {stable_mosaic.version = 11 : i64} {
  func.func @_generator_kernel(%arg0: i32, %arg1: memref<16x16xf32, #tpu.memory_space<vmem>>, %arg2: memref<4x16x128xbf16, #tpu.memory_space<vmem>>, %arg3: memref<512x128xbf16, #tpu.memory_space<vmem>>, %arg4: memref<512x128xbf16, #tpu.memory_space<vmem>>, %arg5: memref<512x128xbf16, #tpu.memory_space<vmem>>, %arg6: memref<512x128xf32, #tpu.memory_space<vmem>>, %arg7: memref<128x512xbf16, #tpu.memory_space<vmem>>, %arg8: memref<256x512xbf16, #tpu.memory_space<vmem>>, %arg9: memref<512x512xbf16, #tpu.memory_space<vmem>>) attributes {dimension_semantics = [#tpu.dimension_semantics<parallel>], iteration_bounds = array<i64: 2>, scalar_prefetch = 0 : i64, scratch_operands = 3 : i64, tpu.core_type = #tpu.core_type<tc>, window_params = [{transform_indices = @transform_0, window_bounds = array<i64: 16, 16>}, {pipeline_mode = #tpu.pipeline_mode<synchronous>, transform_indices = @transform_1, window_bounds = array<i64: 4, 16, 128>}, {pipeline_mode = #tpu.pipeline_mode<synchronous>, transform_indices = @transform_2, window_bounds = array<i64: 512, 128>}, {pipeline_mode = #tpu.pipeline_mode<synchronous>, transform_indices = @transform_3, window_bounds = array<i64: 512, 128>}, {pipeline_mode = #tpu.pipeline_mode<synchronous>, transform_indices = @transform_4, window_bounds = array<i64: 512, 128>}, {transform_indices = @transform_5, window_bounds = array<i64: 512, 128>}]} {
    %c0 = arith.constant 0 : index
    %c0_0 = arith.constant 0 : index
    %0 = vector.load %arg1[%c0, %c0_0] : memref<16x16xf32, #tpu.memory_space<vmem>>, vector<16x16xf32>
    %1 = arith.truncf %0 : vector<16x16xf32> to vector<16x16xbf16>
    %c0_1 = arith.constant 0 : index
    %c0_2 = arith.constant 0 : index
    %c0_3 = arith.constant 0 : index
    %2 = vector.load %arg2[%c0_1, %c0_2, %c0_3] : memref<4x16x128xbf16, #tpu.memory_space<vmem>>, vector<1x16x128xbf16>
    %3 = vector.shape_cast %2 : vector<1x16x128xbf16> to vector<16x128xbf16>
    %cst = arith.constant dense<0.000000e+00> : vector<16x128xf32>
    %4 = tpu.matmul %1, %3, %cst {dimension_numbers = #tpu.dot_dimension_numbers<[1], [0], [0], [1], [0, 0, 1, 1], [], []>} : vector<16x16xbf16>, vector<16x128xbf16>, vector<16x128xf32> -> vector<16x128xf32>
    %cst_4 = arith.constant 0.000000e+00 : f32
    %5 = vector.broadcast %cst_4 : f32 to vector<16x128xf32>
    %6 = arith.maximumf %4, %5 : vector<16x128xf32>
    %7 = arith.truncf %6 : vector<16x128xf32> to vector<16x128xbf16>
    %c1 = arith.constant 1 : index
    %c0_5 = arith.constant 0 : index
    %c0_6 = arith.constant 0 : index
    %8 = vector.load %arg2[%c1, %c0_5, %c0_6] : memref<4x16x128xbf16, #tpu.memory_space<vmem>>, vector<1x16x128xbf16>
    %9 = vector.shape_cast %8 : vector<1x16x128xbf16> to vector<16x128xbf16>
    %cst_7 = arith.constant dense<0.000000e+00> : vector<16x128xf32>
    %10 = tpu.matmul %1, %9, %cst_7 {dimension_numbers = #tpu.dot_dimension_numbers<[1], [0], [0], [1], [0, 0, 1, 1], [], []>} : vector<16x16xbf16>, vector<16x128xbf16>, vector<16x128xf32> -> vector<16x128xf32>
    %cst_8 = arith.constant 0.000000e+00 : f32
    %11 = vector.broadcast %cst_8 : f32 to vector<16x128xf32>
    %12 = arith.maximumf %10, %11 : vector<16x128xf32>
    %13 = arith.truncf %12 : vector<16x128xf32> to vector<16x128xbf16>
    %c2 = arith.constant 2 : index
    %c0_9 = arith.constant 0 : index
    %c0_10 = arith.constant 0 : index
    %14 = vector.load %arg2[%c2, %c0_9, %c0_10] : memref<4x16x128xbf16, #tpu.memory_space<vmem>>, vector<1x16x128xbf16>
    %15 = vector.shape_cast %14 : vector<1x16x128xbf16> to vector<16x128xbf16>
    %cst_11 = arith.constant dense<0.000000e+00> : vector<16x128xf32>
    %16 = tpu.matmul %1, %15, %cst_11 {dimension_numbers = #tpu.dot_dimension_numbers<[1], [0], [0], [1], [0, 0, 1, 1], [], []>} : vector<16x16xbf16>, vector<16x128xbf16>, vector<16x128xf32> -> vector<16x128xf32>
    %cst_12 = arith.constant 0.000000e+00 : f32
    %17 = vector.broadcast %cst_12 : f32 to vector<16x128xf32>
    %18 = arith.maximumf %16, %17 : vector<16x128xf32>
    %19 = arith.truncf %18 : vector<16x128xf32> to vector<16x128xbf16>
    %c3 = arith.constant 3 : index
    %c0_13 = arith.constant 0 : index
    %c0_14 = arith.constant 0 : index
    %20 = vector.load %arg2[%c3, %c0_13, %c0_14] : memref<4x16x128xbf16, #tpu.memory_space<vmem>>, vector<1x16x128xbf16>
    %21 = vector.shape_cast %20 : vector<1x16x128xbf16> to vector<16x128xbf16>
    %cst_15 = arith.constant dense<0.000000e+00> : vector<16x128xf32>
    %22 = tpu.matmul %1, %21, %cst_15 {dimension_numbers = #tpu.dot_dimension_numbers<[1], [0], [0], [1], [0, 0, 1, 1], [], []>} : vector<16x16xbf16>, vector<16x128xbf16>, vector<16x128xf32> -> vector<16x128xf32>
    %cst_16 = arith.constant 0.000000e+00 : f32
    %23 = vector.broadcast %cst_16 : f32 to vector<16x128xf32>
    %24 = arith.maximumf %22, %23 : vector<16x128xf32>
    %25 = arith.truncf %24 : vector<16x128xf32> to vector<16x128xbf16>
    %cst_17 = arith.constant 0.000000e+00 : bf16
    %26 = vector.broadcast %cst_17 : bf16 to vector<128x512xbf16>
    %c0_18 = arith.constant 0 : index
    %c0_19 = arith.constant 0 : index
    %27 = vector.load %arg7[%c0_18, %c0_19] : memref<128x512xbf16, #tpu.memory_space<vmem>>, vector<128x512xbf16>
    tpu.vector_store %arg7[%c0_18, %c0_19], %26 {strides = array<i32>} : memref<128x512xbf16, #tpu.memory_space<vmem>>, vector<128x512xbf16>,
    %c16 = arith.constant 16 : index
    %c0_20 = arith.constant 0 : index
    %28 = vector.load %arg7[%c16, %c0_20] : memref<128x512xbf16, #tpu.memory_space<vmem>>, vector<16x128xbf16>
    tpu.vector_store %arg7[%c16, %c0_20], %13 {strides = array<i32>} : memref<128x512xbf16, #tpu.memory_space<vmem>>, vector<16x128xbf16>,
    %c48 = arith.constant 48 : index
    %c0_21 = arith.constant 0 : index
    %29 = vector.load %arg7[%c48, %c0_21] : memref<128x512xbf16, #tpu.memory_space<vmem>>, vector<16x128xbf16>
    tpu.vector_store %arg7[%c48, %c0_21], %19 {strides = array<i32>} : memref<128x512xbf16, #tpu.memory_space<vmem>>, vector<16x128xbf16>,
    %c80 = arith.constant 80 : index
    %c0_22 = arith.constant 0 : index
    %30 = vector.load %arg7[%c80, %c0_22] : memref<128x512xbf16, #tpu.memory_space<vmem>>, vector<16x128xbf16>
    tpu.vector_store %arg7[%c80, %c0_22], %25 {strides = array<i32>} : memref<128x512xbf16, #tpu.memory_space<vmem>>, vector<16x128xbf16>,
    %c0_23 = arith.constant 0 : index
    %c128 = arith.constant 128 : index
    %31 = vector.load %arg7[%c0_23, %c128] : memref<128x512xbf16, #tpu.memory_space<vmem>>, vector<16x128xbf16>
    tpu.vector_store %arg7[%c0_23, %c128], %7 {strides = array<i32>} : memref<128x512xbf16, #tpu.memory_space<vmem>>, vector<16x128xbf16>,
    %c32 = arith.constant 32 : index
    %c128_24 = arith.constant 128 : index
    %32 = vector.load %arg7[%c32, %c128_24] : memref<128x512xbf16, #tpu.memory_space<vmem>>, vector<16x128xbf16>
    tpu.vector_store %arg7[%c32, %c128_24], %13 {strides = array<i32>} : memref<128x512xbf16, #tpu.memory_space<vmem>>, vector<16x128xbf16>,
    %c64 = arith.constant 64 : index
    %c128_25 = arith.constant 128 : index
    %33 = vector.load %arg7[%c64, %c128_25] : memref<128x512xbf16, #tpu.memory_space<vmem>>, vector<16x128xbf16>
    tpu.vector_store %arg7[%c64, %c128_25], %19 {strides = array<i32>} : memref<128x512xbf16, #tpu.memory_space<vmem>>, vector<16x128xbf16>,
    %c96 = arith.constant 96 : index
    %c128_26 = arith.constant 128 : index
    %34 = vector.load %arg7[%c96, %c128_26] : memref<128x512xbf16, #tpu.memory_space<vmem>>, vector<16x128xbf16>
    tpu.vector_store %arg7[%c96, %c128_26], %25 {strides = array<i32>} : memref<128x512xbf16, #tpu.memory_space<vmem>>, vector<16x128xbf16>,
    %c16_27 = arith.constant 16 : index
    %c256 = arith.constant 256 : index
    %35 = vector.load %arg7[%c16_27, %c256] : memref<128x512xbf16, #tpu.memory_space<vmem>>, vector<16x128xbf16>
    tpu.vector_store %arg7[%c16_27, %c256], %7 {strides = array<i32>} : memref<128x512xbf16, #tpu.memory_space<vmem>>, vector<16x128xbf16>,
    %c48_28 = arith.constant 48 : index
    %c256_29 = arith.constant 256 : index
    %36 = vector.load %arg7[%c48_28, %c256_29] : memref<128x512xbf16, #tpu.memory_space<vmem>>, vector<16x128xbf16>
    tpu.vector_store %arg7[%c48_28, %c256_29], %13 {strides = array<i32>} : memref<128x512xbf16, #tpu.memory_space<vmem>>, vector<16x128xbf16>,
    %c80_30 = arith.constant 80 : index
    %c256_31 = arith.constant 256 : index
    %37 = vector.load %arg7[%c80_30, %c256_31] : memref<128x512xbf16, #tpu.memory_space<vmem>>, vector<16x128xbf16>
    tpu.vector_store %arg7[%c80_30, %c256_31], %19 {strides = array<i32>} : memref<128x512xbf16, #tpu.memory_space<vmem>>, vector<16x128xbf16>,
    %c112 = arith.constant 112 : index
    %c256_32 = arith.constant 256 : index
    %38 = vector.load %arg7[%c112, %c256_32] : memref<128x512xbf16, #tpu.memory_space<vmem>>, vector<16x128xbf16>
    tpu.vector_store %arg7[%c112, %c256_32], %25 {strides = array<i32>} : memref<128x512xbf16, #tpu.memory_space<vmem>>, vector<16x128xbf16>,
    %c32_33 = arith.constant 32 : index
    %c384 = arith.constant 384 : index
    %39 = vector.load %arg7[%c32_33, %c384] : memref<128x512xbf16, #tpu.memory_space<vmem>>, vector<16x128xbf16>
    tpu.vector_store %arg7[%c32_33, %c384], %7 {strides = array<i32>} : memref<128x512xbf16, #tpu.memory_space<vmem>>, vector<16x128xbf16>,
    %c64_34 = arith.constant 64 : index
    %c384_35 = arith.constant 384 : index
    %40 = vector.load %arg7[%c64_34, %c384_35] : memref<128x512xbf16, #tpu.memory_space<vmem>>, vector<16x128xbf16>
    tpu.vector_store %arg7[%c64_34, %c384_35], %13 {strides = array<i32>} : memref<128x512xbf16, #tpu.memory_space<vmem>>, vector<16x128xbf16>,
    %c96_36 = arith.constant 96 : index
    %c384_37 = arith.constant 384 : index
    %41 = vector.load %arg7[%c96_36, %c384_37] : memref<128x512xbf16, #tpu.memory_space<vmem>>, vector<16x128xbf16>
    tpu.vector_store %arg7[%c96_36, %c384_37], %19 {strides = array<i32>} : memref<128x512xbf16, #tpu.memory_space<vmem>>, vector<16x128xbf16>,
    %c0_38 = arith.constant 0 : index
    %c0_39 = arith.constant 0 : index
    %42 = vector.load %arg7[%c0_38, %c0_39] : memref<128x512xbf16, #tpu.memory_space<vmem>>, vector<128x512xbf16>
    %c0_40 = arith.constant 0 : index
    %c0_41 = arith.constant 0 : index
    %43 = vector.load %arg3[%c0_40, %c0_41] : memref<512x128xbf16, #tpu.memory_space<vmem>>, vector<512x128xbf16>
    %cst_42 = arith.constant dense<0.000000e+00> : vector<128x128xf32>
    %44 = tpu.matmul %42, %43, %cst_42 {dimension_numbers = #tpu.dot_dimension_numbers<[1], [0], [0], [1], [0, 0, 1, 1], [], []>} : vector<128x512xbf16>, vector<512x128xbf16>, vector<128x128xf32> -> vector<128x128xf32>
    %cst_43 = arith.constant 0.000000e+00 : f32
    %45 = vector.broadcast %cst_43 : f32 to vector<128x128xf32>
    %46 = arith.maximumf %44, %45 : vector<128x128xf32>
    %47 = arith.truncf %46 : vector<128x128xf32> to vector<128x128xbf16>
    %48 = vector.extract_strided_slice %47 {offsets = [0, 0], sizes = [16, 128], strides = [1, 1]} : vector<128x128xbf16> to vector<16x128xbf16>
    %49 = vector.extract_strided_slice %47 {offsets = [16, 0], sizes = [16, 128], strides = [1, 1]} : vector<128x128xbf16> to vector<16x128xbf16>
    %50 = vector.extract_strided_slice %47 {offsets = [32, 0], sizes = [16, 128], strides = [1, 1]} : vector<128x128xbf16> to vector<16x128xbf16>
    %51 = vector.extract_strided_slice %47 {offsets = [48, 0], sizes = [16, 128], strides = [1, 1]} : vector<128x128xbf16> to vector<16x128xbf16>
    %52 = vector.extract_strided_slice %47 {offsets = [64, 0], sizes = [16, 128], strides = [1, 1]} : vector<128x128xbf16> to vector<16x128xbf16>
    %53 = vector.extract_strided_slice %47 {offsets = [80, 0], sizes = [16, 128], strides = [1, 1]} : vector<128x128xbf16> to vector<16x128xbf16>
    %54 = vector.extract_strided_slice %47 {offsets = [96, 0], sizes = [16, 128], strides = [1, 1]} : vector<128x128xbf16> to vector<16x128xbf16>
    %55 = vector.extract_strided_slice %47 {offsets = [112, 0], sizes = [16, 128], strides = [1, 1]} : vector<128x128xbf16> to vector<16x128xbf16>
    %cst_44 = arith.constant 0.000000e+00 : bf16
    %56 = vector.broadcast %cst_44 : bf16 to vector<256x512xbf16>
    %c0_45 = arith.constant 0 : index
    %c0_46 = arith.constant 0 : index
    %57 = vector.load %arg8[%c0_45, %c0_46] : memref<256x512xbf16, #tpu.memory_space<vmem>>, vector<256x512xbf16>
    tpu.vector_store %arg8[%c0_45, %c0_46], %56 {strides = array<i32>} : memref<256x512xbf16, #tpu.memory_space<vmem>>, vector<256x512xbf16>,
    %c16_47 = arith.constant 16 : index
    %c0_48 = arith.constant 0 : index
    %58 = vector.load %arg8[%c16_47, %c0_48] : memref<256x512xbf16, #tpu.memory_space<vmem>>, vector<16x128xbf16>
    tpu.vector_store %arg8[%c16_47, %c0_48], %49 {strides = array<i32>} : memref<256x512xbf16, #tpu.memory_space<vmem>>, vector<16x128xbf16>,
    %c48_49 = arith.constant 48 : index
    %c0_50 = arith.constant 0 : index
    %59 = vector.load %arg8[%c48_49, %c0_50] : memref<256x512xbf16, #tpu.memory_space<vmem>>, vector<16x128xbf16>
    tpu.vector_store %arg8[%c48_49, %c0_50], %50 {strides = array<i32>} : memref<256x512xbf16, #tpu.memory_space<vmem>>, vector<16x128xbf16>,
    %c80_51 = arith.constant 80 : index
    %c0_52 = arith.constant 0 : index
    %60 = vector.load %arg8[%c80_51, %c0_52] : memref<256x512xbf16, #tpu.memory_space<vmem>>, vector<16x128xbf16>
    tpu.vector_store %arg8[%c80_51, %c0_52], %51 {strides = array<i32>} : memref<256x512xbf16, #tpu.memory_space<vmem>>, vector<16x128xbf16>,
    %c112_53 = arith.constant 112 : index
    %c0_54 = arith.constant 0 : index
    %61 = vector.load %arg8[%c112_53, %c0_54] : memref<256x512xbf16, #tpu.memory_space<vmem>>, vector<16x128xbf16>
    tpu.vector_store %arg8[%c112_53, %c0_54], %52 {strides = array<i32>} : memref<256x512xbf16, #tpu.memory_space<vmem>>, vector<16x128xbf16>,
    %c144 = arith.constant 144 : index
    %c0_55 = arith.constant 0 : index
    %62 = vector.load %arg8[%c144, %c0_55] : memref<256x512xbf16, #tpu.memory_space<vmem>>, vector<16x128xbf16>
    tpu.vector_store %arg8[%c144, %c0_55], %53 {strides = array<i32>} : memref<256x512xbf16, #tpu.memory_space<vmem>>, vector<16x128xbf16>,
    %c176 = arith.constant 176 : index
    %c0_56 = arith.constant 0 : index
    %63 = vector.load %arg8[%c176, %c0_56] : memref<256x512xbf16, #tpu.memory_space<vmem>>, vector<16x128xbf16>
    tpu.vector_store %arg8[%c176, %c0_56], %54 {strides = array<i32>} : memref<256x512xbf16, #tpu.memory_space<vmem>>, vector<16x128xbf16>,
    %c208 = arith.constant 208 : index
    %c0_57 = arith.constant 0 : index
    %64 = vector.load %arg8[%c208, %c0_57] : memref<256x512xbf16, #tpu.memory_space<vmem>>, vector<16x128xbf16>
    tpu.vector_store %arg8[%c208, %c0_57], %55 {strides = array<i32>} : memref<256x512xbf16, #tpu.memory_space<vmem>>, vector<16x128xbf16>,
    %c0_58 = arith.constant 0 : index
    %c128_59 = arith.constant 128 : index
    %65 = vector.load %arg8[%c0_58, %c128_59] : memref<256x512xbf16, #tpu.memory_space<vmem>>, vector<16x128xbf16>
    tpu.vector_store %arg8[%c0_58, %c128_59], %48 {strides = array<i32>} : memref<256x512xbf16, #tpu.memory_space<vmem>>, vector<16x128xbf16>,
    %c32_60 = arith.constant 32 : index
    %c128_61 = arith.constant 128 : index
    %66 = vector.load %arg8[%c32_60, %c128_61] : memref<256x512xbf16, #tpu.memory_space<vmem>>, vector<16x128xbf16>
    tpu.vector_store %arg8[%c32_60, %c128_61], %49 {strides = array<i32>} : memref<256x512xbf16, #tpu.memory_space<vmem>>, vector<16x128xbf16>,
    %c64_62 = arith.constant 64 : index
    %c128_63 = arith.constant 128 : index
    %67 = vector.load %arg8[%c64_62, %c128_63] : memref<256x512xbf16, #tpu.memory_space<vmem>>, vector<16x128xbf16>
    tpu.vector_store %arg8[%c64_62, %c128_63], %50 {strides = array<i32>} : memref<256x512xbf16, #tpu.memory_space<vmem>>, vector<16x128xbf16>,
    %c96_64 = arith.constant 96 : index
    %c128_65 = arith.constant 128 : index
    %68 = vector.load %arg8[%c96_64, %c128_65] : memref<256x512xbf16, #tpu.memory_space<vmem>>, vector<16x128xbf16>
    tpu.vector_store %arg8[%c96_64, %c128_65], %51 {strides = array<i32>} : memref<256x512xbf16, #tpu.memory_space<vmem>>, vector<16x128xbf16>,
    %c128_66 = arith.constant 128 : index
    %c128_67 = arith.constant 128 : index
    %69 = vector.load %arg8[%c128_66, %c128_67] : memref<256x512xbf16, #tpu.memory_space<vmem>>, vector<16x128xbf16>
    tpu.vector_store %arg8[%c128_66, %c128_67], %52 {strides = array<i32>} : memref<256x512xbf16, #tpu.memory_space<vmem>>, vector<16x128xbf16>,
    %c160 = arith.constant 160 : index
    %c128_68 = arith.constant 128 : index
    %70 = vector.load %arg8[%c160, %c128_68] : memref<256x512xbf16, #tpu.memory_space<vmem>>, vector<16x128xbf16>
    tpu.vector_store %arg8[%c160, %c128_68], %53 {strides = array<i32>} : memref<256x512xbf16, #tpu.memory_space<vmem>>, vector<16x128xbf16>,
    %c192 = arith.constant 192 : index
    %c128_69 = arith.constant 128 : index
    %71 = vector.load %arg8[%c192, %c128_69] : memref<256x512xbf16, #tpu.memory_space<vmem>>, vector<16x128xbf16>
    tpu.vector_store %arg8[%c192, %c128_69], %54 {strides = array<i32>} : memref<256x512xbf16, #tpu.memory_space<vmem>>, vector<16x128xbf16>,
    %c224 = arith.constant 224 : index
    %c128_70 = arith.constant 128 : index
    %72 = vector.load %arg8[%c224, %c128_70] : memref<256x512xbf16, #tpu.memory_space<vmem>>, vector<16x128xbf16>
    tpu.vector_store %arg8[%c224, %c128_70], %55 {strides = array<i32>} : memref<256x512xbf16, #tpu.memory_space<vmem>>, vector<16x128xbf16>,
    %c16_71 = arith.constant 16 : index
    %c256_72 = arith.constant 256 : index
    %73 = vector.load %arg8[%c16_71, %c256_72] : memref<256x512xbf16, #tpu.memory_space<vmem>>, vector<16x128xbf16>
    tpu.vector_store %arg8[%c16_71, %c256_72], %48 {strides = array<i32>} : memref<256x512xbf16, #tpu.memory_space<vmem>>, vector<16x128xbf16>,
    %c48_73 = arith.constant 48 : index
    %c256_74 = arith.constant 256 : index
    %74 = vector.load %arg8[%c48_73, %c256_74] : memref<256x512xbf16, #tpu.memory_space<vmem>>, vector<16x128xbf16>
    tpu.vector_store %arg8[%c48_73, %c256_74], %49 {strides = array<i32>} : memref<256x512xbf16, #tpu.memory_space<vmem>>, vector<16x128xbf16>,
    %c80_75 = arith.constant 80 : index
    %c256_76 = arith.constant 256 : index
    %75 = vector.load %arg8[%c80_75, %c256_76] : memref<256x512xbf16, #tpu.memory_space<vmem>>, vector<16x128xbf16>
    tpu.vector_store %arg8[%c80_75, %c256_76], %50 {strides = array<i32>} : memref<256x512xbf16, #tpu.memory_space<vmem>>, vector<16x128xbf16>,
    %c112_77 = arith.constant 112 : index
    %c256_78 = arith.constant 256 : index
    %76 = vector.load %arg8[%c112_77, %c256_78] : memref<256x512xbf16, #tpu.memory_space<vmem>>, vector<16x128xbf16>
    tpu.vector_store %arg8[%c112_77, %c256_78], %51 {strides = array<i32>} : memref<256x512xbf16, #tpu.memory_space<vmem>>, vector<16x128xbf16>,
    %c144_79 = arith.constant 144 : index
    %c256_80 = arith.constant 256 : index
    %77 = vector.load %arg8[%c144_79, %c256_80] : memref<256x512xbf16, #tpu.memory_space<vmem>>, vector<16x128xbf16>
    tpu.vector_store %arg8[%c144_79, %c256_80], %52 {strides = array<i32>} : memref<256x512xbf16, #tpu.memory_space<vmem>>, vector<16x128xbf16>,
    %c176_81 = arith.constant 176 : index
    %c256_82 = arith.constant 256 : index
    %78 = vector.load %arg8[%c176_81, %c256_82] : memref<256x512xbf16, #tpu.memory_space<vmem>>, vector<16x128xbf16>
    tpu.vector_store %arg8[%c176_81, %c256_82], %53 {strides = array<i32>} : memref<256x512xbf16, #tpu.memory_space<vmem>>, vector<16x128xbf16>,
    %c208_83 = arith.constant 208 : index
    %c256_84 = arith.constant 256 : index
    %79 = vector.load %arg8[%c208_83, %c256_84] : memref<256x512xbf16, #tpu.memory_space<vmem>>, vector<16x128xbf16>
    tpu.vector_store %arg8[%c208_83, %c256_84], %54 {strides = array<i32>} : memref<256x512xbf16, #tpu.memory_space<vmem>>, vector<16x128xbf16>,
    %c240 = arith.constant 240 : index
    %c256_85 = arith.constant 256 : index
    %80 = vector.load %arg8[%c240, %c256_85] : memref<256x512xbf16, #tpu.memory_space<vmem>>, vector<16x128xbf16>
    tpu.vector_store %arg8[%c240, %c256_85], %55 {strides = array<i32>} : memref<256x512xbf16, #tpu.memory_space<vmem>>, vector<16x128xbf16>,
    %c32_86 = arith.constant 32 : index
    %c384_87 = arith.constant 384 : index
    %81 = vector.load %arg8[%c32_86, %c384_87] : memref<256x512xbf16, #tpu.memory_space<vmem>>, vector<16x128xbf16>
    tpu.vector_store %arg8[%c32_86, %c384_87], %48 {strides = array<i32>} : memref<256x512xbf16, #tpu.memory_space<vmem>>, vector<16x128xbf16>,
    %c64_88 = arith.constant 64 : index
    %c384_89 = arith.constant 384 : index
    %82 = vector.load %arg8[%c64_88, %c384_89] : memref<256x512xbf16, #tpu.memory_space<vmem>>, vector<16x128xbf16>
    tpu.vector_store %arg8[%c64_88, %c384_89], %49 {strides = array<i32>} : memref<256x512xbf16, #tpu.memory_space<vmem>>, vector<16x128xbf16>,
    %c96_90 = arith.constant 96 : index
    %c384_91 = arith.constant 384 : index
    %83 = vector.load %arg8[%c96_90, %c384_91] : memref<256x512xbf16, #tpu.memory_space<vmem>>, vector<16x128xbf16>
    tpu.vector_store %arg8[%c96_90, %c384_91], %50 {strides = array<i32>} : memref<256x512xbf16, #tpu.memory_space<vmem>>, vector<16x128xbf16>,
    %c128_92 = arith.constant 128 : index
    %c384_93 = arith.constant 384 : index
    %84 = vector.load %arg8[%c128_92, %c384_93] : memref<256x512xbf16, #tpu.memory_space<vmem>>, vector<16x128xbf16>
    tpu.vector_store %arg8[%c128_92, %c384_93], %51 {strides = array<i32>} : memref<256x512xbf16, #tpu.memory_space<vmem>>, vector<16x128xbf16>,
    %c160_94 = arith.constant 160 : index
    %c384_95 = arith.constant 384 : index
    %85 = vector.load %arg8[%c160_94, %c384_95] : memref<256x512xbf16, #tpu.memory_space<vmem>>, vector<16x128xbf16>
    tpu.vector_store %arg8[%c160_94, %c384_95], %52 {strides = array<i32>} : memref<256x512xbf16, #tpu.memory_space<vmem>>, vector<16x128xbf16>,
    %c192_96 = arith.constant 192 : index
    %c384_97 = arith.constant 384 : index
    %86 = vector.load %arg8[%c192_96, %c384_97] : memref<256x512xbf16, #tpu.memory_space<vmem>>, vector<16x128xbf16>
    tpu.vector_store %arg8[%c192_96, %c384_97], %53 {strides = array<i32>} : memref<256x512xbf16, #tpu.memory_space<vmem>>, vector<16x128xbf16>,
    %c224_98 = arith.constant 224 : index
    %c384_99 = arith.constant 384 : index
    %87 = vector.load %arg8[%c224_98, %c384_99] : memref<256x512xbf16, #tpu.memory_space<vmem>>, vector<16x128xbf16>
    tpu.vector_store %arg8[%c224_98, %c384_99], %54 {strides = array<i32>} : memref<256x512xbf16, #tpu.memory_space<vmem>>, vector<16x128xbf16>,
    %c0_100 = arith.constant 0 : index
    %c0_101 = arith.constant 0 : index
    %88 = vector.load %arg8[%c0_100, %c0_101] : memref<256x512xbf16, #tpu.memory_space<vmem>>, vector<256x512xbf16>
    %c0_102 = arith.constant 0 : index
    %c0_103 = arith.constant 0 : index
    %89 = vector.load %arg4[%c0_102, %c0_103] : memref<512x128xbf16, #tpu.memory_space<vmem>>, vector<512x128xbf16>
    %cst_104 = arith.constant dense<0.000000e+00> : vector<256x128xf32>
    %90 = tpu.matmul %88, %89, %cst_104 {dimension_numbers = #tpu.dot_dimension_numbers<[1], [0], [0], [1], [0, 0, 1, 1], [], []>} : vector<256x512xbf16>, vector<512x128xbf16>, vector<256x128xf32> -> vector<256x128xf32>
    %cst_105 = arith.constant 0.000000e+00 : f32
    %91 = vector.broadcast %cst_105 : f32 to vector<256x128xf32>
    %92 = arith.maximumf %90, %91 : vector<256x128xf32>
    %93 = arith.truncf %92 : vector<256x128xf32> to vector<256x128xbf16>
    %94 = vector.extract_strided_slice %93 {offsets = [0, 0], sizes = [16, 128], strides = [1, 1]} : vector<256x128xbf16> to vector<16x128xbf16>
    %95 = vector.extract_strided_slice %93 {offsets = [16, 0], sizes = [16, 128], strides = [1, 1]} : vector<256x128xbf16> to vector<16x128xbf16>
    %96 = vector.extract_strided_slice %93 {offsets = [32, 0], sizes = [16, 128], strides = [1, 1]} : vector<256x128xbf16> to vector<16x128xbf16>
    %97 = vector.extract_strided_slice %93 {offsets = [48, 0], sizes = [16, 128], strides = [1, 1]} : vector<256x128xbf16> to vector<16x128xbf16>
    %98 = vector.extract_strided_slice %93 {offsets = [64, 0], sizes = [16, 128], strides = [1, 1]} : vector<256x128xbf16> to vector<16x128xbf16>
    %99 = vector.extract_strided_slice %93 {offsets = [80, 0], sizes = [16, 128], strides = [1, 1]} : vector<256x128xbf16> to vector<16x128xbf16>
    %100 = vector.extract_strided_slice %93 {offsets = [96, 0], sizes = [16, 128], strides = [1, 1]} : vector<256x128xbf16> to vector<16x128xbf16>
    %101 = vector.extract_strided_slice %93 {offsets = [112, 0], sizes = [16, 128], strides = [1, 1]} : vector<256x128xbf16> to vector<16x128xbf16>
    %102 = vector.extract_strided_slice %93 {offsets = [128, 0], sizes = [16, 128], strides = [1, 1]} : vector<256x128xbf16> to vector<16x128xbf16>
    %103 = vector.extract_strided_slice %93 {offsets = [144, 0], sizes = [16, 128], strides = [1, 1]} : vector<256x128xbf16> to vector<16x128xbf16>
    %104 = vector.extract_strided_slice %93 {offsets = [160, 0], sizes = [16, 128], strides = [1, 1]} : vector<256x128xbf16> to vector<16x128xbf16>
    %105 = vector.extract_strided_slice %93 {offsets = [176, 0], sizes = [16, 128], strides = [1, 1]} : vector<256x128xbf16> to vector<16x128xbf16>
    %106 = vector.extract_strided_slice %93 {offsets = [192, 0], sizes = [16, 128], strides = [1, 1]} : vector<256x128xbf16> to vector<16x128xbf16>
    %107 = vector.extract_strided_slice %93 {offsets = [208, 0], sizes = [16, 128], strides = [1, 1]} : vector<256x128xbf16> to vector<16x128xbf16>
    %108 = vector.extract_strided_slice %93 {offsets = [224, 0], sizes = [16, 128], strides = [1, 1]} : vector<256x128xbf16> to vector<16x128xbf16>
    %109 = vector.extract_strided_slice %93 {offsets = [240, 0], sizes = [16, 128], strides = [1, 1]} : vector<256x128xbf16> to vector<16x128xbf16>
    %cst_106 = arith.constant 0.000000e+00 : bf16
    %110 = vector.broadcast %cst_106 : bf16 to vector<512x512xbf16>
    %c0_107 = arith.constant 0 : index
    %c0_108 = arith.constant 0 : index
    %111 = vector.load %arg9[%c0_107, %c0_108] : memref<512x512xbf16, #tpu.memory_space<vmem>>, vector<512x512xbf16>
    tpu.vector_store %arg9[%c0_107, %c0_108], %110 {strides = array<i32>} : memref<512x512xbf16, #tpu.memory_space<vmem>>, vector<512x512xbf16>,
    %c16_109 = arith.constant 16 : index
    %c0_110 = arith.constant 0 : index
    %112 = vector.load %arg9[%c16_109, %c0_110] : memref<512x512xbf16, #tpu.memory_space<vmem>>, vector<16x128xbf16>
    tpu.vector_store %arg9[%c16_109, %c0_110], %95 {strides = array<i32>} : memref<512x512xbf16, #tpu.memory_space<vmem>>, vector<16x128xbf16>,
    %c48_111 = arith.constant 48 : index
    %c0_112 = arith.constant 0 : index
    %113 = vector.load %arg9[%c48_111, %c0_112] : memref<512x512xbf16, #tpu.memory_space<vmem>>, vector<16x128xbf16>
    tpu.vector_store %arg9[%c48_111, %c0_112], %96 {strides = array<i32>} : memref<512x512xbf16, #tpu.memory_space<vmem>>, vector<16x128xbf16>,
    %c80_113 = arith.constant 80 : index
    %c0_114 = arith.constant 0 : index
    %114 = vector.load %arg9[%c80_113, %c0_114] : memref<512x512xbf16, #tpu.memory_space<vmem>>, vector<16x128xbf16>
    tpu.vector_store %arg9[%c80_113, %c0_114], %97 {strides = array<i32>} : memref<512x512xbf16, #tpu.memory_space<vmem>>, vector<16x128xbf16>,
    %c112_115 = arith.constant 112 : index
    %c0_116 = arith.constant 0 : index
    %115 = vector.load %arg9[%c112_115, %c0_116] : memref<512x512xbf16, #tpu.memory_space<vmem>>, vector<16x128xbf16>
    tpu.vector_store %arg9[%c112_115, %c0_116], %98 {strides = array<i32>} : memref<512x512xbf16, #tpu.memory_space<vmem>>, vector<16x128xbf16>,
    %c144_117 = arith.constant 144 : index
    %c0_118 = arith.constant 0 : index
    %116 = vector.load %arg9[%c144_117, %c0_118] : memref<512x512xbf16, #tpu.memory_space<vmem>>, vector<16x128xbf16>
    tpu.vector_store %arg9[%c144_117, %c0_118], %99 {strides = array<i32>} : memref<512x512xbf16, #tpu.memory_space<vmem>>, vector<16x128xbf16>,
    %c176_119 = arith.constant 176 : index
    %c0_120 = arith.constant 0 : index
    %117 = vector.load %arg9[%c176_119, %c0_120] : memref<512x512xbf16, #tpu.memory_space<vmem>>, vector<16x128xbf16>
    tpu.vector_store %arg9[%c176_119, %c0_120], %100 {strides = array<i32>} : memref<512x512xbf16, #tpu.memory_space<vmem>>, vector<16x128xbf16>,
    %c208_121 = arith.constant 208 : index
    %c0_122 = arith.constant 0 : index
    %118 = vector.load %arg9[%c208_121, %c0_122] : memref<512x512xbf16, #tpu.memory_space<vmem>>, vector<16x128xbf16>
    tpu.vector_store %arg9[%c208_121, %c0_122], %101 {strides = array<i32>} : memref<512x512xbf16, #tpu.memory_space<vmem>>, vector<16x128xbf16>,
    %c240_123 = arith.constant 240 : index
    %c0_124 = arith.constant 0 : index
    %119 = vector.load %arg9[%c240_123, %c0_124] : memref<512x512xbf16, #tpu.memory_space<vmem>>, vector<16x128xbf16>
    tpu.vector_store %arg9[%c240_123, %c0_124], %102 {strides = array<i32>} : memref<512x512xbf16, #tpu.memory_space<vmem>>, vector<16x128xbf16>,
    %c272 = arith.constant 272 : index
    %c0_125 = arith.constant 0 : index
    %120 = vector.load %arg9[%c272, %c0_125] : memref<512x512xbf16, #tpu.memory_space<vmem>>, vector<16x128xbf16>
    tpu.vector_store %arg9[%c272, %c0_125], %103 {strides = array<i32>} : memref<512x512xbf16, #tpu.memory_space<vmem>>, vector<16x128xbf16>,
    %c304 = arith.constant 304 : index
    %c0_126 = arith.constant 0 : index
    %121 = vector.load %arg9[%c304, %c0_126] : memref<512x512xbf16, #tpu.memory_space<vmem>>, vector<16x128xbf16>
    tpu.vector_store %arg9[%c304, %c0_126], %104 {strides = array<i32>} : memref<512x512xbf16, #tpu.memory_space<vmem>>, vector<16x128xbf16>,
    %c336 = arith.constant 336 : index
    %c0_127 = arith.constant 0 : index
    %122 = vector.load %arg9[%c336, %c0_127] : memref<512x512xbf16, #tpu.memory_space<vmem>>, vector<16x128xbf16>
    tpu.vector_store %arg9[%c336, %c0_127], %105 {strides = array<i32>} : memref<512x512xbf16, #tpu.memory_space<vmem>>, vector<16x128xbf16>,
    %c368 = arith.constant 368 : index
    %c0_128 = arith.constant 0 : index
    %123 = vector.load %arg9[%c368, %c0_128] : memref<512x512xbf16, #tpu.memory_space<vmem>>, vector<16x128xbf16>
    tpu.vector_store %arg9[%c368, %c0_128], %106 {strides = array<i32>} : memref<512x512xbf16, #tpu.memory_space<vmem>>, vector<16x128xbf16>,
    %c400 = arith.constant 400 : index
    %c0_129 = arith.constant 0 : index
    %124 = vector.load %arg9[%c400, %c0_129] : memref<512x512xbf16, #tpu.memory_space<vmem>>, vector<16x128xbf16>
    tpu.vector_store %arg9[%c400, %c0_129], %107 {strides = array<i32>} : memref<512x512xbf16, #tpu.memory_space<vmem>>, vector<16x128xbf16>,
    %c432 = arith.constant 432 : index
    %c0_130 = arith.constant 0 : index
    %125 = vector.load %arg9[%c432, %c0_130] : memref<512x512xbf16, #tpu.memory_space<vmem>>, vector<16x128xbf16>
    tpu.vector_store %arg9[%c432, %c0_130], %108 {strides = array<i32>} : memref<512x512xbf16, #tpu.memory_space<vmem>>, vector<16x128xbf16>,
    %c464 = arith.constant 464 : index
    %c0_131 = arith.constant 0 : index
    %126 = vector.load %arg9[%c464, %c0_131] : memref<512x512xbf16, #tpu.memory_space<vmem>>, vector<16x128xbf16>
    tpu.vector_store %arg9[%c464, %c0_131], %109 {strides = array<i32>} : memref<512x512xbf16, #tpu.memory_space<vmem>>, vector<16x128xbf16>,
    %c0_132 = arith.constant 0 : index
    %c128_133 = arith.constant 128 : index
    %127 = vector.load %arg9[%c0_132, %c128_133] : memref<512x512xbf16, #tpu.memory_space<vmem>>, vector<16x128xbf16>
    tpu.vector_store %arg9[%c0_132, %c128_133], %94 {strides = array<i32>} : memref<512x512xbf16, #tpu.memory_space<vmem>>, vector<16x128xbf16>,
    %c32_134 = arith.constant 32 : index
    %c128_135 = arith.constant 128 : index
    %128 = vector.load %arg9[%c32_134, %c128_135] : memref<512x512xbf16, #tpu.memory_space<vmem>>, vector<16x128xbf16>
    tpu.vector_store %arg9[%c32_134, %c128_135], %95 {strides = array<i32>} : memref<512x512xbf16, #tpu.memory_space<vmem>>, vector<16x128xbf16>,
    %c64_136 = arith.constant 64 : index
    %c128_137 = arith.constant 128 : index
    %129 = vector.load %arg9[%c64_136, %c128_137] : memref<512x512xbf16, #tpu.memory_space<vmem>>, vector<16x128xbf16>
    tpu.vector_store %arg9[%c64_136, %c128_137], %96 {strides = array<i32>} : memref<512x512xbf16, #tpu.memory_space<vmem>>, vector<16x128xbf16>,
    %c96_138 = arith.constant 96 : index
    %c128_139 = arith.constant 128 : index
    %130 = vector.load %arg9[%c96_138, %c128_139] : memref<512x512xbf16, #tpu.memory_space<vmem>>, vector<16x128xbf16>
    tpu.vector_store %arg9[%c96_138, %c128_139], %97 {strides = array<i32>} : memref<512x512xbf16, #tpu.memory_space<vmem>>, vector<16x128xbf16>,
    %c128_140 = arith.constant 128 : index
    %c128_141 = arith.constant 128 : index
    %131 = vector.load %arg9[%c128_140, %c128_141] : memref<512x512xbf16, #tpu.memory_space<vmem>>, vector<16x128xbf16>
    tpu.vector_store %arg9[%c128_140, %c128_141], %98 {strides = array<i32>} : memref<512x512xbf16, #tpu.memory_space<vmem>>, vector<16x128xbf16>,
    %c160_142 = arith.constant 160 : index
    %c128_143 = arith.constant 128 : index
    %132 = vector.load %arg9[%c160_142, %c128_143] : memref<512x512xbf16, #tpu.memory_space<vmem>>, vector<16x128xbf16>
    tpu.vector_store %arg9[%c160_142, %c128_143], %99 {strides = array<i32>} : memref<512x512xbf16, #tpu.memory_space<vmem>>, vector<16x128xbf16>,
    %c192_144 = arith.constant 192 : index
    %c128_145 = arith.constant 128 : index
    %133 = vector.load %arg9[%c192_144, %c128_145] : memref<512x512xbf16, #tpu.memory_space<vmem>>, vector<16x128xbf16>
    tpu.vector_store %arg9[%c192_144, %c128_145], %100 {strides = array<i32>} : memref<512x512xbf16, #tpu.memory_space<vmem>>, vector<16x128xbf16>,
    %c224_146 = arith.constant 224 : index
    %c128_147 = arith.constant 128 : index
    %134 = vector.load %arg9[%c224_146, %c128_147] : memref<512x512xbf16, #tpu.memory_space<vmem>>, vector<16x128xbf16>
    tpu.vector_store %arg9[%c224_146, %c128_147], %101 {strides = array<i32>} : memref<512x512xbf16, #tpu.memory_space<vmem>>, vector<16x128xbf16>,
    %c256_148 = arith.constant 256 : index
    %c128_149 = arith.constant 128 : index
    %135 = vector.load %arg9[%c256_148, %c128_149] : memref<512x512xbf16, #tpu.memory_space<vmem>>, vector<16x128xbf16>
    tpu.vector_store %arg9[%c256_148, %c128_149], %102 {strides = array<i32>} : memref<512x512xbf16, #tpu.memory_space<vmem>>, vector<16x128xbf16>,
    %c288 = arith.constant 288 : index
    %c128_150 = arith.constant 128 : index
    %136 = vector.load %arg9[%c288, %c128_150] : memref<512x512xbf16, #tpu.memory_space<vmem>>, vector<16x128xbf16>
    tpu.vector_store %arg9[%c288, %c128_150], %103 {strides = array<i32>} : memref<512x512xbf16, #tpu.memory_space<vmem>>, vector<16x128xbf16>,
    %c320 = arith.constant 320 : index
    %c128_151 = arith.constant 128 : index
    %137 = vector.load %arg9[%c320, %c128_151] : memref<512x512xbf16, #tpu.memory_space<vmem>>, vector<16x128xbf16>
    tpu.vector_store %arg9[%c320, %c128_151], %104 {strides = array<i32>} : memref<512x512xbf16, #tpu.memory_space<vmem>>, vector<16x128xbf16>,
    %c352 = arith.constant 352 : index
    %c128_152 = arith.constant 128 : index
    %138 = vector.load %arg9[%c352, %c128_152] : memref<512x512xbf16, #tpu.memory_space<vmem>>, vector<16x128xbf16>
    tpu.vector_store %arg9[%c352, %c128_152], %105 {strides = array<i32>} : memref<512x512xbf16, #tpu.memory_space<vmem>>, vector<16x128xbf16>,
    %c384_153 = arith.constant 384 : index
    %c128_154 = arith.constant 128 : index
    %139 = vector.load %arg9[%c384_153, %c128_154] : memref<512x512xbf16, #tpu.memory_space<vmem>>, vector<16x128xbf16>
    tpu.vector_store %arg9[%c384_153, %c128_154], %106 {strides = array<i32>} : memref<512x512xbf16, #tpu.memory_space<vmem>>, vector<16x128xbf16>,
    %c416 = arith.constant 416 : index
    %c128_155 = arith.constant 128 : index
    %140 = vector.load %arg9[%c416, %c128_155] : memref<512x512xbf16, #tpu.memory_space<vmem>>, vector<16x128xbf16>
    tpu.vector_store %arg9[%c416, %c128_155], %107 {strides = array<i32>} : memref<512x512xbf16, #tpu.memory_space<vmem>>, vector<16x128xbf16>,
    %c448 = arith.constant 448 : index
    %c128_156 = arith.constant 128 : index
    %141 = vector.load %arg9[%c448, %c128_156] : memref<512x512xbf16, #tpu.memory_space<vmem>>, vector<16x128xbf16>
    tpu.vector_store %arg9[%c448, %c128_156], %108 {strides = array<i32>} : memref<512x512xbf16, #tpu.memory_space<vmem>>, vector<16x128xbf16>,
    %c480 = arith.constant 480 : index
    %c128_157 = arith.constant 128 : index
    %142 = vector.load %arg9[%c480, %c128_157] : memref<512x512xbf16, #tpu.memory_space<vmem>>, vector<16x128xbf16>
    tpu.vector_store %arg9[%c480, %c128_157], %109 {strides = array<i32>} : memref<512x512xbf16, #tpu.memory_space<vmem>>, vector<16x128xbf16>,
    %c16_158 = arith.constant 16 : index
    %c256_159 = arith.constant 256 : index
    %143 = vector.load %arg9[%c16_158, %c256_159] : memref<512x512xbf16, #tpu.memory_space<vmem>>, vector<16x128xbf16>
    tpu.vector_store %arg9[%c16_158, %c256_159], %94 {strides = array<i32>} : memref<512x512xbf16, #tpu.memory_space<vmem>>, vector<16x128xbf16>,
    %c48_160 = arith.constant 48 : index
    %c256_161 = arith.constant 256 : index
    %144 = vector.load %arg9[%c48_160, %c256_161] : memref<512x512xbf16, #tpu.memory_space<vmem>>, vector<16x128xbf16>
    tpu.vector_store %arg9[%c48_160, %c256_161], %95 {strides = array<i32>} : memref<512x512xbf16, #tpu.memory_space<vmem>>, vector<16x128xbf16>,
    %c80_162 = arith.constant 80 : index
    %c256_163 = arith.constant 256 : index
    %145 = vector.load %arg9[%c80_162, %c256_163] : memref<512x512xbf16, #tpu.memory_space<vmem>>, vector<16x128xbf16>
    tpu.vector_store %arg9[%c80_162, %c256_163], %96 {strides = array<i32>} : memref<512x512xbf16, #tpu.memory_space<vmem>>, vector<16x128xbf16>,
    %c112_164 = arith.constant 112 : index
    %c256_165 = arith.constant 256 : index
    %146 = vector.load %arg9[%c112_164, %c256_165] : memref<512x512xbf16, #tpu.memory_space<vmem>>, vector<16x128xbf16>
    tpu.vector_store %arg9[%c112_164, %c256_165], %97 {strides = array<i32>} : memref<512x512xbf16, #tpu.memory_space<vmem>>, vector<16x128xbf16>,
    %c144_166 = arith.constant 144 : index
    %c256_167 = arith.constant 256 : index
    %147 = vector.load %arg9[%c144_166, %c256_167] : memref<512x512xbf16, #tpu.memory_space<vmem>>, vector<16x128xbf16>
    tpu.vector_store %arg9[%c144_166, %c256_167], %98 {strides = array<i32>} : memref<512x512xbf16, #tpu.memory_space<vmem>>, vector<16x128xbf16>,
    %c176_168 = arith.constant 176 : index
    %c256_169 = arith.constant 256 : index
    %148 = vector.load %arg9[%c176_168, %c256_169] : memref<512x512xbf16, #tpu.memory_space<vmem>>, vector<16x128xbf16>
    tpu.vector_store %arg9[%c176_168, %c256_169], %99 {strides = array<i32>} : memref<512x512xbf16, #tpu.memory_space<vmem>>, vector<16x128xbf16>,
    %c208_170 = arith.constant 208 : index
    %c256_171 = arith.constant 256 : index
    %149 = vector.load %arg9[%c208_170, %c256_171] : memref<512x512xbf16, #tpu.memory_space<vmem>>, vector<16x128xbf16>
    tpu.vector_store %arg9[%c208_170, %c256_171], %100 {strides = array<i32>} : memref<512x512xbf16, #tpu.memory_space<vmem>>, vector<16x128xbf16>,
    %c240_172 = arith.constant 240 : index
    %c256_173 = arith.constant 256 : index
    %150 = vector.load %arg9[%c240_172, %c256_173] : memref<512x512xbf16, #tpu.memory_space<vmem>>, vector<16x128xbf16>
    tpu.vector_store %arg9[%c240_172, %c256_173], %101 {strides = array<i32>} : memref<512x512xbf16, #tpu.memory_space<vmem>>, vector<16x128xbf16>,
    %c272_174 = arith.constant 272 : index
    %c256_175 = arith.constant 256 : index
    %151 = vector.load %arg9[%c272_174, %c256_175] : memref<512x512xbf16, #tpu.memory_space<vmem>>, vector<16x128xbf16>
    tpu.vector_store %arg9[%c272_174, %c256_175], %102 {strides = array<i32>} : memref<512x512xbf16, #tpu.memory_space<vmem>>, vector<16x128xbf16>,
    %c304_176 = arith.constant 304 : index
    %c256_177 = arith.constant 256 : index
    %152 = vector.load %arg9[%c304_176, %c256_177] : memref<512x512xbf16, #tpu.memory_space<vmem>>, vector<16x128xbf16>
    tpu.vector_store %arg9[%c304_176, %c256_177], %103 {strides = array<i32>} : memref<512x512xbf16, #tpu.memory_space<vmem>>, vector<16x128xbf16>,
    %c336_178 = arith.constant 336 : index
    %c256_179 = arith.constant 256 : index
    %153 = vector.load %arg9[%c336_178, %c256_179] : memref<512x512xbf16, #tpu.memory_space<vmem>>, vector<16x128xbf16>
    tpu.vector_store %arg9[%c336_178, %c256_179], %104 {strides = array<i32>} : memref<512x512xbf16, #tpu.memory_space<vmem>>, vector<16x128xbf16>,
    %c368_180 = arith.constant 368 : index
    %c256_181 = arith.constant 256 : index
    %154 = vector.load %arg9[%c368_180, %c256_181] : memref<512x512xbf16, #tpu.memory_space<vmem>>, vector<16x128xbf16>
    tpu.vector_store %arg9[%c368_180, %c256_181], %105 {strides = array<i32>} : memref<512x512xbf16, #tpu.memory_space<vmem>>, vector<16x128xbf16>,
    %c400_182 = arith.constant 400 : index
    %c256_183 = arith.constant 256 : index
    %155 = vector.load %arg9[%c400_182, %c256_183] : memref<512x512xbf16, #tpu.memory_space<vmem>>, vector<16x128xbf16>
    tpu.vector_store %arg9[%c400_182, %c256_183], %106 {strides = array<i32>} : memref<512x512xbf16, #tpu.memory_space<vmem>>, vector<16x128xbf16>,
    %c432_184 = arith.constant 432 : index
    %c256_185 = arith.constant 256 : index
    %156 = vector.load %arg9[%c432_184, %c256_185] : memref<512x512xbf16, #tpu.memory_space<vmem>>, vector<16x128xbf16>
    tpu.vector_store %arg9[%c432_184, %c256_185], %107 {strides = array<i32>} : memref<512x512xbf16, #tpu.memory_space<vmem>>, vector<16x128xbf16>,
    %c464_186 = arith.constant 464 : index
    %c256_187 = arith.constant 256 : index
    %157 = vector.load %arg9[%c464_186, %c256_187] : memref<512x512xbf16, #tpu.memory_space<vmem>>, vector<16x128xbf16>
    tpu.vector_store %arg9[%c464_186, %c256_187], %108 {strides = array<i32>} : memref<512x512xbf16, #tpu.memory_space<vmem>>, vector<16x128xbf16>,
    %c496 = arith.constant 496 : index
    %c256_188 = arith.constant 256 : index
    %158 = vector.load %arg9[%c496, %c256_188] : memref<512x512xbf16, #tpu.memory_space<vmem>>, vector<16x128xbf16>
    tpu.vector_store %arg9[%c496, %c256_188], %109 {strides = array<i32>} : memref<512x512xbf16, #tpu.memory_space<vmem>>, vector<16x128xbf16>,
    %c32_189 = arith.constant 32 : index
    %c384_190 = arith.constant 384 : index
    %159 = vector.load %arg9[%c32_189, %c384_190] : memref<512x512xbf16, #tpu.memory_space<vmem>>, vector<16x128xbf16>
    tpu.vector_store %arg9[%c32_189, %c384_190], %94 {strides = array<i32>} : memref<512x512xbf16, #tpu.memory_space<vmem>>, vector<16x128xbf16>,
    %c64_191 = arith.constant 64 : index
    %c384_192 = arith.constant 384 : index
    %160 = vector.load %arg9[%c64_191, %c384_192] : memref<512x512xbf16, #tpu.memory_space<vmem>>, vector<16x128xbf16>
    tpu.vector_store %arg9[%c64_191, %c384_192], %95 {strides = array<i32>} : memref<512x512xbf16, #tpu.memory_space<vmem>>, vector<16x128xbf16>,
    %c96_193 = arith.constant 96 : index
    %c384_194 = arith.constant 384 : index
    %161 = vector.load %arg9[%c96_193, %c384_194] : memref<512x512xbf16, #tpu.memory_space<vmem>>, vector<16x128xbf16>
    tpu.vector_store %arg9[%c96_193, %c384_194], %96 {strides = array<i32>} : memref<512x512xbf16, #tpu.memory_space<vmem>>, vector<16x128xbf16>,
    %c128_195 = arith.constant 128 : index
    %c384_196 = arith.constant 384 : index
    %162 = vector.load %arg9[%c128_195, %c384_196] : memref<512x512xbf16, #tpu.memory_space<vmem>>, vector<16x128xbf16>
    tpu.vector_store %arg9[%c128_195, %c384_196], %97 {strides = array<i32>} : memref<512x512xbf16, #tpu.memory_space<vmem>>, vector<16x128xbf16>,
    %c160_197 = arith.constant 160 : index
    %c384_198 = arith.constant 384 : index
    %163 = vector.load %arg9[%c160_197, %c384_198] : memref<512x512xbf16, #tpu.memory_space<vmem>>, vector<16x128xbf16>
    tpu.vector_store %arg9[%c160_197, %c384_198], %98 {strides = array<i32>} : memref<512x512xbf16, #tpu.memory_space<vmem>>, vector<16x128xbf16>,
    %c192_199 = arith.constant 192 : index
    %c384_200 = arith.constant 384 : index
    %164 = vector.load %arg9[%c192_199, %c384_200] : memref<512x512xbf16, #tpu.memory_space<vmem>>, vector<16x128xbf16>
    tpu.vector_store %arg9[%c192_199, %c384_200], %99 {strides = array<i32>} : memref<512x512xbf16, #tpu.memory_space<vmem>>, vector<16x128xbf16>,
    %c224_201 = arith.constant 224 : index
    %c384_202 = arith.constant 384 : index
    %165 = vector.load %arg9[%c224_201, %c384_202] : memref<512x512xbf16, #tpu.memory_space<vmem>>, vector<16x128xbf16>
    tpu.vector_store %arg9[%c224_201, %c384_202], %100 {strides = array<i32>} : memref<512x512xbf16, #tpu.memory_space<vmem>>, vector<16x128xbf16>,
    %c256_203 = arith.constant 256 : index
    %c384_204 = arith.constant 384 : index
    %166 = vector.load %arg9[%c256_203, %c384_204] : memref<512x512xbf16, #tpu.memory_space<vmem>>, vector<16x128xbf16>
    tpu.vector_store %arg9[%c256_203, %c384_204], %101 {strides = array<i32>} : memref<512x512xbf16, #tpu.memory_space<vmem>>, vector<16x128xbf16>,
    %c288_205 = arith.constant 288 : index
    %c384_206 = arith.constant 384 : index
    %167 = vector.load %arg9[%c288_205, %c384_206] : memref<512x512xbf16, #tpu.memory_space<vmem>>, vector<16x128xbf16>
    tpu.vector_store %arg9[%c288_205, %c384_206], %102 {strides = array<i32>} : memref<512x512xbf16, #tpu.memory_space<vmem>>, vector<16x128xbf16>,
    %c320_207 = arith.constant 320 : index
    %c384_208 = arith.constant 384 : index
    %168 = vector.load %arg9[%c320_207, %c384_208] : memref<512x512xbf16, #tpu.memory_space<vmem>>, vector<16x128xbf16>
    tpu.vector_store %arg9[%c320_207, %c384_208], %103 {strides = array<i32>} : memref<512x512xbf16, #tpu.memory_space<vmem>>, vector<16x128xbf16>,
    %c352_209 = arith.constant 352 : index
    %c384_210 = arith.constant 384 : index
    %169 = vector.load %arg9[%c352_209, %c384_210] : memref<512x512xbf16, #tpu.memory_space<vmem>>, vector<16x128xbf16>
    tpu.vector_store %arg9[%c352_209, %c384_210], %104 {strides = array<i32>} : memref<512x512xbf16, #tpu.memory_space<vmem>>, vector<16x128xbf16>,
    %c384_211 = arith.constant 384 : index
    %c384_212 = arith.constant 384 : index
    %170 = vector.load %arg9[%c384_211, %c384_212] : memref<512x512xbf16, #tpu.memory_space<vmem>>, vector<16x128xbf16>
    tpu.vector_store %arg9[%c384_211, %c384_212], %105 {strides = array<i32>} : memref<512x512xbf16, #tpu.memory_space<vmem>>, vector<16x128xbf16>,
    %c416_213 = arith.constant 416 : index
    %c384_214 = arith.constant 384 : index
    %171 = vector.load %arg9[%c416_213, %c384_214] : memref<512x512xbf16, #tpu.memory_space<vmem>>, vector<16x128xbf16>
    tpu.vector_store %arg9[%c416_213, %c384_214], %106 {strides = array<i32>} : memref<512x512xbf16, #tpu.memory_space<vmem>>, vector<16x128xbf16>,
    %c448_215 = arith.constant 448 : index
    %c384_216 = arith.constant 384 : index
    %172 = vector.load %arg9[%c448_215, %c384_216] : memref<512x512xbf16, #tpu.memory_space<vmem>>, vector<16x128xbf16>
    tpu.vector_store %arg9[%c448_215, %c384_216], %107 {strides = array<i32>} : memref<512x512xbf16, #tpu.memory_space<vmem>>, vector<16x128xbf16>,
    %c480_217 = arith.constant 480 : index
    %c384_218 = arith.constant 384 : index
    %173 = vector.load %arg9[%c480_217, %c384_218] : memref<512x512xbf16, #tpu.memory_space<vmem>>, vector<16x128xbf16>
    tpu.vector_store %arg9[%c480_217, %c384_218], %108 {strides = array<i32>} : memref<512x512xbf16, #tpu.memory_space<vmem>>, vector<16x128xbf16>,
    %c0_219 = arith.constant 0 : index
    %c0_220 = arith.constant 0 : index
    %174 = vector.load %arg9[%c0_219, %c0_220] : memref<512x512xbf16, #tpu.memory_space<vmem>>, vector<512x512xbf16>
    %c0_221 = arith.constant 0 : index
    %c0_222 = arith.constant 0 : index
    %175 = vector.load %arg5[%c0_221, %c0_222] : memref<512x128xbf16, #tpu.memory_space<vmem>>, vector<512x128xbf16>
    %cst_223 = arith.constant dense<0.000000e+00> : vector<512x128xf32>
    %176 = tpu.matmul %174, %175, %cst_223 {dimension_numbers = #tpu.dot_dimension_numbers<[1], [0], [0], [1], [0, 0, 1, 1], [], []>} : vector<512x512xbf16>, vector<512x128xbf16>, vector<512x128xf32> -> vector<512x128xf32>
    %177 = math.tanh %176 : vector<512x128xf32>
    %c0_224 = arith.constant 0 : index
    %c0_225 = arith.constant 0 : index
    %178 = vector.load %arg6[%c0_224, %c0_225] : memref<512x128xf32, #tpu.memory_space<vmem>>, vector<512x128xf32>
    tpu.vector_store %arg6[%c0_224, %c0_225], %177 {strides = array<i32>} : memref<512x128xf32, #tpu.memory_space<vmem>>, vector<512x128xf32>,
    return
  }
  func.func @transform_0(%arg0: i32) -> (i32, i32) {
    %c0_i32 = arith.constant 0 : i32
    %c0_i32_0 = arith.constant 0 : i32
    return %arg0, %c0_i32 : i32, i32
  }
  func.func @transform_1(%arg0: i32) -> (i32, i32, i32) {
    %c0_i32 = arith.constant 0 : i32
    %c0_i32_0 = arith.constant 0 : i32
    %c0_i32_1 = arith.constant 0 : i32
    %c0_i32_2 = arith.constant 0 : i32
    return %c0_i32, %c0_i32_0, %c0_i32_1 : i32, i32, i32
  }
  func.func @transform_2(%arg0: i32) -> (i32, i32) {
    %c0_i32 = arith.constant 0 : i32
    %c0_i32_0 = arith.constant 0 : i32
    %c0_i32_1 = arith.constant 0 : i32
    return %c0_i32, %c0_i32_0 : i32, i32
  }
  func.func @transform_3(%arg0: i32) -> (i32, i32) {
    %c0_i32 = arith.constant 0 : i32
    %c0_i32_0 = arith.constant 0 : i32
    %c0_i32_1 = arith.constant 0 : i32
    return %c0_i32, %c0_i32_0 : i32, i32
  }
  func.func @transform_4(%arg0: i32) -> (i32, i32) {
    %c0_i32 = arith.constant 0 : i32
    %c0_i32_0 = arith.constant 0 : i32
    %c0_i32_1 = arith.constant 0 : i32
    return %c0_i32, %c0_i32_0 : i32, i32
  }
  func.func @transform_5(%arg0: i32) -> (i32, i32) {
    %c0_i32 = arith.constant 0 : i32
    %c0_i32_0 = arith.constant 0 : i32
    return %arg0, %c0_i32 : i32, i32
  }
}

</mosaic_0001>

<llo_original>
// kernel: dcgan_generator_forward.1
$region0: #{dcgan_generator_forward.1}
  #allocation0 [shape = 'u32[]', space=smem, size = 0x4, offset = 0x4, fixed_abs, tag = 'smem constant byte address 0x4 - core index']
  #allocation1 [shape = 'u32[144,128]{1,0:T(1,128)}', space=vmem, size = 0x12000, scoped, tag = 'internal scratch']
  #allocation2 [shape = 'bf16[128,512]{1,0:T(16,128)(2,1)}', space=vmem, size = 0x20000, scoped, tag = 'scratch operand']
  #allocation3 [shape = 'bf16[256,512]{1,0:T(16,128)(2,1)}', space=vmem, size = 0x40000, scoped, tag = 'scratch operand']
  #allocation4 [shape = 'bf16[512,512]{1,0:T(16,128)(2,1)}', space=vmem, size = 0x80000, scoped, tag = 'scratch operand']
  %s0 = inlined_call_operand.vmem [shape: f32[32,16], index: 0, kind: input, shape index: {}]
  %s1 = inlined_call_operand.hbm [shape: bf16[4,16,128], index: 1, kind: input, shape index: {}]
  %s2 = inlined_call_operand.hbm [shape: bf16[512,128], index: 2, kind: input, shape index: {}]
  %s3 = inlined_call_operand.hbm [shape: bf16[512,128], index: 3, kind: input, shape index: {}]
  %s4 = inlined_call_operand.hbm [shape: bf16[512,128], index: 4, kind: input, shape index: {}]
  %s5 = inlined_call_operand.vmem [shape: f32[1024,128], index: 5, kind: output, shape index: {}]
  %s6 = sld [smem:[#allocation0]]
  $region69: #{dcgan_generator_forward.1} parent=0
    _
  %s8 = ssub.s32 1, %s6
  %s9 = scalar_select 0, %s8, %s6
  $region1: #{dcgan_generator_forward.1} parent=0
    #allocation5 [shape = 'u8[16384]{0}', space=vmem, size = 0x4000, scoped, tag = 'input window, operand 1, single buffered']
    #allocation6 [shape = 's32[2]{0}', space=sflag, size = 0x8, scoped, tag = 'scoped memory for dcgan_generator_forward.1']
    #allocation7 [shape = 'u8[131072]{0}', space=vmem, size = 0x20000, scoped, tag = 'input window, operand 2, single buffered']
    #allocation8 [shape = 's32[1]{0}', space=sflag, size = 0x4, scoped, tag = 'scoped memory for dcgan_generator_forward.1']
    #allocation9 [shape = 'u8[131072]{0}', space=vmem, size = 0x20000, scoped, tag = 'input window, operand 3, single buffered']
    #allocation10 [shape = 'u8[131072]{0}', space=vmem, size = 0x20000, scoped, tag = 'input window, operand 4, single buffered']
    #allocation11 [shape = 's32[1]{0}', space=sflag, size = 0x4, scoped, tag = 'scoped memory for dcgan_generator_forward.1']
    %10 = vsyncpa [#allocation6], 0
    %11 = vsyncpa [#allocation8], 0
    %12 = vsyncpa [#allocation11], 0
    loop: start=0, step=1, limit=4
    $region2: #{dcgan_generator_forward.1} parent=1 // loop_pre_header
      _
    $region3: #{dcgan_generator_forward.1} parent=1 // loop_header
      %s14 = sphi 0, %s18
      %p15 = scmp.ge.s32.totalorder %s14, 4
      %s24 = sphi 0, %s26
      %s27 = sphi 0, %s24
      %s28 = sphi 0, %s27
      %s44 = sphi 0, %s28
      %s48 = sphi 0, %s48
      %s50 = sphi 0, %s48
      %s51 = sphi 0, %s50
      %s65 = sphi 0, %s51
      %s69 = sphi 0, %s69
      %s71 = sphi 0, %s69
      %s72 = sphi 0, %s71
      %s86 = sphi 0, %s72
      %s90 = sphi 0, %s90
      %s92 = sphi 0, %s90
      %s93 = sphi 0, %s92
      %s107 = sphi 0, %s93
      %s111 = sphi 0, %s111
      %s113 = sphi 0, %s111
      %s114 = sphi 0, %s113
      %s128 = sphi 0, %s114
      %s134 = sphi 0, %s136
      %s137 = sphi 0, %s134
      %s138 = sphi 0, %s137
      %s154 = sphi 0, %s138
    $region4: #{dcgan_generator_forward.1} parent=1 // loop_header_branch
      %17 = sbr.rel (%p15) target = $region8
    $region5: #{dcgan_generator_forward.1} parent=1 // loop_body
      %s19 = ssub.s32 %s14, 1
      %s20 = ssub.s32 %s14, 2
      %s21 = sadd.s32 %s14, 1
      %s22 = ssub.s32 %s14, %s21
      %p23 = scmp.eq.s32.totalorder %s22, 0
      %s25 = sadd.s32 %s24, 1
      %s26 = scalar_select %p23, %s24, %s25
      %p29 = pneg %p23
      %p30 = scmp.eq.s32.totalorder %s14, 1
      %p31 = por %p29, %p30
      %p32 = scmp.ne.s32.totalorder %s24, %s27
      %p33 = scmp.eq.s32.totalorder %s14, 0
      %p34 = por %p32, %p33
      %p35 = scmp.ne.s32.totalorder %s24, %s27
      %p36 = scmp.eq.s32.totalorder %s19, 1
      %p37 = por %p35, %p36
      %p38 = scmp.ne.s32.totalorder %s27, %s28
      %p39 = scmp.eq.s32.totalorder %s19, 0
      %p40 = por %p38, %p39
      %p41 = scmp.ne.s32.totalorder %s27, %s28
      %p42 = scmp.eq.s32.totalorder %s20, 1
      %p43 = por %p41, %p42
      %p45 = scmp.ne.s32.totalorder %s28, %s44
      %p46 = scmp.eq.s32.totalorder %s20, 0
      %p47 = por %p45, %p46
      %s49 = sadd.s32 %s48, 1
      %p52 = scmp.eq.s32.totalorder %s14, 1
      %p53 = scmp.ne.s32.totalorder %s48, %s50
      %p54 = scmp.eq.s32.totalorder %s14, 0
      %p55 = por %p53, %p54
      %p56 = scmp.ne.s32.totalorder %s48, %s50
      %p57 = scmp.eq.s32.totalorder %s19, 1
      %p58 = por %p56, %p57
      %p59 = scmp.ne.s32.totalorder %s50, %s51
      %p60 = scmp.eq.s32.totalorder %s19, 0
      %p61 = por %p59, %p60
      %p62 = scmp.ne.s32.totalorder %s50, %s51
      %p63 = scmp.eq.s32.totalorder %s20, 1
      %p64 = por %p62, %p63
      %p66 = scmp.ne.s32.totalorder %s51, %s65
      %p67 = scmp.eq.s32.totalorder %s20, 0
      %p68 = por %p66, %p67
      %s70 = sadd.s32 %s69, 1
      %p73 = scmp.eq.s32.totalorder %s14, 1
      %p74 = scmp.ne.s32.totalorder %s69, %s71
      %p75 = scmp.eq.s32.totalorder %s14, 0
      %p76 = por %p74, %p75
      %p77 = scmp.ne.s32.totalorder %s69, %s71
      %p78 = scmp.eq.s32.totalorder %s19, 1
      %p79 = por %p77, %p78
      %p80 = scmp.ne.s32.totalorder %s71, %s72
      %p81 = scmp.eq.s32.totalorder %s19, 0
      %p82 = por %p80, %p81
      %p83 = scmp.ne.s32.totalorder %s71, %s72
      %p84 = scmp.eq.s32.totalorder %s20, 1
      %p85 = por %p83, %p84
      %p87 = scmp.ne.s32.totalorder %s72, %s86
      %p88 = scmp.eq.s32.totalorder %s20, 0
      %p89 = por %p87, %p88
      %s91 = sadd.s32 %s90, 1
      %p94 = scmp.eq.s32.totalorder %s14, 1
      %p95 = scmp.ne.s32.totalorder %s90, %s92
      %p96 = scmp.eq.s32.totalorder %s14, 0
      %p97 = por %p95, %p96
      %p98 = scmp.ne.s32.totalorder %s90, %s92
      %p99 = scmp.eq.s32.totalorder %s19, 1
      %p100 = por %p98, %p99
      %p101 = scmp.ne.s32.totalorder %s92, %s93
      %p102 = scmp.eq.s32.totalorder %s19, 0
      %p103 = por %p101, %p102
      %p104 = scmp.ne.s32.totalorder %s92, %s93
      %p105 = scmp.eq.s32.totalorder %s20, 1
      %p106 = por %p104, %p105
      %p108 = scmp.ne.s32.totalorder %s93, %s107
      %p109 = scmp.eq.s32.totalorder %s20, 0
      %p110 = por %p108, %p109
      %s112 = sadd.s32 %s111, 1
      %p115 = scmp.eq.s32.totalorder %s14, 1
      %p116 = scmp.ne.s32.totalorder %s111, %s113
      %p117 = scmp.eq.s32.totalorder %s14, 0
      %p118 = por %p116, %p117
      %p119 = scmp.ne.s32.totalorder %s111, %s113
      %p120 = scmp.eq.s32.totalorder %s19, 1
      %p121 = por %p119, %p120
      %p122 = scmp.ne.s32.totalorder %s113, %s114
      %p123 = scmp.eq.s32.totalorder %s19, 0
      %p124 = por %p122, %p123
      %p125 = scmp.ne.s32.totalorder %s113, %s114
      %p126 = scmp.eq.s32.totalorder %s20, 1
      %p127 = por %p125, %p126
      %p129 = scmp.ne.s32.totalorder %s114, %s128
      %p130 = scmp.eq.s32.totalorder %s20, 0
      %p131 = por %p129, %p130
      %s132 = ssub.s32 %s14, %s21
      %p133 = scmp.eq.s32.totalorder %s132, 0
      %s135 = sadd.s32 %s134, 1
      %s136 = scalar_select %p133, %s134, %s135
      %p139 = pneg %p133
      %p140 = scmp.eq.s32.totalorder %s14, 1
      %p141 = por %p139, %p140
      %p142 = scmp.ne.s32.totalorder %s134, %s137
      %p143 = scmp.eq.s32.totalorder %s14, 0
      %p144 = por %p142, %p143
      %p145 = scmp.ne.s32.totalorder %s134, %s137
      %p146 = scmp.eq.s32.totalorder %s19, 1
      %p147 = por %p145, %p146
      %p148 = scmp.ne.s32.totalorder %s137, %s138
      %p149 = scmp.eq.s32.totalorder %s19, 0
      %p150 = por %p148, %p149
      %p151 = scmp.ne.s32.totalorder %s137, %s138
      %p152 = scmp.eq.s32.totalorder %s20, 1
      %p153 = por %p151, %p152
      %p155 = scmp.ne.s32.totalorder %s138, %s154
      %p156 = scmp.eq.s32.totalorder %s20, 0
      %p157 = por %p155, %p156
      %p158 = scmp.le.s32.totalorder 1, %s14
      %p159 = scmp.lt.s32.totalorder %s14, 3
      %p160 = pnand %p158, %p159
      %p161 = pneg %p160
      // Predicated region
      $region9: #{dcgan_generator_forward.1} parent=5 // pred_check
        _
      $region10: #{dcgan_generator_forward.1} parent=5 // pred_check_branch
        %163 = sbr.rel (%p160) target = $region12
      $region11: #{dcgan_generator_forward.1} parent=5 // pred_region
        %s164 = ssub.s32 %s14, 1
        // Predicated region
        $region13: #{dcgan_generator_forward.1} parent=11 // pred_check
          %p165 = pneg %p61
        $region14: #{dcgan_generator_forward.1} parent=11 // pred_check_branch
          %167 = sbr.rel (%p165) target = $region16
        $region15: #{dcgan_generator_forward.1} parent=11 // pred_region
          %s169 = ssub.s32 512, 512
          %170 = vsyncadd [#allocation6], %s169
          %s171 = sshll.u32 [#allocation5], 4
          %s172 = int_to_ptr.vmem [resolvable:$true] %s171
          %177 = dma.hbm_to_vmem [thread:$0]  %s1, 512, %s172, [#allocation6], 64, 64, 4
        $region16: #{dcgan_generator_forward.1} parent=11 // pred_fallthru
          _
        // Predicated region
        $region17: #{dcgan_generator_forward.1} parent=11 // pred_check
          %p178 = pneg %p82
        $region18: #{dcgan_generator_forward.1} parent=11 // pred_check_branch
          %180 = sbr.rel (%p178) target = $region20
        $region19: #{dcgan_generator_forward.1} parent=11 // pred_region
          %s182 = ssub.s32 4096, 4096
          %183 = vsyncadd [#allocation8], %s182
          %s184 = sshll.u32 [#allocation7], 4
          %s185 = int_to_ptr.vmem [resolvable:$true] %s184
          %190 = dma.hbm_to_vmem [thread:$0]  %s2, 4096, %s185, [#allocation8], 64, 64, 4
        $region20: #{dcgan_generator_forward.1} parent=11 // pred_fallthru
          _
        // Predicated region
        $region21: #{dcgan_generator_forward.1} parent=11 // pred_check
          %p191 = pneg %p103
        $region22: #{dcgan_generator_forward.1} parent=11 // pred_check_branch
          %193 = sbr.rel (%p191) target = $region24
        $region23: #{dcgan_generator_forward.1} parent=11 // pred_region
          %s195 = ssub.s32 4096, 4096
          %196 = vsyncadd [#allocation8], %s195
          %s197 = sshll.u32 [#allocation9], 4
          %s198 = int_to_ptr.vmem [resolvable:$true] %s197
          %203 = dma.hbm_to_vmem [thread:$0]  %s3, 4096, %s198, [#allocation8], 64, 64, 4
        $region24: #{dcgan_generator_forward.1} parent=11 // pred_fallthru
          _
        // Predicated region
        $region25: #{dcgan_generator_forward.1} parent=11 // pred_check
          %p204 = pneg %p124
        $region26: #{dcgan_generator_forward.1} parent=11 // pred_check_branch
          %206 = sbr.rel (%p204) target = $region28
        $region27: #{dcgan_generator_forward.1} parent=11 // pred_region
          %s208 = ssub.s32 4096, 4096
          %209 = vsyncadd [#allocation11], %s208
          %s210 = sshll.u32 [#allocation10], 4
          %s211 = int_to_ptr.vmem [resolvable:$true] %s210
          %216 = dma.hbm_to_vmem [thread:$0]  %s4, 4096, %s211, [#allocation11], 64, 64, 4
        $region28: #{dcgan_generator_forward.1} parent=11 // pred_fallthru
          _
      $region12: #{dcgan_generator_forward.1} parent=5 // pred_fallthru
        _
      %p217 = scmp.lt.s32.totalorder %s14, 2
      // Predicated region
      $region29: #{dcgan_generator_forward.1} parent=5 // pred_check
        %p218 = pneg %p217
      $region30: #{dcgan_generator_forward.1} parent=5 // pred_check_branch
        %220 = sbr.rel (%p218) target = $region32
      $region31: #{dcgan_generator_forward.1} parent=5 // pred_region
        // Predicated region
        $region33: #{dcgan_generator_forward.1} parent=31 // pred_check
          %p221 = pneg %p34
        $region34: #{dcgan_generator_forward.1} parent=31 // pred_check_branch
          %223 = sbr.rel (%p221) target = $region36
        $region35: #{dcgan_generator_forward.1} parent=31 // pred_region
          %s224 = smul.u32 2, %s14
          %p225 = scmp.lt.s32.totalorder %s224, 3
          %s226 = scalar_select %p225, %s224, 3
          %s227 = smul.addr %s226, 8
          %s228 = scalar_lea.vmem %s0, %s227
          %s229 = smul.u32 2, %s14
        $region36: #{dcgan_generator_forward.1} parent=31 // pred_fallthru
          _
      $region32: #{dcgan_generator_forward.1} parent=5 // pred_fallthru
        _
      %p230 = scmp.le.s32.totalorder 1, %s14
      %p231 = scmp.lt.s32.totalorder %s14, 3
      %p232 = pnand %p230, %p231
      %p233 = pneg %p232
      // Predicated region
      $region37: #{dcgan_generator_forward.1} parent=5 // pred_check
        _
      $region38: #{dcgan_generator_forward.1} parent=5 // pred_check_branch
        %235 = sbr.rel (%p232) target = $region40
      $region39: #{dcgan_generator_forward.1} parent=5 // pred_region
        %s236 = ssub.s32 %s14, 1
        // Predicated region
        $region41: #{dcgan_generator_forward.1} parent=39 // pred_check
          %p237 = pneg %p61
        $region42: #{dcgan_generator_forward.1} parent=39 // pred_check_branch
          %239 = sbr.rel (%p237) target = $region44
        $region43: #{dcgan_generator_forward.1} parent=39 // pred_region
          %240 = dma.done [#allocation6], 512
        $region44: #{dcgan_generator_forward.1} parent=39 // pred_fallthru
          _
        // Predicated region
        $region45: #{dcgan_generator_forward.1} parent=39 // pred_check
          %p241 = pneg %p82
        $region46: #{dcgan_generator_forward.1} parent=39 // pred_check_branch
          %243 = sbr.rel (%p241) target = $region48
        $region47: #{dcgan_generator_forward.1} parent=39 // pred_region
          %244 = dma.done [#allocation8], 4096
        $region48: #{dcgan_generator_forward.1} parent=39 // pred_fallthru
          _
        // Predicated region
        $region49: #{dcgan_generator_forward.1} parent=39 // pred_check
          %p245 = pneg %p103
        $region50: #{dcgan_generator_forward.1} parent=39 // pred_check_branch
          %247 = sbr.rel (%p245) target = $region52
        $region51: #{dcgan_generator_forward.1} parent=39 // pred_region
          %248 = dma.done [#allocation8], 4096
        $region52: #{dcgan_generator_forward.1} parent=39 // pred_fallthru
          _
        // Predicated region
        $region53: #{dcgan_generator_forward.1} parent=39 // pred_check
          %p249 = pneg %p124
        $region54: #{dcgan_generator_forward.1} parent=39 // pred_check_branch
          %251 = sbr.rel (%p249) target = $region56
        $region55: #{dcgan_generator_forward.1} parent=39 // pred_region
          %252 = dma.done [#allocation11], 4096
        $region56: #{dcgan_generator_forward.1} parent=39 // pred_fallthru
          _
        %s253 = smul.u32 2, %s19
        %p254 = scmp.lt.s32.totalorder %s253, 3
        %s255 = scalar_select %p254, %s253, 3
        %s256 = smul.addr %s255, 8
        %s257 = scalar_lea.vmem %s0, %s256
        %p258 = pneg %p40
        %p259 = pneg %p37
        %p260 = pneg %p61
        %p261 = pneg %p58
        %p262 = pneg %p82
        %p263 = pneg %p79
        %p264 = pneg %p103
        %p265 = pneg %p100
        %p266 = pneg %p124
        %p267 = pneg %p121
        %p268 = pneg %p150
        %p269 = pneg %p147
        %s270 = smul.u32 64, %s19
        %p271 = scmp.lt.s32.totalorder %s270, 127
        %s272 = scalar_select %p271, %s270, 127
        %s273 = smul.addr %s272, 8
        %s274 = scalar_lea.vmem %s5, %s273
        %s275 = smul.u32 2, %s19
        %p276 = scmp.lt.s32.totalorder %s275, 3
        %s277 = scalar_select %p276, %s275, 3
        %s278 = smul.addr %s277, 8
        %s279 = scalar_lea.vmem %s0, %s278
        %s280 = smul.u32 2, %s19
        %s281 = smul.u32 64, %s19
        %p282 = scmp.lt.s32.totalorder %s281, 127
        %s283 = scalar_select %p282, %s281, 127
        %s284 = smul.addr %s283, 8
        %s285 = scalar_lea.vmem %s5, %s284
        %s286 = smul.u32 64, %s19
        %v288 = vld [vmem:[%s279] sm:$0xff]
        %v289 = vld [vmem:[%s279 + $0x8] sm:$0xff]
        %v290 = vpack.c.bf16 %v289, %v288
        %v291 = vld [vmem:[#allocation5] sm:$0xf]
        %v292 = vld [vmem:[#allocation5 + $0x4] sm:$0xf]
        %v295 = vunpack.c.l.b16 %v291
        %v296 = vunpack.c.l.b16 %v292
        %v297 = vpack.c.b16 %v296, %v295
        %vm299 = vcmask 130048
        %v301 = vsel %vm299, %v290, 0
        %303 = vmatprep.subr.bf16.mxu0 0
        %304 = vmatpush1.bf16.msra.mxu0 %v297
        %305 = vmatprep.subr.bf16.mxu0 0
        %306 = vmatpush1.bf16.msra.mxu0 0
        %307 = vmatprep.subr.bf16.mxu0 0
        %308 = vmatpush1.bf16.msra.mxu0 0
        %309 = vmatprep.subr.bf16.mxu0 0
        %310 = vmatpush1.bf16.msra.mxu0 0
        %311 = vmatprep.subr.bf16.mxu0 0
        %312 = vmatpush1.bf16.msra.mxu0 0
        %313 = vmatprep.subr.bf16.mxu0 0
        %314 = vmatpush1.bf16.msra.mxu0 0
        %315 = vmatprep.subr.bf16.mxu0 0
        %316 = vmatpush1.bf16.msra.mxu0 0
        %317 = vmatprep.subr.bf16.mxu0 0
        %318 = vmatpush1.bf16.msra.mxu0 0
        %319 = vmatprep.subr.bf16.mxu0 0
        %320 = vmatpush1.bf16.msra.mxu0 0
        %321 = vmatprep.subr.bf16.mxu0 0
        %322 = vmatpush1.bf16.msra.mxu0 0
        %323 = vmatprep.subr.bf16.mxu0 0
        %324 = vmatpush1.bf16.msra.mxu0 0
        %325 = vmatprep.subr.bf16.mxu0 0
        %326 = vmatpush1.bf16.msra.mxu0 0
        %327 = vmatprep.subr.bf16.mxu0 0
        %328 = vmatpush1.bf16.msra.mxu0 0
        %329 = vmatprep.subr.bf16.mxu0 0
        %330 = vmatpush1.bf16.msra.mxu0 0
        %331 = vmatprep.subr.bf16.mxu0 0
        %332 = vmatpush1.bf16.msra.mxu0 0
        %333 = vmatprep.subr.bf16.mxu0 0
        %334 = vmatpush1.bf16.msra.mxu0 0
        %335 = vmatprep.mubr.bf16.mxu0 0
        %336 = vmatmul.mubr.bf16.gmra.mrb[0].mxu0 %v301
        %v337 = vpop.f32.mrb[0].mxu0
        %v338 = vadd.f32 0.0, %v337
        %v339 = vpop.f32.mrb[0].mxu0
        %v340 = vpop.f32.mrb[0].mxu0
        %v341 = vadd.f32 0.0, %v340
        %v342 = vpop.f32.mrb[0].mxu0
        %343 = vdwg.mxu0
        %v344 = vmax.f32 %v338, 0.0
        %v345 = vmax.f32 %v341, 0.0
        %v346 = vpack.c.bf16 %v345, %v344
        %s347 = scalar_lea.vmem [#allocation5], 8
        %v348 = vld [vmem:[%s347] sm:$0xf]
        %v349 = vld [vmem:[%s347 + $0x4] sm:$0xf]
        %v352 = vunpack.c.l.b16 %v348
        %v353 = vunpack.c.l.b16 %v349
        %v354 = vpack.c.b16 %v353, %v352
        %356 = vmatprep.subr.bf16.mxu0 0
        %357 = vmatpush1.bf16.msra.mxu0 %v354
        %358 = vmatprep.subr.bf16.mxu0 0
        %359 = vmatpush1.bf16.msra.mxu0 0
        %360 = vmatprep.subr.bf16.mxu0 0
        %361 = vmatpush1.bf16.msra.mxu0 0
        %362 = vmatprep.subr.bf16.mxu0 0
        %363 = vmatpush1.bf16.msra.mxu0 0
        %364 = vmatprep.subr.bf16.mxu0 0
        %365 = vmatpush1.bf16.msra.mxu0 0
        %366 = vmatprep.subr.bf16.mxu0 0
        %367 = vmatpush1.bf16.msra.mxu0 0
        %368 = vmatprep.subr.bf16.mxu0 0
        %369 = vmatpush1.bf16.msra.mxu0 0
        %370 = vmatprep.subr.bf16.mxu0 0
        %371 = vmatpush1.bf16.msra.mxu0 0
        %372 = vmatprep.subr.bf16.mxu0 0
        %373 = vmatpush1.bf16.msra.mxu0 0
        %374 = vmatprep.subr.bf16.mxu0 0
        %375 = vmatpush1.bf16.msra.mxu0 0
        %376 = vmatprep.subr.bf16.mxu0 0
        %377 = vmatpush1.bf16.msra.mxu0 0
        %378 = vmatprep.subr.bf16.mxu0 0
        %379 = vmatpush1.bf16.msra.mxu0 0
        %380 = vmatprep.subr.bf16.mxu0 0
        %381 = vmatpush1.bf16.msra.mxu0 0
        %382 = vmatprep.subr.bf16.mxu0 0
        %383 = vmatpush1.bf16.msra.mxu0 0
        %384 = vmatprep.subr.bf16.mxu0 0
        %385 = vmatpush1.bf16.msra.mxu0 0
        %386 = vmatprep.subr.bf16.mxu0 0
        %387 = vmatpush1.bf16.msra.mxu0 0
        %388 = vmatprep.mubr.bf16.mxu0 0
        %389 = vmatmul.mubr.bf16.gmra.mrb[0].mxu0 %v301
        %v390 = vpop.f32.mrb[0].mxu0
        %v391 = vadd.f32 0.0, %v390
        %v392 = vpop.f32.mrb[0].mxu0
        %v393 = vpop.f32.mrb[0].mxu0
        %v394 = vadd.f32 0.0, %v393
        %v395 = vpop.f32.mrb[0].mxu0
        %396 = vdwg.mxu0
        %v397 = vmax.f32 %v391, 0.0
        %v398 = vmax.f32 %v394, 0.0
        %v399 = vpack.c.bf16 %v398, %v397
        %s400 = scalar_lea.vmem [#allocation5], 16
        %v401 = vld [vmem:[%s400] sm:$0xf]
        %v402 = vld [vmem:[%s400 + $0x4] sm:$0xf]
        %v405 = vunpack.c.l.b16 %v401
        %v406 = vunpack.c.l.b16 %v402
        %v407 = vpack.c.b16 %v406, %v405
        %409 = vmatprep.subr.bf16.mxu0 0
        %410 = vmatpush1.bf16.msra.mxu0 %v407
        %411 = vmatprep.subr.bf16.mxu0 0
        %412 = vmatpush1.bf16.msra.mxu0 0
        %413 = vmatprep.subr.bf16.mxu0 0
        %414 = vmatpush1.bf16.msra.mxu0 0
        %415 = vmatprep.subr.bf16.mxu0 0
        %416 = vmatpush1.bf16.msra.mxu0 0
        %417 = vmatprep.subr.bf16.mxu0 0
        %418 = vmatpush1.bf16.msra.mxu0 0
        %419 = vmatprep.subr.bf16.mxu0 0
        %420 = vmatpush1.bf16.msra.mxu0 0
        %421 = vmatprep.subr.bf16.mxu0 0
        %422 = vmatpush1.bf16.msra.mxu0 0
        %423 = vmatprep.subr.bf16.mxu0 0
        %424 = vmatpush1.bf16.msra.mxu0 0
        %425 = vmatprep.subr.bf16.mxu0 0
        %426 = vmatpush1.bf16.msra.mxu0 0
        %427 = vmatprep.subr.bf16.mxu0 0
        %428 = vmatpush1.bf16.msra.mxu0 0
        %429 = vmatprep.subr.bf16.mxu0 0
        %430 = vmatpush1.bf16.msra.mxu0 0
        %431 = vmatprep.subr.bf16.mxu0 0
        %432 = vmatpush1.bf16.msra.mxu0 0
        %433 = vmatprep.subr.bf16.mxu0 0
        %434 = vmatpush1.bf16.msra.mxu0 0
        %435 = vmatprep.subr.bf16.mxu0 0
        %436 = vmatpush1.bf16.msra.mxu0 0
        %437 = vmatprep.subr.bf16.mxu0 0
        %438 = vmatpush1.bf16.msra.mxu0 0
        %439 = vmatprep.subr.bf16.mxu0 0
        %440 = vmatpush1.bf16.msra.mxu0 0
        %441 = vmatprep.mubr.bf16.mxu0 0
        %442 = vmatmul.mubr.bf16.gmra.mrb[0].mxu0 %v301
        %v443 = vpop.f32.mrb[0].mxu0
        %v444 = vadd.f32 0.0, %v443
        %v445 = vpop.f32.mrb[0].mxu0
        %v446 = vpop.f32.mrb[0].mxu0
        %v447 = vadd.f32 0.0, %v446
        %v448 = vpop.f32.mrb[0].mxu0
        %449 = vdwg.mxu0
        %v450 = vmax.f32 %v444, 0.0
        %v451 = vmax.f32 %v447, 0.0
        %v452 = vpack.c.bf16 %v451, %v450
        %s453 = scalar_lea.vmem [#allocation5], 24
        %v454 = vld [vmem:[%s453] sm:$0xf]
        %v455 = vld [vmem:[%s453 + $0x4] sm:$0xf]
        %v458 = vunpack.c.l.b16 %v454
        %v459 = vunpack.c.l.b16 %v455
        %v460 = vpack.c.b16 %v459, %v458
        %462 = vmatprep.subr.bf16.mxu0 0
        %463 = vmatpush1.bf16.msra.mxu0 %v460
        %464 = vmatprep.subr.bf16.mxu0 0
        %465 = vmatpush1.bf16.msra.mxu0 0
        %466 = vmatprep.subr.bf16.mxu0 0
        %467 = vmatpush1.bf16.msra.mxu0 0
        %468 = vmatprep.subr.bf16.mxu0 0
        %469 = vmatpush1.bf16.msra.mxu0 0
        %470 = vmatprep.subr.bf16.mxu0 0
        %471 = vmatpush1.bf16.msra.mxu0 0
        %472 = vmatprep.subr.bf16.mxu0 0
        %473 = vmatpush1.bf16.msra.mxu0 0
        %474 = vmatprep.subr.bf16.mxu0 0
        %475 = vmatpush1.bf16.msra.mxu0 0
        %476 = vmatprep.subr.bf16.mxu0 0
        %477 = vmatpush1.bf16.msra.mxu0 0
        %478 = vmatprep.subr.bf16.mxu0 0
        %479 = vmatpush1.bf16.msra.mxu0 0
        %480 = vmatprep.subr.bf16.mxu0 0
        %481 = vmatpush1.bf16.msra.mxu0 0
        %482 = vmatprep.subr.bf16.mxu0 0
        %483 = vmatpush1.bf16.msra.mxu0 0
        %484 = vmatprep.subr.bf16.mxu0 0
        %485 = vmatpush1.bf16.msra.mxu0 0
        %486 = vmatprep.subr.bf16.mxu0 0
        %487 = vmatpush1.bf16.msra.mxu0 0
        %488 = vmatprep.subr.bf16.mxu0 0
        %489 = vmatpush1.bf16.msra.mxu0 0
        %490 = vmatprep.subr.bf16.mxu0 0
        %491 = vmatpush1.bf16.msra.mxu0 0
        %492 = vmatprep.subr.bf16.mxu0 0
        %493 = vmatpush1.bf16.msra.mxu0 0
        %494 = vmatprep.mubr.bf16.mxu0 0
        %495 = vmatmul.mubr.bf16.gmra.mrb[0].mxu0 %v301
        %v496 = vpop.f32.mrb[0].mxu0
        %v497 = vadd.f32 0.0, %v496
        %v498 = vpop.f32.mrb[0].mxu0
        %v499 = vpop.f32.mrb[0].mxu0
        %v500 = vadd.f32 0.0, %v499
        %v501 = vpop.f32.mrb[0].mxu0
        %502 = vdwg.mxu0
        %v503 = vmax.f32 %v497, 0.0
        %v504 = vmax.f32 %v500, 0.0
        %v505 = vpack.c.bf16 %v504, %v503
        %506 = vst [vmem:[#allocation2] sm:$0xff] 0
        %507 = vst [vmem:[#allocation2 + $0x8] sm:$0xff] 0
        %508 = vst [vmem:[#allocation2 + $0x10] sm:$0xff] 0
        %509 = vst [vmem:[#allocation2 + $0x18] sm:$0xff] 0
        %510 = vst [vmem:[#allocation2 + $0x20] sm:$0xff] 0
        %511 = vst [vmem:[#allocation2 + $0x28] sm:$0xff] 0
        %512 = vst [vmem:[#allocation2 + $0x30] sm:$0xff] 0
        %513 = vst [vmem:[#allocation2 + $0x38] sm:$0xff] 0
        %514 = vst [vmem:[#allocation2 + $0x40] sm:$0xff] 0
        %515 = vst [vmem:[#allocation2 + $0x48] sm:$0xff] 0
        %516 = vst [vmem:[#allocation2 + $0x50] sm:$0xff] 0
        %517 = vst [vmem:[#allocation2 + $0x58] sm:$0xff] 0
        %518 = vst [vmem:[#allocation2 + $0x60] sm:$0xff] 0
        %519 = vst [vmem:[#allocation2 + $0x68] sm:$0xff] 0
        %520 = vst [vmem:[#allocation2 + $0x70] sm:$0xff] 0
        %521 = vst [vmem:[#allocation2 + $0x78] sm:$0xff] 0
        %522 = vst [vmem:[#allocation2 + $0x80] sm:$0xff] 0
        %523 = vst [vmem:[#allocation2 + $0x88] sm:$0xff] 0
        %524 = vst [vmem:[#allocation2 + $0x90] sm:$0xff] 0
        %525 = vst [vmem:[#allocation2 + $0x98] sm:$0xff] 0
        %526 = vst [vmem:[#allocation2 + $0xa0] sm:$0xff] 0
        %527 = vst [vmem:[#allocation2 + $0xa8] sm:$0xff] 0
        %528 = vst [vmem:[#allocation2 + $0xb0] sm:$0xff] 0
        %529 = vst [vmem:[#allocation2 + $0xb8] sm:$0xff] 0
        %530 = vst [vmem:[#allocation2 + $0xc0] sm:$0xff] 0
        %531 = vst [vmem:[#allocation2 + $0xc8] sm:$0xff] 0
        %532 = vst [vmem:[#allocation2 + $0xd0] sm:$0xff] 0
        %533 = vst [vmem:[#allocation2 + $0xd8] sm:$0xff] 0
        %534 = vst [vmem:[#allocation2 + $0xe0] sm:$0xff] 0
        %535 = vst [vmem:[#allocation2 + $0xe8] sm:$0xff] 0
        %536 = vst [vmem:[#allocation2 + $0xf0] sm:$0xff] 0
        %537 = vst [vmem:[#allocation2 + $0xf8] sm:$0xff] 0
        %538 = vst [vmem:[#allocation2 + $0x20] sm:$0xff] %v399
        %539 = vst [vmem:[#allocation2 + $0x60] sm:$0xff] %v452
        %540 = vst [vmem:[#allocation2 + $0xa0] sm:$0xff] %v505
        %541 = vst [vmem:[#allocation2 + $0x8] sm:$0xff] %v346
        %542 = vst [vmem:[#allocation2 + $0x48] sm:$0xff] %v399
        %543 = vst [vmem:[#allocation2 + $0x88] sm:$0xff] %v452
        %544 = vst [vmem:[#allocation2 + $0xc8] sm:$0xff] %v505
        %545 = vst [vmem:[#allocation2 + $0x30] sm:$0xff] %v346
        %546 = vst [vmem:[#allocation2 + $0x70] sm:$0xff] %v399
        %547 = vst [vmem:[#allocation2 + $0xb0] sm:$0xff] %v452
        %548 = vst [vmem:[#allocation2 + $0xf0] sm:$0xff] %v505
        %549 = vst [vmem:[#allocation2 + $0x58] sm:$0xff] %v346
        %550 = vst [vmem:[#allocation2 + $0x98] sm:$0xff] %v399
        %551 = vst [vmem:[#allocation2 + $0xd8] sm:$0xff] %v452
        %v552 = vld [vmem:[#allocation2] sm:$0xff]
        %v553 = vld [vmem:[#allocation2 + $0x8] sm:$0xff]
        %v554 = vld [vmem:[#allocation2 + $0x10] sm:$0xff]
        %v555 = vld [vmem:[#allocation2 + $0x18] sm:$0xff]
        %v556 = vld [vmem:[#allocation2 + $0x20] sm:$0xff]
        %v557 = vld [vmem:[#allocation2 + $0x28] sm:$0xff]
        %v558 = vld [vmem:[#allocation2 + $0x30] sm:$0xff]
        %v559 = vld [vmem:[#allocation2 + $0x38] sm:$0xff]
        %v560 = vld [vmem:[#allocation2 + $0x40] sm:$0xff]
        %v561 = vld [vmem:[#allocation2 + $0x48] sm:$0xff]
        %v562 = vld [vmem:[#allocation2 + $0x50] sm:$0xff]
        %v563 = vld [vmem:[#allocation2 + $0x58] sm:$0xff]
        %v564 = vld [vmem:[#allocation2 + $0x60] sm:$0xff]
        %v565 = vld [vmem:[#allocation2 + $0x68] sm:$0xff]
        %v566 = vld [vmem:[#allocation2 + $0x70] sm:$0xff]
        %v567 = vld [vmem:[#allocation2 + $0x78] sm:$0xff]
        %v568 = vld [vmem:[#allocation2 + $0x80] sm:$0xff]
        %v569 = vld [vmem:[#allocation2 + $0x88] sm:$0xff]
        %v570 = vld [vmem:[#allocation2 + $0x90] sm:$0xff]
        %v571 = vld [vmem:[#allocation2 + $0x98] sm:$0xff]
        %v572 = vld [vmem:[#allocation2 + $0xa0] sm:$0xff]
        %v573 = vld [vmem:[#allocation2 + $0xa8] sm:$0xff]
        %v574 = vld [vmem:[#allocation2 + $0xb0] sm:$0xff]
        %v575 = vld [vmem:[#allocation2 + $0xb8] sm:$0xff]
        %v576 = vld [vmem:[#allocation2 + $0xc0] sm:$0xff]
        %v577 = vld [vmem:[#allocation2 + $0xc8] sm:$0xff]
        %v578 = vld [vmem:[#allocation2 + $0xd0] sm:$0xff]
        %v579 = vld [vmem:[#allocation2 + $0xd8] sm:$0xff]
        %v580 = vld [vmem:[#allocation2 + $0xe0] sm:$0xff]
        %v581 = vld [vmem:[#allocation2 + $0xe8] sm:$0xff]
        %v582 = vld [vmem:[#allocation2 + $0xf0] sm:$0xff]
        %v583 = vld [vmem:[#allocation2 + $0xf8] sm:$0xff]
        %v584 = vld [vmem:[#allocation7] sm:$0xf]
        %v585 = vld [vmem:[#allocation7 + $0x4] sm:$0xf]
        %v586 = vld [vmem:[#allocation7 + $0x8] sm:$0xf]
        %v587 = vld [vmem:[#allocation7 + $0xc] sm:$0xf]
        %v588 = vld [vmem:[#allocation7 + $0x10] sm:$0xf]
        %v589 = vld [vmem:[#allocation7 + $0x14] sm:$0xf]
        %v590 = vld [vmem:[#allocation7 + $0x18] sm:$0xf]
        %v591 = vld [vmem:[#allocation7 + $0x1c] sm:$0xf]
        %v592 = vld [vmem:[#allocation7 + $0x20] sm:$0xf]
        %v593 = vld [vmem:[#allocation7 + $0x24] sm:$0xf]
        %v594 = vld [vmem:[#allocation7 + $0x28] sm:$0xf]
        %v595 = vld [vmem:[#allocation7 + $0x2c] sm:$0xf]
        %v596 = vld [vmem:[#allocation7 + $0x30] sm:$0xf]
        %v597 = vld [vmem:[#allocation7 + $0x34] sm:$0xf]
        %v598 = vld [vmem:[#allocation7 + $0x38] sm:$0xf]
        %v599 = vld [vmem:[#allocation7 + $0x3c] sm:$0xf]
        %v600 = vld [vmem:[#allocation7 + $0x40] sm:$0xf]
        %v601 = vld [vmem:[#allocation7 + $0x44] sm:$0xf]
        %v602 = vld [vmem:[#allocation7 + $0x48] sm:$0xf]
        %v603 = vld [vmem:[#allocation7 + $0x4c] sm:$0xf]
        %v604 = vld [vmem:[#allocation7 + $0x50] sm:$0xf]
        %v605 = vld [vmem:[#allocation7 + $0x54] sm:$0xf]
        %v606 = vld [vmem:[#allocation7 + $0x58] sm:$0xf]
        %v607 = vld [vmem:[#allocation7 + $0x5c] sm:$0xf]
        %v608 = vld [vmem:[#allocation7 + $0x60] sm:$0xf]
        %v609 = vld [vmem:[#allocation7 + $0x64] sm:$0xf]
        %v610 = vld [vmem:[#allocation7 + $0x68] sm:$0xf]
        %v611 = vld [vmem:[#allocation7 + $0x6c] sm:$0xf]
        %v612 = vld [vmem:[#allocation7 + $0x70] sm:$0xf]
        %v613 = vld [vmem:[#allocation7 + $0x74] sm:$0xf]
        %v614 = vld [vmem:[#allocation7 + $0x78] sm:$0xf]
        %v615 = vld [vmem:[#allocation7 + $0x7c] sm:$0xf]
        %v616 = vld [vmem:[#allocation7 + $0x80] sm:$0xf]
        %v617 = vld [vmem:[#allocation7 + $0x84] sm:$0xf]
        %v618 = vld [vmem:[#allocation7 + $0x88] sm:$0xf]
        %v619 = vld [vmem:[#allocation7 + $0x8c] sm:$0xf]
        %v620 = vld [vmem:[#allocation7 + $0x90] sm:$0xf]
        %v621 = vld [vmem:[#allocation7 + $0x94] sm:$0xf]
        %v622 = vld [vmem:[#allocation7 + $0x98] sm:$0xf]
        %v623 = vld [vmem:[#allocation7 + $0x9c] sm:$0xf]
        %v624 = vld [vmem:[#allocation7 + $0xa0] sm:$0xf]
        %v625 = vld [vmem:[#allocation7 + $0xa4] sm:$0xf]
        %v626 = vld [vmem:[#allocation7 + $0xa8] sm:$0xf]
        %v627 = vld [vmem:[#allocation7 + $0xac] sm:$0xf]
        %v628 = vld [vmem:[#allocation7 + $0xb0] sm:$0xf]
        %v629 = vld [vmem:[#allocation7 + $0xb4] sm:$0xf]
        %v630 = vld [vmem:[#allocation7 + $0xb8] sm:$0xf]
        %v631 = vld [vmem:[#allocation7 + $0xbc] sm:$0xf]
        %v632 = vld [vmem:[#allocation7 + $0xc0] sm:$0xf]
        %v633 = vld [vmem:[#allocation7 + $0xc4] sm:$0xf]
        %v634 = vld [vmem:[#allocation7 + $0xc8] sm:$0xf]
        %v635 = vld [vmem:[#allocation7 + $0xcc] sm:$0xf]
        %v636 = vld [vmem:[#allocation7 + $0xd0] sm:$0xf]
        %v637 = vld [vmem:[#allocation7 + $0xd4] sm:$0xf]
        %v638 = vld [vmem:[#allocation7 + $0xd8] sm:$0xf]
        %v639 = vld [vmem:[#allocation7 + $0xdc] sm:$0xf]
        %v640 = vld [vmem:[#allocation7 + $0xe0] sm:$0xf]
        %v641 = vld [vmem:[#allocation7 + $0xe4] sm:$0xf]
        %v642 = vld [vmem:[#allocation7 + $0xe8] sm:$0xf]
        %v643 = vld [vmem:[#allocation7 + $0xec] sm:$0xf]
        %v644 = vld [vmem:[#allocation7 + $0xf0] sm:$0xf]
        %v645 = vld [vmem:[#allocation7 + $0xf4] sm:$0xf]
        %v646 = vld [vmem:[#allocation7 + $0xf8] sm:$0xf]
        %v647 = vld [vmem:[#allocation7 + $0xfc] sm:$0xf]
        %v712 = vunpack.c.l.b16 %v584
        %v713 = vunpack.c.l.b16 %v585
        %v714 = vunpack.c.l.b16 %v586
        %v715 = vunpack.c.l.b16 %v587
        %v716 = vunpack.c.l.b16 %v588
        %v717 = vunpack.c.l.b16 %v589
        %v718 = vunpack.c.l.b16 %v590
        %v719 = vunpack.c.l.b16 %v591
        %v720 = vunpack.c.l.b16 %v592
        %v721 = vunpack.c.l.b16 %v593
        %v722 = vunpack.c.l.b16 %v594
        %v723 = vunpack.c.l.b16 %v595
        %v724 = vunpack.c.l.b16 %v596
        %v725 = vunpack.c.l.b16 %v597
        %v726 = vunpack.c.l.b16 %v598
        %v727 = vunpack.c.l.b16 %v599
        %v728 = vunpack.c.l.b16 %v600
        %v729 = vunpack.c.l.b16 %v601
        %v730 = vunpack.c.l.b16 %v602
        %v731 = vunpack.c.l.b16 %v603
        %v732 = vunpack.c.l.b16 %v604
        %v733 = vunpack.c.l.b16 %v605
        %v734 = vunpack.c.l.b16 %v606
        %v735 = vunpack.c.l.b16 %v607
        %v736 = vunpack.c.l.b16 %v608
        %v737 = vunpack.c.l.b16 %v609
        %v738 = vunpack.c.l.b16 %v610
        %v739 = vunpack.c.l.b16 %v611
        %v740 = vunpack.c.l.b16 %v612
        %v741 = vunpack.c.l.b16 %v613
        %v742 = vunpack.c.l.b16 %v614
        %v743 = vunpack.c.l.b16 %v615
        %v744 = vunpack.c.l.b16 %v616
        %v745 = vunpack.c.l.b16 %v617
        %v746 = vunpack.c.l.b16 %v618
        %v747 = vunpack.c.l.b16 %v619
        %v748 = vunpack.c.l.b16 %v620
        %v749 = vunpack.c.l.b16 %v621
        %v750 = vunpack.c.l.b16 %v622
        %v751 = vunpack.c.l.b16 %v623
        %v752 = vunpack.c.l.b16 %v624
        %v753 = vunpack.c.l.b16 %v625
        %v754 = vunpack.c.l.b16 %v626
        %v755 = vunpack.c.l.b16 %v627
        %v756 = vunpack.c.l.b16 %v628
        %v757 = vunpack.c.l.b16 %v629
        %v758 = vunpack.c.l.b16 %v630
        %v759 = vunpack.c.l.b16 %v631
        %v760 = vunpack.c.l.b16 %v632
        %v761 = vunpack.c.l.b16 %v633
        %v762 = vunpack.c.l.b16 %v634
        %v763 = vunpack.c.l.b16 %v635
        %v764 = vunpack.c.l.b16 %v636
        %v765 = vunpack.c.l.b16 %v637
        %v766 = vunpack.c.l.b16 %v638
        %v767 = vunpack.c.l.b16 %v639
        %v768 = vunpack.c.l.b16 %v640
        %v769 = vunpack.c.l.b16 %v641
        %v770 = vunpack.c.l.b16 %v642
        %v771 = vunpack.c.l.b16 %v643
        %v772 = vunpack.c.l.b16 %v644
        %v773 = vunpack.c.l.b16 %v645
        %v774 = vunpack.c.l.b16 %v646
        %v775 = vunpack.c.l.b16 %v647
        %v776 = vpack.c.b16 %v713, %v712
        %v777 = vpack.c.b16 %v715, %v714
        %v778 = vpack.c.b16 %v717, %v716
        %v779 = vpack.c.b16 %v719, %v718
        %v780 = vpack.c.b16 %v721, %v720
        %v781 = vpack.c.b16 %v723, %v722
        %v782 = vpack.c.b16 %v725, %v724
        %v783 = vpack.c.b16 %v727, %v726
        %v784 = vpack.c.b16 %v729, %v728
        %v785 = vpack.c.b16 %v731, %v730
        %v786 = vpack.c.b16 %v733, %v732
        %v787 = vpack.c.b16 %v735, %v734
        %v788 = vpack.c.b16 %v737, %v736
        %v789 = vpack.c.b16 %v739, %v738
        %v790 = vpack.c.b16 %v741, %v740
        %v791 = vpack.c.b16 %v743, %v742
        %v792 = vpack.c.b16 %v745, %v744
        %v793 = vpack.c.b16 %v747, %v746
        %v794 = vpack.c.b16 %v749, %v748
        %v795 = vpack.c.b16 %v751, %v750
        %v796 = vpack.c.b16 %v753, %v752
        %v797 = vpack.c.b16 %v755, %v754
        %v798 = vpack.c.b16 %v757, %v756
        %v799 = vpack.c.b16 %v759, %v758
        %v800 = vpack.c.b16 %v761, %v760
        %v801 = vpack.c.b16 %v763, %v762
        %v802 = vpack.c.b16 %v765, %v764
        %v803 = vpack.c.b16 %v767, %v766
        %v804 = vpack.c.b16 %v769, %v768
        %v805 = vpack.c.b16 %v771, %v770
        %v806 = vpack.c.b16 %v773, %v772
        %v807 = vpack.c.b16 %v775, %v774
        %840 = vmatprep.subr.bf16.mxu0 0
        %841 = vmatpush1.bf16.msra.mxu0 %v776
        %842 = vmatprep.subr.bf16.mxu0 0
        %843 = vmatpush1.bf16.msra.mxu0 %v777
        %844 = vmatprep.subr.bf16.mxu0 0
        %845 = vmatpush1.bf16.msra.mxu0 %v778
        %846 = vmatprep.subr.bf16.mxu0 0
        %847 = vmatpush1.bf16.msra.mxu0 %v779
        %848 = vmatprep.subr.bf16.mxu0 0
        %849 = vmatpush1.bf16.msra.mxu0 %v780
        %850 = vmatprep.subr.bf16.mxu0 0
        %851 = vmatpush1.bf16.msra.mxu0 %v781
        %852 = vmatprep.subr.bf16.mxu0 0
        %853 = vmatpush1.bf16.msra.mxu0 %v782
        %854 = vmatprep.subr.bf16.mxu0 0
        %855 = vmatpush1.bf16.msra.mxu0 %v783
        %856 = vmatprep.subr.bf16.mxu0 0
        %857 = vmatpush1.bf16.msra.mxu0 %v784
        %858 = vmatprep.subr.bf16.mxu0 0
        %859 = vmatpush1.bf16.msra.mxu0 %v785
        %860 = vmatprep.subr.bf16.mxu0 0
        %861 = vmatpush1.bf16.msra.mxu0 %v786
        %862 = vmatprep.subr.bf16.mxu0 0
        %863 = vmatpush1.bf16.msra.mxu0 %v787
        %864 = vmatprep.subr.bf16.mxu0 0
        %865 = vmatpush1.bf16.msra.mxu0 %v788
        %866 = vmatprep.subr.bf16.mxu0 0
        %867 = vmatpush1.bf16.msra.mxu0 %v789
        %868 = vmatprep.subr.bf16.mxu0 0
        %869 = vmatpush1.bf16.msra.mxu0 %v790
        %870 = vmatprep.subr.bf16.mxu0 0
        %871 = vmatpush1.bf16.msra.mxu0 %v791
        %872 = vmatprep.mubr.bf16.mxu0 %v553
        %873 = vmatmul.mubr.bf16.gmra.mrb[0].mxu0 %v552
        %v874 = vpop.f32.mrb[0].mxu0
        %v875 = vadd.f32 0.0, %v874
        %v876 = vpop.f32.mrb[0].mxu0
        %v877 = vpop.f32.mrb[0].mxu0
        %v878 = vadd.f32 0.0, %v877
        %v879 = vpop.f32.mrb[0].mxu0
        %880 = vmatprep.mubr.bf16.mxu0 %v557
        %881 = vmatmul.mubr.bf16.gmra.mrb[0].mxu0 %v556
        %v882 = vpop.f32.mrb[0].mxu0
        %v883 = vadd.f32 0.0, %v882
        %v884 = vpop.f32.mrb[0].mxu0
        %v885 = vpop.f32.mrb[0].mxu0
        %v886 = vadd.f32 0.0, %v885
        %v887 = vpop.f32.mrb[0].mxu0
        %888 = vmatprep.mubr.bf16.mxu0 %v561
        %889 = vmatmul.mubr.bf16.gmra.mrb[0].mxu0 %v560
        %v890 = vpop.f32.mrb[0].mxu0
        %v891 = vadd.f32 0.0, %v890
        %v892 = vpop.f32.mrb[0].mxu0
        %v893 = vpop.f32.mrb[0].mxu0
        %v894 = vadd.f32 0.0, %v893
        %v895 = vpop.f32.mrb[0].mxu0
        %896 = vmatprep.mubr.bf16.mxu0 %v565
        %897 = vmatmul.mubr.bf16.gmra.mrb[0].mxu0 %v564
        %v898 = vpop.f32.mrb[0].mxu0
        %v899 = vadd.f32 0.0, %v898
        %v900 = vpop.f32.mrb[0].mxu0
        %v901 = vpop.f32.mrb[0].mxu0
        %v902 = vadd.f32 0.0, %v901
        %v903 = vpop.f32.mrb[0].mxu0
        %904 = vmatprep.mubr.bf16.mxu0 %v569
        %905 = vmatmul.mubr.bf16.gmra.mrb[0].mxu0 %v568
        %v906 = vpop.f32.mrb[0].mxu0
        %v907 = vadd.f32 0.0, %v906
        %v908 = vpop.f32.mrb[0].mxu0
        %v909 = vpop.f32.mrb[0].mxu0
        %v910 = vadd.f32 0.0, %v909
        %v911 = vpop.f32.mrb[0].mxu0
        %912 = vmatprep.mubr.bf16.mxu0 %v573
        %913 = vmatmul.mubr.bf16.gmra.mrb[0].mxu0 %v572
        %v914 = vpop.f32.mrb[0].mxu0
        %v915 = vadd.f32 0.0, %v914
        %v916 = vpop.f32.mrb[0].mxu0
        %v917 = vpop.f32.mrb[0].mxu0
        %v918 = vadd.f32 0.0, %v917
        %v919 = vpop.f32.mrb[0].mxu0
        %920 = vmatprep.mubr.bf16.mxu0 %v577
        %921 = vmatmul.mubr.bf16.gmra.mrb[0].mxu0 %v576
        %v922 = vpop.f32.mrb[0].mxu0
        %v923 = vadd.f32 0.0, %v922
        %v924 = vpop.f32.mrb[0].mxu0
        %v925 = vpop.f32.mrb[0].mxu0
        %v926 = vadd.f32 0.0, %v925
        %v927 = vpop.f32.mrb[0].mxu0
        %928 = vmatprep.mubr.bf16.mxu0 %v581
        %929 = vmatmul.mubr.bf16.gmra.mrb[0].mxu0 %v580
        %v930 = vpop.f32.mrb[0].mxu0
        %v931 = vadd.f32 0.0, %v930
        %v932 = vpop.f32.mrb[0].mxu0
        %v933 = vpop.f32.mrb[0].mxu0
        %v934 = vadd.f32 0.0, %v933
        %v935 = vpop.f32.mrb[0].mxu0
        %936 = vdwg.mxu0
        %937 = vmatprep.subr.bf16.mxu0 0
        %938 = vmatpush1.bf16.msra.mxu0 %v792
        %939 = vmatprep.subr.bf16.mxu0 0
        %940 = vmatpush1.bf16.msra.mxu0 %v793
        %941 = vmatprep.subr.bf16.mxu0 0
        %942 = vmatpush1.bf16.msra.mxu0 %v794
        %943 = vmatprep.subr.bf16.mxu0 0
        %944 = vmatpush1.bf16.msra.mxu0 %v795
        %945 = vmatprep.subr.bf16.mxu0 0
        %946 = vmatpush1.bf16.msra.mxu0 %v796
        %947 = vmatprep.subr.bf16.mxu0 0
        %948 = vmatpush1.bf16.msra.mxu0 %v797
        %949 = vmatprep.subr.bf16.mxu0 0
        %950 = vmatpush1.bf16.msra.mxu0 %v798
        %951 = vmatprep.subr.bf16.mxu0 0
        %952 = vmatpush1.bf16.msra.mxu0 %v799
        %953 = vmatprep.subr.bf16.mxu0 0
        %954 = vmatpush1.bf16.msra.mxu0 %v800
        %955 = vmatprep.subr.bf16.mxu0 0
        %956 = vmatpush1.bf16.msra.mxu0 %v801
        %957 = vmatprep.subr.bf16.mxu0 0
        %958 = vmatpush1.bf16.msra.mxu0 %v802
        %959 = vmatprep.subr.bf16.mxu0 0
        %960 = vmatpush1.bf16.msra.mxu0 %v803
        %961 = vmatprep.subr.bf16.mxu0 0
        %962 = vmatpush1.bf16.msra.mxu0 %v804
        %963 = vmatprep.subr.bf16.mxu0 0
        %964 = vmatpush1.bf16.msra.mxu0 %v805
        %965 = vmatprep.subr.bf16.mxu0 0
        %966 = vmatpush1.bf16.msra.mxu0 %v806
        %967 = vmatprep.subr.bf16.mxu0 0
        %968 = vmatpush1.bf16.msra.mxu0 %v807
        %969 = vmatprep.mubr.bf16.mxu0 %v555
        %970 = vmatmul.mubr.bf16.gmra.mrb[0].mxu0 %v554
        %v971 = vpop.f32.mrb[0].mxu0
        %v972 = vadd.f32 %v875, %v971
        %v973 = vpop.f32.mrb[0].mxu0
        %v974 = vpop.f32.mrb[0].mxu0
        %v975 = vadd.f32 %v878, %v974
        %v976 = vpop.f32.mrb[0].mxu0
        %977 = vmatprep.mubr.bf16.mxu0 %v559
        %978 = vmatmul.mubr.bf16.gmra.mrb[0].mxu0 %v558
        %v979 = vpop.f32.mrb[0].mxu0
        %v980 = vadd.f32 %v883, %v979
        %v981 = vpop.f32.mrb[0].mxu0
        %v982 = vpop.f32.mrb[0].mxu0
        %v983 = vadd.f32 %v886, %v982
        %v984 = vpop.f32.mrb[0].mxu0
        %985 = vmatprep.mubr.bf16.mxu0 %v563
        %986 = vmatmul.mubr.bf16.gmra.mrb[0].mxu0 %v562
        %v987 = vpop.f32.mrb[0].mxu0
        %v988 = vadd.f32 %v891, %v987
        %v989 = vpop.f32.mrb[0].mxu0
        %v990 = vpop.f32.mrb[0].mxu0
        %v991 = vadd.f32 %v894, %v990
        %v992 = vpop.f32.mrb[0].mxu0
        %993 = vmatprep.mubr.bf16.mxu0 %v567
        %994 = vmatmul.mubr.bf16.gmra.mrb[0].mxu0 %v566
        %v995 = vpop.f32.mrb[0].mxu0
        %v996 = vadd.f32 %v899, %v995
        %v997 = vpop.f32.mrb[0].mxu0
        %v998 = vpop.f32.mrb[0].mxu0
        %v999 = vadd.f32 %v902, %v998
        %v1000 = vpop.f32.mrb[0].mxu0
        %1001 = vmatprep.mubr.bf16.mxu0 %v571
        %1002 = vmatmul.mubr.bf16.gmra.mrb[0].mxu0 %v570
        %v1003 = vpop.f32.mrb[0].mxu0
        %v1004 = vadd.f32 %v907, %v1003
        %v1005 = vpop.f32.mrb[0].mxu0
        %v1006 = vpop.f32.mrb[0].mxu0
        %v1007 = vadd.f32 %v910, %v1006
        %v1008 = vpop.f32.mrb[0].mxu0
        %1009 = vmatprep.mubr.bf16.mxu0 %v575
        %1010 = vmatmul.mubr.bf16.gmra.mrb[0].mxu0 %v574
        %v1011 = vpop.f32.mrb[0].mxu0
        %v1012 = vadd.f32 %v915, %v1011
        %v1013 = vpop.f32.mrb[0].mxu0
        %v1014 = vpop.f32.mrb[0].mxu0
        %v1015 = vadd.f32 %v918, %v1014
        %v1016 = vpop.f32.mrb[0].mxu0
        %1017 = vmatprep.mubr.bf16.mxu0 %v579
        %1018 = vmatmul.mubr.bf16.gmra.mrb[0].mxu0 %v578
        %v1019 = vpop.f32.mrb[0].mxu0
        %v1020 = vadd.f32 %v923, %v1019
        %v1021 = vpop.f32.mrb[0].mxu0
        %v1022 = vpop.f32.mrb[0].mxu0
        %v1023 = vadd.f32 %v926, %v1022
        %v1024 = vpop.f32.mrb[0].mxu0
        %1025 = vmatprep.mubr.bf16.mxu0 %v583
        %1026 = vmatmul.mubr.bf16.gmra.mrb[0].mxu0 %v582
        %v1027 = vpop.f32.mrb[0].mxu0
        %v1028 = vadd.f32 %v931, %v1027
        %v1029 = vpop.f32.mrb[0].mxu0
        %v1030 = vpop.f32.mrb[0].mxu0
        %v1031 = vadd.f32 %v934, %v1030
        %v1032 = vpop.f32.mrb[0].mxu0
        %1033 = vdwg.mxu0
        %v1034 = vmax.f32 %v972, 0.0
        %v1035 = vmax.f32 %v975, 0.0
        %v1036 = vmax.f32 %v980, 0.0
        %v1037 = vmax.f32 %v983, 0.0
        %v1038 = vmax.f32 %v988, 0.0
        %v1039 = vmax.f32 %v991, 0.0
        %v1040 = vmax.f32 %v996, 0.0
        %v1041 = vmax.f32 %v999, 0.0
        %v1042 = vmax.f32 %v1004, 0.0
        %v1043 = vmax.f32 %v1007, 0.0
        %v1044 = vmax.f32 %v1012, 0.0
        %v1045 = vmax.f32 %v1015, 0.0
        %v1046 = vmax.f32 %v1020, 0.0
        %v1047 = vmax.f32 %v1023, 0.0
        %v1048 = vmax.f32 %v1028, 0.0
        %v1049 = vmax.f32 %v1031, 0.0
        %v1050 = vpack.c.bf16 %v1035, %v1034
        %v1051 = vpack.c.bf16 %v1037, %v1036
        %v1052 = vpack.c.bf16 %v1039, %v1038
        %v1053 = vpack.c.bf16 %v1041, %v1040
        %v1054 = vpack.c.bf16 %v1043, %v1042
        %v1055 = vpack.c.bf16 %v1045, %v1044
        %v1056 = vpack.c.bf16 %v1047, %v1046
        %v1057 = vpack.c.bf16 %v1049, %v1048
        %1058 = vst [vmem:[#allocation3] sm:$0xff] 0
        %1059 = vst [vmem:[#allocation3 + $0x8] sm:$0xff] 0
        %1060 = vst [vmem:[#allocation3 + $0x10] sm:$0xff] 0
        %1061 = vst [vmem:[#allocation3 + $0x18] sm:$0xff] 0
        %1062 = vst [vmem:[#allocation3 + $0x20] sm:$0xff] 0
        %1063 = vst [vmem:[#allocation3 + $0x28] sm:$0xff] 0
        %1064 = vst [vmem:[#allocation3 + $0x30] sm:$0xff] 0
        %1065 = vst [vmem:[#allocation3 + $0x38] sm:$0xff] 0
        %1066 = vst [vmem:[#allocation3 + $0x40] sm:$0xff] 0
        %1067 = vst [vmem:[#allocation3 + $0x48] sm:$0xff] 0
        %1068 = vst [vmem:[#allocation3 + $0x50] sm:$0xff] 0
        %1069 = vst [vmem:[#allocation3 + $0x58] sm:$0xff] 0
        %1070 = vst [vmem:[#allocation3 + $0x60] sm:$0xff] 0
        %1071 = vst [vmem:[#allocation3 + $0x68] sm:$0xff] 0
        %1072 = vst [vmem:[#allocation3 + $0x70] sm:$0xff] 0
        %1073 = vst [vmem:[#allocation3 + $0x78] sm:$0xff] 0
        %1074 = vst [vmem:[#allocation3 + $0x80] sm:$0xff] 0
        %1075 = vst [vmem:[#allocation3 + $0x88] sm:$0xff] 0
        %1076 = vst [vmem:[#allocation3 + $0x90] sm:$0xff] 0
        %1077 = vst [vmem:[#allocation3 + $0x98] sm:$0xff] 0
        %1078 = vst [vmem:[#allocation3 + $0xa0] sm:$0xff] 0
        %1079 = vst [vmem:[#allocation3 + $0xa8] sm:$0xff] 0
        %1080 = vst [vmem:[#allocation3 + $0xb0] sm:$0xff] 0
        %1081 = vst [vmem:[#allocation3 + $0xb8] sm:$0xff] 0
        %1082 = vst [vmem:[#allocation3 + $0xc0] sm:$0xff] 0
        %1083 = vst [vmem:[#allocation3 + $0xc8] sm:$0xff] 0
        %1084 = vst [vmem:[#allocation3 + $0xd0] sm:$0xff] 0
        %1085 = vst [vmem:[#allocation3 + $0xd8] sm:$0xff] 0
        %1086 = vst [vmem:[#allocation3 + $0xe0] sm:$0xff] 0
        %1087 = vst [vmem:[#allocation3 + $0xe8] sm:$0xff] 0
        %1088 = vst [vmem:[#allocation3 + $0xf0] sm:$0xff] 0
        %1089 = vst [vmem:[#allocation3 + $0xf8] sm:$0xff] 0
        %1090 = vst [vmem:[#allocation3 + $0x100] sm:$0xff] 0
        %1091 = vst [vmem:[#allocation3 + $0x108] sm:$0xff] 0
        %1092 = vst [vmem:[#allocation3 + $0x110] sm:$0xff] 0
        %1093 = vst [vmem:[#allocation3 + $0x118] sm:$0xff] 0
        %1094 = vst [vmem:[#allocation3 + $0x120] sm:$0xff] 0
        %1095 = vst [vmem:[#allocation3 + $0x128] sm:$0xff] 0
        %1096 = vst [vmem:[#allocation3 + $0x130] sm:$0xff] 0
        %1097 = vst [vmem:[#allocation3 + $0x138] sm:$0xff] 0
        %1098 = vst [vmem:[#allocation3 + $0x140] sm:$0xff] 0
        %1099 = vst [vmem:[#allocation3 + $0x148] sm:$0xff] 0
        %1100 = vst [vmem:[#allocation3 + $0x150] sm:$0xff] 0
        %1101 = vst [vmem:[#allocation3 + $0x158] sm:$0xff] 0
        %1102 = vst [vmem:[#allocation3 + $0x160] sm:$0xff] 0
        %1103 = vst [vmem:[#allocation3 + $0x168] sm:$0xff] 0
        %1104 = vst [vmem:[#allocation3 + $0x170] sm:$0xff] 0
        %1105 = vst [vmem:[#allocation3 + $0x178] sm:$0xff] 0
        %1106 = vst [vmem:[#allocation3 + $0x180] sm:$0xff] 0
        %1107 = vst [vmem:[#allocation3 + $0x188] sm:$0xff] 0
        %1108 = vst [vmem:[#allocation3 + $0x190] sm:$0xff] 0
        %1109 = vst [vmem:[#allocation3 + $0x198] sm:$0xff] 0
        %1110 = vst [vmem:[#allocation3 + $0x1a0] sm:$0xff] 0
        %1111 = vst [vmem:[#allocation3 + $0x1a8] sm:$0xff] 0
        %1112 = vst [vmem:[#allocation3 + $0x1b0] sm:$0xff] 0
        %1113 = vst [vmem:[#allocation3 + $0x1b8] sm:$0xff] 0
        %1114 = vst [vmem:[#allocation3 + $0x1c0] sm:$0xff] 0
        %1115 = vst [vmem:[#allocation3 + $0x1c8] sm:$0xff] 0
        %1116 = vst [vmem:[#allocation3 + $0x1d0] sm:$0xff] 0
        %1117 = vst [vmem:[#allocation3 + $0x1d8] sm:$0xff] 0
        %1118 = vst [vmem:[#allocation3 + $0x1e0] sm:$0xff] 0
        %1119 = vst [vmem:[#allocation3 + $0x1e8] sm:$0xff] 0
        %1120 = vst [vmem:[#allocation3 + $0x1f0] sm:$0xff] 0
        %1121 = vst [vmem:[#allocation3 + $0x1f8] sm:$0xff] 0
        %1122 = vst [vmem:[#allocation3 + $0x20] sm:$0xff] %v1051
        %1123 = vst [vmem:[#allocation3 + $0x60] sm:$0xff] %v1052
        %1124 = vst [vmem:[#allocation3 + $0xa0] sm:$0xff] %v1053
        %1125 = vst [vmem:[#allocation3 + $0xe0] sm:$0xff] %v1054
        %1126 = vst [vmem:[#allocation3 + $0x120] sm:$0xff] %v1055
        %1127 = vst [vmem:[#allocation3 + $0x160] sm:$0xff] %v1056
        %1128 = vst [vmem:[#allocation3 + $0x1a0] sm:$0xff] %v1057
        %1129 = vst [vmem:[#allocation3 + $0x8] sm:$0xff] %v1050
        %1130 = vst [vmem:[#allocation3 + $0x48] sm:$0xff] %v1051
        %1131 = vst [vmem:[#allocation3 + $0x88] sm:$0xff] %v1052
        %1132 = vst [vmem:[#allocation3 + $0xc8] sm:$0xff] %v1053
        %1133 = vst [vmem:[#allocation3 + $0x108] sm:$0xff] %v1054
        %1134 = vst [vmem:[#allocation3 + $0x148] sm:$0xff] %v1055
        %1135 = vst [vmem:[#allocation3 + $0x188] sm:$0xff] %v1056
        %1136 = vst [vmem:[#allocation3 + $0x1c8] sm:$0xff] %v1057
        %1137 = vst [vmem:[#allocation3 + $0x30] sm:$0xff] %v1050
        %1138 = vst [vmem:[#allocation3 + $0x70] sm:$0xff] %v1051
        %1139 = vst [vmem:[#allocation3 + $0xb0] sm:$0xff] %v1052
        %1140 = vst [vmem:[#allocation3 + $0xf0] sm:$0xff] %v1053
        %1141 = vst [vmem:[#allocation3 + $0x130] sm:$0xff] %v1054
        %1142 = vst [vmem:[#allocation3 + $0x170] sm:$0xff] %v1055
        %1143 = vst [vmem:[#allocation3 + $0x1b0] sm:$0xff] %v1056
        %1144 = vst [vmem:[#allocation3 + $0x1f0] sm:$0xff] %v1057
        %1145 = vst [vmem:[#allocation3 + $0x58] sm:$0xff] %v1050
        %1146 = vst [vmem:[#allocation3 + $0x98] sm:$0xff] %v1051
        %1147 = vst [vmem:[#allocation3 + $0xd8] sm:$0xff] %v1052
        %1148 = vst [vmem:[#allocation3 + $0x118] sm:$0xff] %v1053
        %1149 = vst [vmem:[#allocation3 + $0x158] sm:$0xff] %v1054
        %1150 = vst [vmem:[#allocation3 + $0x198] sm:$0xff] %v1055
        %1151 = vst [vmem:[#allocation3 + $0x1d8] sm:$0xff] %v1056
        %v1152 = vld [vmem:[#allocation3] sm:$0xff]
        %v1153 = vld [vmem:[#allocation3 + $0x8] sm:$0xff]
        %v1154 = vld [vmem:[#allocation3 + $0x10] sm:$0xff]
        %v1155 = vld [vmem:[#allocation3 + $0x18] sm:$0xff]
        %v1156 = vld [vmem:[#allocation3 + $0x20] sm:$0xff]
        %v1157 = vld [vmem:[#allocation3 + $0x28] sm:$0xff]
        %v1158 = vld [vmem:[#allocation3 + $0x30] sm:$0xff]
        %v1159 = vld [vmem:[#allocation3 + $0x38] sm:$0xff]
        %v1160 = vld [vmem:[#allocation3 + $0x40] sm:$0xff]
        %v1161 = vld [vmem:[#allocation3 + $0x48] sm:$0xff]
        %v1162 = vld [vmem:[#allocation3 + $0x50] sm:$0xff]
        %v1163 = vld [vmem:[#allocation3 + $0x58] sm:$0xff]
        %v1164 = vld [vmem:[#allocation3 + $0x60] sm:$0xff]
        %v1165 = vld [vmem:[#allocation3 + $0x68] sm:$0xff]
        %v1166 = vld [vmem:[#allocation3 + $0x70] sm:$0xff]
        %v1167 = vld [vmem:[#allocation3 + $0x78] sm:$0xff]
        %v1168 = vld [vmem:[#allocation3 + $0x80] sm:$0xff]
        %v1169 = vld [vmem:[#allocation3 + $0x88] sm:$0xff]
        %v1170 = vld [vmem:[#allocation3 + $0x90] sm:$0xff]
        %v1171 = vld [vmem:[#allocation3 + $0x98] sm:$0xff]
        %v1172 = vld [vmem:[#allocation3 + $0xa0] sm:$0xff]
        %v1173 = vld [vmem:[#allocation3 + $0xa8] sm:$0xff]
        %v1174 = vld [vmem:[#allocation3 + $0xb0] sm:$0xff]
        %v1175 = vld [vmem:[#allocation3 + $0xb8] sm:$0xff]
        %v1176 = vld [vmem:[#allocation3 + $0xc0] sm:$0xff]
        %v1177 = vld [vmem:[#allocation3 + $0xc8] sm:$0xff]
        %v1178 = vld [vmem:[#allocation3 + $0xd0] sm:$0xff]
        %v1179 = vld [vmem:[#allocation3 + $0xd8] sm:$0xff]
        %v1180 = vld [vmem:[#allocation3 + $0xe0] sm:$0xff]
        %v1181 = vld [vmem:[#allocation3 + $0xe8] sm:$0xff]
        %v1182 = vld [vmem:[#allocation3 + $0xf0] sm:$0xff]
        %v1183 = vld [vmem:[#allocation3 + $0xf8] sm:$0xff]
        %v1184 = vld [vmem:[#allocation3 + $0x100] sm:$0xff]
        %v1185 = vld [vmem:[#allocation3 + $0x108] sm:$0xff]
        %v1186 = vld [vmem:[#allocation3 + $0x110] sm:$0xff]
        %v1187 = vld [vmem:[#allocation3 + $0x118] sm:$0xff]
        %v1188 = vld [vmem:[#allocation3 + $0x120] sm:$0xff]
        %v1189 = vld [vmem:[#allocation3 + $0x128] sm:$0xff]
        %v1190 = vld [vmem:[#allocation3 + $0x130] sm:$0xff]
        %v1191 = vld [vmem:[#allocation3 + $0x138] sm:$0xff]
        %v1192 = vld [vmem:[#allocation3 + $0x140] sm:$0xff]
        %v1193 = vld [vmem:[#allocation3 + $0x148] sm:$0xff]
        %v1194 = vld [vmem:[#allocation3 + $0x150] sm:$0xff]
        %v1195 = vld [vmem:[#allocation3 + $0x158] sm:$0xff]
        %v1196 = vld [vmem:[#allocation3 + $0x160] sm:$0xff]
        %v1197 = vld [vmem:[#allocation3 + $0x168] sm:$0xff]
        %v1198 = vld [vmem:[#allocation3 + $0x170] sm:$0xff]
        %v1199 = vld [vmem:[#allocation3 + $0x178] sm:$0xff]
        %v1200 = vld [vmem:[#allocation3 + $0x180] sm:$0xff]
        %v1201 = vld [vmem:[#allocation3 + $0x188] sm:$0xff]
        %v1202 = vld [vmem:[#allocation3 + $0x190] sm:$0xff]
        %v1203 = vld [vmem:[#allocation3 + $0x198] sm:$0xff]
        %v1204 = vld [vmem:[#allocation3 + $0x1a0] sm:$0xff]
        %v1205 = vld [vmem:[#allocation3 + $0x1a8] sm:$0xff]
        %v1206 = vld [vmem:[#allocation3 + $0x1b0] sm:$0xff]
        %v1207 = vld [vmem:[#allocation3 + $0x1b8] sm:$0xff]
        %v1208 = vld [vmem:[#allocation3 + $0x1c0] sm:$0xff]
        %v1209 = vld [vmem:[#allocation3 + $0x1c8] sm:$0xff]
        %v1210 = vld [vmem:[#allocation3 + $0x1d0] sm:$0xff]
        %v1211 = vld [vmem:[#allocation3 + $0x1d8] sm:$0xff]
        %v1212 = vld [vmem:[#allocation3 + $0x1e0] sm:$0xff]
        %v1213 = vld [vmem:[#allocation3 + $0x1e8] sm:$0xff]
        %v1214 = vld [vmem:[#allocation3 + $0x1f0] sm:$0xff]
        %v1215 = vld [vmem:[#allocation3 + $0x1f8] sm:$0xff]
        %v1216 = vld [vmem:[#allocation9] sm:$0xf]
        %v1217 = vld [vmem:[#allocation9 + $0x4] sm:$0xf]
        %v1218 = vld [vmem:[#allocation9 + $0x8] sm:$0xf]
        %v1219 = vld [vmem:[#allocation9 + $0xc] sm:$0xf]
        %v1220 = vld [vmem:[#allocation9 + $0x10] sm:$0xf]
        %v1221 = vld [vmem:[#allocation9 + $0x14] sm:$0xf]
        %v1222 = vld [vmem:[#allocation9 + $0x18] sm:$0xf]
        %v1223 = vld [vmem:[#allocation9 + $0x1c] sm:$0xf]
        %v1224 = vld [vmem:[#allocation9 + $0x20] sm:$0xf]
        %v1225 = vld [vmem:[#allocation9 + $0x24] sm:$0xf]
        %v1226 = vld [vmem:[#allocation9 + $0x28] sm:$0xf]
        %v1227 = vld [vmem:[#allocation9 + $0x2c] sm:$0xf]
        %v1228 = vld [vmem:[#allocation9 + $0x30] sm:$0xf]
        %v1229 = vld [vmem:[#allocation9 + $0x34] sm:$0xf]
        %v1230 = vld [vmem:[#allocation9 + $0x38] sm:$0xf]
        %v1231 = vld [vmem:[#allocation9 + $0x3c] sm:$0xf]
        %v1232 = vld [vmem:[#allocation9 + $0x40] sm:$0xf]
        %v1233 = vld [vmem:[#allocation9 + $0x44] sm:$0xf]
        %v1234 = vld [vmem:[#allocation9 + $0x48] sm:$0xf]
        %v1235 = vld [vmem:[#allocation9 + $0x4c] sm:$0xf]
        %v1236 = vld [vmem:[#allocation9 + $0x50] sm:$0xf]
        %v1237 = vld [vmem:[#allocation9 + $0x54] sm:$0xf]
        %v1238 = vld [vmem:[#allocation9 + $0x58] sm:$0xf]
        %v1239 = vld [vmem:[#allocation9 + $0x5c] sm:$0xf]
        %v1240 = vld [vmem:[#allocation9 + $0x60] sm:$0xf]
        %v1241 = vld [vmem:[#allocation9 + $0x64] sm:$0xf]
        %v1242 = vld [vmem:[#allocation9 + $0x68] sm:$0xf]
        %v1243 = vld [vmem:[#allocation9 + $0x6c] sm:$0xf]
        %v1244 = vld [vmem:[#allocation9 + $0x70] sm:$0xf]
        %v1245 = vld [vmem:[#allocation9 + $0x74] sm:$0xf]
        %v1246 = vld [vmem:[#allocation9 + $0x78] sm:$0xf]
        %v1247 = vld [vmem:[#allocation9 + $0x7c] sm:$0xf]
        %v1248 = vld [vmem:[#allocation9 + $0x80] sm:$0xf]
        %v1249 = vld [vmem:[#allocation9 + $0x84] sm:$0xf]
        %v1250 = vld [vmem:[#allocation9 + $0x88] sm:$0xf]
        %v1251 = vld [vmem:[#allocation9 + $0x8c] sm:$0xf]
        %v1252 = vld [vmem:[#allocation9 + $0x90] sm:$0xf]
        %v1253 = vld [vmem:[#allocation9 + $0x94] sm:$0xf]
        %v1254 = vld [vmem:[#allocation9 + $0x98] sm:$0xf]
        %v1255 = vld [vmem:[#allocation9 + $0x9c] sm:$0xf]
        %v1256 = vld [vmem:[#allocation9 + $0xa0] sm:$0xf]
        %v1257 = vld [vmem:[#allocation9 + $0xa4] sm:$0xf]
        %v1258 = vld [vmem:[#allocation9 + $0xa8] sm:$0xf]
        %v1259 = vld [vmem:[#allocation9 + $0xac] sm:$0xf]
        %v1260 = vld [vmem:[#allocation9 + $0xb0] sm:$0xf]
        %v1261 = vld [vmem:[#allocation9 + $0xb4] sm:$0xf]
        %v1262 = vld [vmem:[#allocation9 + $0xb8] sm:$0xf]
        %v1263 = vld [vmem:[#allocation9 + $0xbc] sm:$0xf]
        %v1264 = vld [vmem:[#allocation9 + $0xc0] sm:$0xf]
        %v1265 = vld [vmem:[#allocation9 + $0xc4] sm:$0xf]
        %v1266 = vld [vmem:[#allocation9 + $0xc8] sm:$0xf]
        %v1267 = vld [vmem:[#allocation9 + $0xcc] sm:$0xf]
        %v1268 = vld [vmem:[#allocation9 + $0xd0] sm:$0xf]
        %v1269 = vld [vmem:[#allocation9 + $0xd4] sm:$0xf]
        %v1270 = vld [vmem:[#allocation9 + $0xd8] sm:$0xf]
        %v1271 = vld [vmem:[#allocation9 + $0xdc] sm:$0xf]
        %v1272 = vld [vmem:[#allocation9 + $0xe0] sm:$0xf]
        %v1273 = vld [vmem:[#allocation9 + $0xe4] sm:$0xf]
        %v1274 = vld [vmem:[#allocation9 + $0xe8] sm:$0xf]
        %v1275 = vld [vmem:[#allocation9 + $0xec] sm:$0xf]
        %v1276 = vld [vmem:[#allocation9 + $0xf0] sm:$0xf]
        %v1277 = vld [vmem:[#allocation9 + $0xf4] sm:$0xf]
        %v1278 = vld [vmem:[#allocation9 + $0xf8] sm:$0xf]
        %v1279 = vld [vmem:[#allocation9 + $0xfc] sm:$0xf]
        %v1344 = vunpack.c.l.b16 %v1216
        %v1345 = vunpack.c.l.b16 %v1217
        %v1346 = vunpack.c.l.b16 %v1218
        %v1347 = vunpack.c.l.b16 %v1219
        %v1348 = vunpack.c.l.b16 %v1220
        %v1349 = vunpack.c.l.b16 %v1221
        %v1350 = vunpack.c.l.b16 %v1222
        %v1351 = vunpack.c.l.b16 %v1223
        %v1352 = vunpack.c.l.b16 %v1224
        %v1353 = vunpack.c.l.b16 %v1225
        %v1354 = vunpack.c.l.b16 %v1226
        %v1355 = vunpack.c.l.b16 %v1227
        %v1356 = vunpack.c.l.b16 %v1228
        %v1357 = vunpack.c.l.b16 %v1229
        %v1358 = vunpack.c.l.b16 %v1230
        %v1359 = vunpack.c.l.b16 %v1231
        %v1360 = vunpack.c.l.b16 %v1232
        %v1361 = vunpack.c.l.b16 %v1233
        %v1362 = vunpack.c.l.b16 %v1234
        %v1363 = vunpack.c.l.b16 %v1235
        %v1364 = vunpack.c.l.b16 %v1236
        %v1365 = vunpack.c.l.b16 %v1237
        %v1366 = vunpack.c.l.b16 %v1238
        %v1367 = vunpack.c.l.b16 %v1239
        %v1368 = vunpack.c.l.b16 %v1240
        %v1369 = vunpack.c.l.b16 %v1241
        %v1370 = vunpack.c.l.b16 %v1242
        %v1371 = vunpack.c.l.b16 %v1243
        %v1372 = vunpack.c.l.b16 %v1244
        %v1373 = vunpack.c.l.b16 %v1245
        %v1374 = vunpack.c.l.b16 %v1246
        %v1375 = vunpack.c.l.b16 %v1247
        %v1376 = vunpack.c.l.b16 %v1248
        %v1377 = vunpack.c.l.b16 %v1249
        %v1378 = vunpack.c.l.b16 %v1250
        %v1379 = vunpack.c.l.b16 %v1251
        %v1380 = vunpack.c.l.b16 %v1252
        %v1381 = vunpack.c.l.b16 %v1253
        %v1382 = vunpack.c.l.b16 %v1254
        %v1383 = vunpack.c.l.b16 %v1255
        %v1384 = vunpack.c.l.b16 %v1256
        %v1385 = vunpack.c.l.b16 %v1257
        %v1386 = vunpack.c.l.b16 %v1258
        %v1387 = vunpack.c.l.b16 %v1259
        %v1388 = vunpack.c.l.b16 %v1260
        %v1389 = vunpack.c.l.b16 %v1261
        %v1390 = vunpack.c.l.b16 %v1262
        %v1391 = vunpack.c.l.b16 %v1263
        %v1392 = vunpack.c.l.b16 %v1264
        %v1393 = vunpack.c.l.b16 %v1265
        %v1394 = vunpack.c.l.b16 %v1266
        %v1395 = vunpack.c.l.b16 %v1267
        %v1396 = vunpack.c.l.b16 %v1268
        %v1397 = vunpack.c.l.b16 %v1269
        %v1398 = vunpack.c.l.b16 %v1270
        %v1399 = vunpack.c.l.b16 %v1271
        %v1400 = vunpack.c.l.b16 %v1272
        %v1401 = vunpack.c.l.b16 %v1273
        %v1402 = vunpack.c.l.b16 %v1274
        %v1403 = vunpack.c.l.b16 %v1275
        %v1404 = vunpack.c.l.b16 %v1276
        %v1405 = vunpack.c.l.b16 %v1277
        %v1406 = vunpack.c.l.b16 %v1278
        %v1407 = vunpack.c.l.b16 %v1279
        %v1408 = vpack.c.b16 %v1345, %v1344
        %v1409 = vpack.c.b16 %v1347, %v1346
        %v1410 = vpack.c.b16 %v1349, %v1348
        %v1411 = vpack.c.b16 %v1351, %v1350
        %v1412 = vpack.c.b16 %v1353, %v1352
        %v1413 = vpack.c.b16 %v1355, %v1354
        %v1414 = vpack.c.b16 %v1357, %v1356
        %v1415 = vpack.c.b16 %v1359, %v1358
        %v1416 = vpack.c.b16 %v1361, %v1360
        %v1417 = vpack.c.b16 %v1363, %v1362
        %v1418 = vpack.c.b16 %v1365, %v1364
        %v1419 = vpack.c.b16 %v1367, %v1366
        %v1420 = vpack.c.b16 %v1369, %v1368
        %v1421 = vpack.c.b16 %v1371, %v1370
        %v1422 = vpack.c.b16 %v1373, %v1372
        %v1423 = vpack.c.b16 %v1375, %v1374
        %v1424 = vpack.c.b16 %v1377, %v1376
        %v1425 = vpack.c.b16 %v1379, %v1378
        %v1426 = vpack.c.b16 %v1381, %v1380
        %v1427 = vpack.c.b16 %v1383, %v1382
        %v1428 = vpack.c.b16 %v1385, %v1384
        %v1429 = vpack.c.b16 %v1387, %v1386
        %v1430 = vpack.c.b16 %v1389, %v1388
        %v1431 = vpack.c.b16 %v1391, %v1390
        %v1432 = vpack.c.b16 %v1393, %v1392
        %v1433 = vpack.c.b16 %v1395, %v1394
        %v1434 = vpack.c.b16 %v1397, %v1396
        %v1435 = vpack.c.b16 %v1399, %v1398
        %v1436 = vpack.c.b16 %v1401, %v1400
        %v1437 = vpack.c.b16 %v1403, %v1402
        %v1438 = vpack.c.b16 %v1405, %v1404
        %v1439 = vpack.c.b16 %v1407, %v1406
        %1472 = vmatprep.subr.bf16.mxu0 0
        %1473 = vmatpush1.bf16.msra.mxu0 %v1408
        %1474 = vmatprep.subr.bf16.mxu0 0
        %1475 = vmatpush1.bf16.msra.mxu0 %v1409
        %1476 = vmatprep.subr.bf16.mxu0 0
        %1477 = vmatpush1.bf16.msra.mxu0 %v1410
        %1478 = vmatprep.subr.bf16.mxu0 0
        %1479 = vmatpush1.bf16.msra.mxu0 %v1411
        %1480 = vmatprep.subr.bf16.mxu0 0
        %1481 = vmatpush1.bf16.msra.mxu0 %v1412
        %1482 = vmatprep.subr.bf16.mxu0 0
        %1483 = vmatpush1.bf16.msra.mxu0 %v1413
        %1484 = vmatprep.subr.bf16.mxu0 0
        %1485 = vmatpush1.bf16.msra.mxu0 %v1414
        %1486 = vmatprep.subr.bf16.mxu0 0
        %1487 = vmatpush1.bf16.msra.mxu0 %v1415
        %1488 = vmatprep.subr.bf16.mxu0 0
        %1489 = vmatpush1.bf16.msra.mxu0 %v1416
        %1490 = vmatprep.subr.bf16.mxu0 0
        %1491 = vmatpush1.bf16.msra.mxu0 %v1417
        %1492 = vmatprep.subr.bf16.mxu0 0
        %1493 = vmatpush1.bf16.msra.mxu0 %v1418
        %1494 = vmatprep.subr.bf16.mxu0 0
        %1495 = vmatpush1.bf16.msra.mxu0 %v1419
        %1496 = vmatprep.subr.bf16.mxu0 0
        %1497 = vmatpush1.bf16.msra.mxu0 %v1420
        %1498 = vmatprep.subr.bf16.mxu0 0
        %1499 = vmatpush1.bf16.msra.mxu0 %v1421
        %1500 = vmatprep.subr.bf16.mxu0 0
        %1501 = vmatpush1.bf16.msra.mxu0 %v1422
        %1502 = vmatprep.subr.bf16.mxu0 0
        %1503 = vmatpush1.bf16.msra.mxu0 %v1423
        %1504 = vmatprep.mubr.bf16.mxu0 %v1153
        %1505 = vmatmul.mubr.bf16.gmra.mrb[0].mxu0 %v1152
        %v1506 = vpop.f32.mrb[0].mxu0
        %v1507 = vadd.f32 0.0, %v1506
        %v1508 = vpop.f32.mrb[0].mxu0
        %v1509 = vpop.f32.mrb[0].mxu0
        %v1510 = vadd.f32 0.0, %v1509
        %v1511 = vpop.f32.mrb[0].mxu0
        %1512 = vmatprep.mubr.bf16.mxu0 %v1157
        %1513 = vmatmul.mubr.bf16.gmra.mrb[0].mxu0 %v1156
        %v1514 = vpop.f32.mrb[0].mxu0
        %v1515 = vadd.f32 0.0, %v1514
        %v1516 = vpop.f32.mrb[0].mxu0
        %v1517 = vpop.f32.mrb[0].mxu0
        %v1518 = vadd.f32 0.0, %v1517
        %v1519 = vpop.f32.mrb[0].mxu0
        %1520 = vmatprep.mubr.bf16.mxu0 %v1161
        %1521 = vmatmul.mubr.bf16.gmra.mrb[0].mxu0 %v1160
        %v1522 = vpop.f32.mrb[0].mxu0
        %v1523 = vadd.f32 0.0, %v1522
        %v1524 = vpop.f32.mrb[0].mxu0
        %v1525 = vpop.f32.mrb[0].mxu0
        %v1526 = vadd.f32 0.0, %v1525
        %v1527 = vpop.f32.mrb[0].mxu0
        %1528 = vmatprep.mubr.bf16.mxu0 %v1165
        %1529 = vmatmul.mubr.bf16.gmra.mrb[0].mxu0 %v1164
        %v1530 = vpop.f32.mrb[0].mxu0
        %v1531 = vadd.f32 0.0, %v1530
        %v1532 = vpop.f32.mrb[0].mxu0
        %v1533 = vpop.f32.mrb[0].mxu0
        %v1534 = vadd.f32 0.0, %v1533
        %v1535 = vpop.f32.mrb[0].mxu0
        %1536 = vmatprep.mubr.bf16.mxu0 %v1169
        %1537 = vmatmul.mubr.bf16.gmra.mrb[0].mxu0 %v1168
        %v1538 = vpop.f32.mrb[0].mxu0
        %v1539 = vadd.f32 0.0, %v1538
        %v1540 = vpop.f32.mrb[0].mxu0
        %v1541 = vpop.f32.mrb[0].mxu0
        %v1542 = vadd.f32 0.0, %v1541
        %v1543 = vpop.f32.mrb[0].mxu0
        %1544 = vmatprep.mubr.bf16.mxu0 %v1173
        %1545 = vmatmul.mubr.bf16.gmra.mrb[0].mxu0 %v1172
        %v1546 = vpop.f32.mrb[0].mxu0
        %v1547 = vadd.f32 0.0, %v1546
        %v1548 = vpop.f32.mrb[0].mxu0
        %v1549 = vpop.f32.mrb[0].mxu0
        %v1550 = vadd.f32 0.0, %v1549
        %v1551 = vpop.f32.mrb[0].mxu0
        %1552 = vmatprep.mubr.bf16.mxu0 %v1177
        %1553 = vmatmul.mubr.bf16.gmra.mrb[0].mxu0 %v1176
        %v1554 = vpop.f32.mrb[0].mxu0
        %v1555 = vadd.f32 0.0, %v1554
        %v1556 = vpop.f32.mrb[0].mxu0
        %v1557 = vpop.f32.mrb[0].mxu0
        %v1558 = vadd.f32 0.0, %v1557
        %v1559 = vpop.f32.mrb[0].mxu0
        %1560 = vmatprep.mubr.bf16.mxu0 %v1181
        %1561 = vmatmul.mubr.bf16.gmra.mrb[0].mxu0 %v1180
        %v1562 = vpop.f32.mrb[0].mxu0
        %v1563 = vadd.f32 0.0, %v1562
        %v1564 = vpop.f32.mrb[0].mxu0
        %v1565 = vpop.f32.mrb[0].mxu0
        %v1566 = vadd.f32 0.0, %v1565
        %v1567 = vpop.f32.mrb[0].mxu0
        %1568 = vmatprep.mubr.bf16.mxu0 %v1185
        %1569 = vmatmul.mubr.bf16.gmra.mrb[0].mxu0 %v1184
        %v1570 = vpop.f32.mrb[0].mxu0
        %v1571 = vadd.f32 0.0, %v1570
        %v1572 = vpop.f32.mrb[0].mxu0
        %v1573 = vpop.f32.mrb[0].mxu0
        %v1574 = vadd.f32 0.0, %v1573
        %v1575 = vpop.f32.mrb[0].mxu0
        %1576 = vmatprep.mubr.bf16.mxu0 %v1189
        %1577 = vmatmul.mubr.bf16.gmra.mrb[0].mxu0 %v1188
        %v1578 = vpop.f32.mrb[0].mxu0
        %v1579 = vadd.f32 0.0, %v1578
        %v1580 = vpop.f32.mrb[0].mxu0
        %v1581 = vpop.f32.mrb[0].mxu0
        %v1582 = vadd.f32 0.0, %v1581
        %v1583 = vpop.f32.mrb[0].mxu0
        %1584 = vmatprep.mubr.bf16.mxu0 %v1193
        %1585 = vmatmul.mubr.bf16.gmra.mrb[0].mxu0 %v1192
        %v1586 = vpop.f32.mrb[0].mxu0
        %v1587 = vadd.f32 0.0, %v1586
        %v1588 = vpop.f32.mrb[0].mxu0
        %v1589 = vpop.f32.mrb[0].mxu0
        %v1590 = vadd.f32 0.0, %v1589
        %v1591 = vpop.f32.mrb[0].mxu0
        %1592 = vmatprep.mubr.bf16.mxu0 %v1197
        %1593 = vmatmul.mubr.bf16.gmra.mrb[0].mxu0 %v1196
        %v1594 = vpop.f32.mrb[0].mxu0
        %v1595 = vadd.f32 0.0, %v1594
        %v1596 = vpop.f32.mrb[0].mxu0
        %v1597 = vpop.f32.mrb[0].mxu0
        %v1598 = vadd.f32 0.0, %v1597
        %v1599 = vpop.f32.mrb[0].mxu0
        %1600 = vmatprep.mubr.bf16.mxu0 %v1201
        %1601 = vmatmul.mubr.bf16.gmra.mrb[0].mxu0 %v1200
        %v1602 = vpop.f32.mrb[0].mxu0
        %v1603 = vadd.f32 0.0, %v1602
        %v1604 = vpop.f32.mrb[0].mxu0
        %v1605 = vpop.f32.mrb[0].mxu0
        %v1606 = vadd.f32 0.0, %v1605
        %v1607 = vpop.f32.mrb[0].mxu0
        %1608 = vmatprep.mubr.bf16.mxu0 %v1205
        %1609 = vmatmul.mubr.bf16.gmra.mrb[0].mxu0 %v1204
        %v1610 = vpop.f32.mrb[0].mxu0
        %v1611 = vadd.f32 0.0, %v1610
        %v1612 = vpop.f32.mrb[0].mxu0
        %v1613 = vpop.f32.mrb[0].mxu0
        %v1614 = vadd.f32 0.0, %v1613
        %v1615 = vpop.f32.mrb[0].mxu0
        %1616 = vmatprep.mubr.bf16.mxu0 %v1209
        %1617 = vmatmul.mubr.bf16.gmra.mrb[0].mxu0 %v1208
        %v1618 = vpop.f32.mrb[0].mxu0
        %v1619 = vadd.f32 0.0, %v1618
        %v1620 = vpop.f32.mrb[0].mxu0
        %v1621 = vpop.f32.mrb[0].mxu0
        %v1622 = vadd.f32 0.0, %v1621
        %v1623 = vpop.f32.mrb[0].mxu0
        %1624 = vmatprep.mubr.bf16.mxu0 %v1213
        %1625 = vmatmul.mubr.bf16.gmra.mrb[0].mxu0 %v1212
        %v1626 = vpop.f32.mrb[0].mxu0
        %v1627 = vadd.f32 0.0, %v1626
        %v1628 = vpop.f32.mrb[0].mxu0
        %v1629 = vpop.f32.mrb[0].mxu0
        %v1630 = vadd.f32 0.0, %v1629
        %v1631 = vpop.f32.mrb[0].mxu0
        %1632 = vdwg.mxu0
        %1633 = vmatprep.subr.bf16.mxu0 0
        %1634 = vmatpush1.bf16.msra.mxu0 %v1424
        %1635 = vmatprep.subr.bf16.mxu0 0
        %1636 = vmatpush1.bf16.msra.mxu0 %v1425
        %1637 = vmatprep.subr.bf16.mxu0 0
        %1638 = vmatpush1.bf16.msra.mxu0 %v1426
        %1639 = vmatprep.subr.bf16.mxu0 0
        %1640 = vmatpush1.bf16.msra.mxu0 %v1427
        %1641 = vmatprep.subr.bf16.mxu0 0
        %1642 = vmatpush1.bf16.msra.mxu0 %v1428
        %1643 = vmatprep.subr.bf16.mxu0 0
        %1644 = vmatpush1.bf16.msra.mxu0 %v1429
        %1645 = vmatprep.subr.bf16.mxu0 0
        %1646 = vmatpush1.bf16.msra.mxu0 %v1430
        %1647 = vmatprep.subr.bf16.mxu0 0
        %1648 = vmatpush1.bf16.msra.mxu0 %v1431
        %1649 = vmatprep.subr.bf16.mxu0 0
        %1650 = vmatpush1.bf16.msra.mxu0 %v1432
        %1651 = vmatprep.subr.bf16.mxu0 0
        %1652 = vmatpush1.bf16.msra.mxu0 %v1433
        %1653 = vmatprep.subr.bf16.mxu0 0
        %1654 = vmatpush1.bf16.msra.mxu0 %v1434
        %1655 = vmatprep.subr.bf16.mxu0 0
        %1656 = vmatpush1.bf16.msra.mxu0 %v1435
        %1657 = vmatprep.subr.bf16.mxu0 0
        %1658 = vmatpush1.bf16.msra.mxu0 %v1436
        %1659 = vmatprep.subr.bf16.mxu0 0
        %1660 = vmatpush1.bf16.msra.mxu0 %v1437
        %1661 = vmatprep.subr.bf16.mxu0 0
        %1662 = vmatpush1.bf16.msra.mxu0 %v1438
        %1663 = vmatprep.subr.bf16.mxu0 0
        %1664 = vmatpush1.bf16.msra.mxu0 %v1439
        %1665 = vmatprep.mubr.bf16.mxu0 %v1155
        %1666 = vmatmul.mubr.bf16.gmra.mrb[0].mxu0 %v1154
        %v1667 = vpop.f32.mrb[0].mxu0
        %v1668 = vadd.f32 %v1507, %v1667
        %v1669 = vpop.f32.mrb[0].mxu0
        %v1670 = vpop.f32.mrb[0].mxu0
        %v1671 = vadd.f32 %v1510, %v1670
        %v1672 = vpop.f32.mrb[0].mxu0
        %1673 = vmatprep.mubr.bf16.mxu0 %v1159
        %1674 = vmatmul.mubr.bf16.gmra.mrb[0].mxu0 %v1158
        %v1675 = vpop.f32.mrb[0].mxu0
        %v1676 = vadd.f32 %v1515, %v1675
        %v1677 = vpop.f32.mrb[0].mxu0
        %v1678 = vpop.f32.mrb[0].mxu0
        %v1679 = vadd.f32 %v1518, %v1678
        %v1680 = vpop.f32.mrb[0].mxu0
        %1681 = vmatprep.mubr.bf16.mxu0 %v1163
        %1682 = vmatmul.mubr.bf16.gmra.mrb[0].mxu0 %v1162
        %v1683 = vpop.f32.mrb[0].mxu0
        %v1684 = vadd.f32 %v1523, %v1683
        %v1685 = vpop.f32.mrb[0].mxu0
        %v1686 = vpop.f32.mrb[0].mxu0
        %v1687 = vadd.f32 %v1526, %v1686
        %v1688 = vpop.f32.mrb[0].mxu0
        %1689 = vmatprep.mubr.bf16.mxu0 %v1167
        %1690 = vmatmul.mubr.bf16.gmra.mrb[0].mxu0 %v1166
        %v1691 = vpop.f32.mrb[0].mxu0
        %v1692 = vadd.f32 %v1531, %v1691
        %v1693 = vpop.f32.mrb[0].mxu0
        %v1694 = vpop.f32.mrb[0].mxu0
        %v1695 = vadd.f32 %v1534, %v1694
        %v1696 = vpop.f32.mrb[0].mxu0
        %1697 = vmatprep.mubr.bf16.mxu0 %v1171
        %1698 = vmatmul.mubr.bf16.gmra.mrb[0].mxu0 %v1170
        %v1699 = vpop.f32.mrb[0].mxu0
        %v1700 = vadd.f32 %v1539, %v1699
        %v1701 = vpop.f32.mrb[0].mxu0
        %v1702 = vpop.f32.mrb[0].mxu0
        %v1703 = vadd.f32 %v1542, %v1702
        %v1704 = vpop.f32.mrb[0].mxu0
        %1705 = vmatprep.mubr.bf16.mxu0 %v1175
        %1706 = vmatmul.mubr.bf16.gmra.mrb[0].mxu0 %v1174
        %v1707 = vpop.f32.mrb[0].mxu0
        %v1708 = vadd.f32 %v1547, %v1707
        %v1709 = vpop.f32.mrb[0].mxu0
        %v1710 = vpop.f32.mrb[0].mxu0
        %v1711 = vadd.f32 %v1550, %v1710
        %v1712 = vpop.f32.mrb[0].mxu0
        %1713 = vmatprep.mubr.bf16.mxu0 %v1179
        %1714 = vmatmul.mubr.bf16.gmra.mrb[0].mxu0 %v1178
        %v1715 = vpop.f32.mrb[0].mxu0
        %v1716 = vadd.f32 %v1555, %v1715
        %v1717 = vpop.f32.mrb[0].mxu0
        %v1718 = vpop.f32.mrb[0].mxu0
        %v1719 = vadd.f32 %v1558, %v1718
        %v1720 = vpop.f32.mrb[0].mxu0
        %1721 = vmatprep.mubr.bf16.mxu0 %v1183
        %1722 = vmatmul.mubr.bf16.gmra.mrb[0].mxu0 %v1182
        %v1723 = vpop.f32.mrb[0].mxu0
        %v1724 = vadd.f32 %v1563, %v1723
        %v1725 = vpop.f32.mrb[0].mxu0
        %v1726 = vpop.f32.mrb[0].mxu0
        %v1727 = vadd.f32 %v1566, %v1726
        %v1728 = vpop.f32.mrb[0].mxu0
        %1729 = vmatprep.mubr.bf16.mxu0 %v1187
        %1730 = vmatmul.mubr.bf16.gmra.mrb[0].mxu0 %v1186
        %v1731 = vpop.f32.mrb[0].mxu0
        %v1732 = vadd.f32 %v1571, %v1731
        %v1733 = vpop.f32.mrb[0].mxu0
        %v1734 = vpop.f32.mrb[0].mxu0
        %v1735 = vadd.f32 %v1574, %v1734
        %v1736 = vpop.f32.mrb[0].mxu0
        %1737 = vmatprep.mubr.bf16.mxu0 %v1191
        %1738 = vmatmul.mubr.bf16.gmra.mrb[0].mxu0 %v1190
        %v1739 = vpop.f32.mrb[0].mxu0
        %v1740 = vadd.f32 %v1579, %v1739
        %v1741 = vpop.f32.mrb[0].mxu0
        %v1742 = vpop.f32.mrb[0].mxu0
        %v1743 = vadd.f32 %v1582, %v1742
        %v1744 = vpop.f32.mrb[0].mxu0
        %1745 = vmatprep.mubr.bf16.mxu0 %v1195
        %1746 = vmatmul.mubr.bf16.gmra.mrb[0].mxu0 %v1194
        %v1747 = vpop.f32.mrb[0].mxu0
        %v1748 = vadd.f32 %v1587, %v1747
        %v1749 = vpop.f32.mrb[0].mxu0
        %v1750 = vpop.f32.mrb[0].mxu0
        %v1751 = vadd.f32 %v1590, %v1750
        %v1752 = vpop.f32.mrb[0].mxu0
        %1753 = vmatprep.mubr.bf16.mxu0 %v1199
        %1754 = vmatmul.mubr.bf16.gmra.mrb[0].mxu0 %v1198
        %v1755 = vpop.f32.mrb[0].mxu0
        %v1756 = vadd.f32 %v1595, %v1755
        %v1757 = vpop.f32.mrb[0].mxu0
        %v1758 = vpop.f32.mrb[0].mxu0
        %v1759 = vadd.f32 %v1598, %v1758
        %v1760 = vpop.f32.mrb[0].mxu0
        %1761 = vmatprep.mubr.bf16.mxu0 %v1203
        %1762 = vmatmul.mubr.bf16.gmra.mrb[0].mxu0 %v1202
        %v1763 = vpop.f32.mrb[0].mxu0
        %v1764 = vadd.f32 %v1603, %v1763
        %v1765 = vpop.f32.mrb[0].mxu0
        %v1766 = vpop.f32.mrb[0].mxu0
        %v1767 = vadd.f32 %v1606, %v1766
        %v1768 = vpop.f32.mrb[0].mxu0
        %1769 = vmatprep.mubr.bf16.mxu0 %v1207
        %1770 = vmatmul.mubr.bf16.gmra.mrb[0].mxu0 %v1206
        %v1771 = vpop.f32.mrb[0].mxu0
        %v1772 = vadd.f32 %v1611, %v1771
        %v1773 = vpop.f32.mrb[0].mxu0
        %v1774 = vpop.f32.mrb[0].mxu0
        %v1775 = vadd.f32 %v1614, %v1774
        %v1776 = vpop.f32.mrb[0].mxu0
        %1777 = vmatprep.mubr.bf16.mxu0 %v1211
        %1778 = vmatmul.mubr.bf16.gmra.mrb[0].mxu0 %v1210
        %v1779 = vpop.f32.mrb[0].mxu0
        %v1780 = vadd.f32 %v1619, %v1779
        %v1781 = vpop.f32.mrb[0].mxu0
        %v1782 = vpop.f32.mrb[0].mxu0
        %v1783 = vadd.f32 %v1622, %v1782
        %v1784 = vpop.f32.mrb[0].mxu0
        %1785 = vmatprep.mubr.bf16.mxu0 %v1215
        %1786 = vmatmul.mubr.bf16.gmra.mrb[0].mxu0 %v1214
        %v1787 = vpop.f32.mrb[0].mxu0
        %v1788 = vadd.f32 %v1627, %v1787
        %v1789 = vpop.f32.mrb[0].mxu0
        %v1790 = vpop.f32.mrb[0].mxu0
        %v1791 = vadd.f32 %v1630, %v1790
        %v1792 = vpop.f32.mrb[0].mxu0
        %1793 = vdwg.mxu0
        %v1794 = vmax.f32 %v1668, 0.0
        %v1795 = vmax.f32 %v1671, 0.0
        %v1796 = vmax.f32 %v1676, 0.0
        %v1797 = vmax.f32 %v1679, 0.0
        %v1798 = vmax.f32 %v1684, 0.0
        %v1799 = vmax.f32 %v1687, 0.0
        %v1800 = vmax.f32 %v1692, 0.0
        %v1801 = vmax.f32 %v1695, 0.0
        %v1802 = vmax.f32 %v1700, 0.0
        %v1803 = vmax.f32 %v1703, 0.0
        %v1804 = vmax.f32 %v1708, 0.0
        %v1805 = vmax.f32 %v1711, 0.0
        %v1806 = vmax.f32 %v1716, 0.0
        %v1807 = vmax.f32 %v1719, 0.0
        %v1808 = vmax.f32 %v1724, 0.0
        %v1809 = vmax.f32 %v1727, 0.0
        %v1810 = vmax.f32 %v1732, 0.0
        %v1811 = vmax.f32 %v1735, 0.0
        %v1812 = vmax.f32 %v1740, 0.0
        %v1813 = vmax.f32 %v1743, 0.0
        %v1814 = vmax.f32 %v1748, 0.0
        %v1815 = vmax.f32 %v1751, 0.0
        %v1816 = vmax.f32 %v1756, 0.0
        %v1817 = vmax.f32 %v1759, 0.0
        %v1818 = vmax.f32 %v1764, 0.0
        %v1819 = vmax.f32 %v1767, 0.0
        %v1820 = vmax.f32 %v1772, 0.0
        %v1821 = vmax.f32 %v1775, 0.0
        %v1822 = vmax.f32 %v1780, 0.0
        %v1823 = vmax.f32 %v1783, 0.0
        %v1824 = vmax.f32 %v1788, 0.0
        %v1825 = vmax.f32 %v1791, 0.0
        %v1826 = vpack.c.bf16 %v1795, %v1794
        %v1827 = vpack.c.bf16 %v1797, %v1796
        %v1828 = vpack.c.bf16 %v1799, %v1798
        %v1829 = vpack.c.bf16 %v1801, %v1800
        %v1830 = vpack.c.bf16 %v1803, %v1802
        %v1831 = vpack.c.bf16 %v1805, %v1804
        %v1832 = vpack.c.bf16 %v1807, %v1806
        %v1833 = vpack.c.bf16 %v1809, %v1808
        %v1834 = vpack.c.bf16 %v1811, %v1810
        %v1835 = vpack.c.bf16 %v1813, %v1812
        %v1836 = vpack.c.bf16 %v1815, %v1814
        %v1837 = vpack.c.bf16 %v1817, %v1816
        %v1838 = vpack.c.bf16 %v1819, %v1818
        %v1839 = vpack.c.bf16 %v1821, %v1820
        %v1840 = vpack.c.bf16 %v1823, %v1822
        %v1841 = vpack.c.bf16 %v1825, %v1824
        %1842 = vst [vmem:[#allocation4] sm:$0xff] 0
        %1843 = vst [vmem:[#allocation4 + $0x8] sm:$0xff] 0
        %1844 = vst [vmem:[#allocation4 + $0x10] sm:$0xff] 0
        %1845 = vst [vmem:[#allocation4 + $0x18] sm:$0xff] 0
        %1846 = vst [vmem:[#allocation4 + $0x20] sm:$0xff] 0
        %1847 = vst [vmem:[#allocation4 + $0x28] sm:$0xff] 0
        %1848 = vst [vmem:[#allocation4 + $0x30] sm:$0xff] 0
        %1849 = vst [vmem:[#allocation4 + $0x38] sm:$0xff] 0
        %1850 = vst [vmem:[#allocation4 + $0x40] sm:$0xff] 0
        %1851 = vst [vmem:[#allocation4 + $0x48] sm:$0xff] 0
        %1852 = vst [vmem:[#allocation4 + $0x50] sm:$0xff] 0
        %1853 = vst [vmem:[#allocation4 + $0x58] sm:$0xff] 0
        %1854 = vst [vmem:[#allocation4 + $0x60] sm:$0xff] 0
        %1855 = vst [vmem:[#allocation4 + $0x68] sm:$0xff] 0
        %1856 = vst [vmem:[#allocation4 + $0x70] sm:$0xff] 0
        %1857 = vst [vmem:[#allocation4 + $0x78] sm:$0xff] 0
        %1858 = vst [vmem:[#allocation4 + $0x80] sm:$0xff] 0
        %1859 = vst [vmem:[#allocation4 + $0x88] sm:$0xff] 0
        %1860 = vst [vmem:[#allocation4 + $0x90] sm:$0xff] 0
        %1861 = vst [vmem:[#allocation4 + $0x98] sm:$0xff] 0
        %1862 = vst [vmem:[#allocation4 + $0xa0] sm:$0xff] 0
        %1863 = vst [vmem:[#allocation4 + $0xa8] sm:$0xff] 0
        %1864 = vst [vmem:[#allocation4 + $0xb0] sm:$0xff] 0
        %1865 = vst [vmem:[#allocation4 + $0xb8] sm:$0xff] 0
        %1866 = vst [vmem:[#allocation4 + $0xc0] sm:$0xff] 0
        %1867 = vst [vmem:[#allocation4 + $0xc8] sm:$0xff] 0
        %1868 = vst [vmem:[#allocation4 + $0xd0] sm:$0xff] 0
        %1869 = vst [vmem:[#allocation4 + $0xd8] sm:$0xff] 0
        %1870 = vst [vmem:[#allocation4 + $0xe0] sm:$0xff] 0
        %1871 = vst [vmem:[#allocation4 + $0xe8] sm:$0xff] 0
        %1872 = vst [vmem:[#allocation4 + $0xf0] sm:$0xff] 0
        %1873 = vst [vmem:[#allocation4 + $0xf8] sm:$0xff] 0
        %1874 = vst [vmem:[#allocation4 + $0x100] sm:$0xff] 0
        %1875 = vst [vmem:[#allocation4 + $0x108] sm:$0xff] 0
        %1876 = vst [vmem:[#allocation4 + $0x110] sm:$0xff] 0
        %1877 = vst [vmem:[#allocation4 + $0x118] sm:$0xff] 0
        %1878 = vst [vmem:[#allocation4 + $0x120] sm:$0xff] 0
        %1879 = vst [vmem:[#allocation4 + $0x128] sm:$0xff] 0
        %1880 = vst [vmem:[#allocation4 + $0x130] sm:$0xff] 0
        %1881 = vst [vmem:[#allocation4 + $0x138] sm:$0xff] 0
        %1882 = vst [vmem:[#allocation4 + $0x140] sm:$0xff] 0
        %1883 = vst [vmem:[#allocation4 + $0x148] sm:$0xff] 0
        %1884 = vst [vmem:[#allocation4 + $0x150] sm:$0xff] 0
        %1885 = vst [vmem:[#allocation4 + $0x158] sm:$0xff] 0
        %1886 = vst [vmem:[#allocation4 + $0x160] sm:$0xff] 0
        %1887 = vst [vmem:[#allocation4 + $0x168] sm:$0xff] 0
        %1888 = vst [vmem:[#allocation4 + $0x170] sm:$0xff] 0
        %1889 = vst [vmem:[#allocation4 + $0x178] sm:$0xff] 0
        %1890 = vst [vmem:[#allocation4 + $0x180] sm:$0xff] 0
        %1891 = vst [vmem:[#allocation4 + $0x188] sm:$0xff] 0
        %1892 = vst [vmem:[#allocation4 + $0x190] sm:$0xff] 0
        %1893 = vst [vmem:[#allocation4 + $0x198] sm:$0xff] 0
        %1894 = vst [vmem:[#allocation4 + $0x1a0] sm:$0xff] 0
        %1895 = vst [vmem:[#allocation4 + $0x1a8] sm:$0xff] 0
        %1896 = vst [vmem:[#allocation4 + $0x1b0] sm:$0xff] 0
        %1897 = vst [vmem:[#allocation4 + $0x1b8] sm:$0xff] 0
        %1898 = vst [vmem:[#allocation4 + $0x1c0] sm:$0xff] 0
        %1899 = vst [vmem:[#allocation4 + $0x1c8] sm:$0xff] 0
        %1900 = vst [vmem:[#allocation4 + $0x1d0] sm:$0xff] 0
        %1901 = vst [vmem:[#allocation4 + $0x1d8] sm:$0xff] 0
        %1902 = vst [vmem:[#allocation4 + $0x1e0] sm:$0xff] 0
        %1903 = vst [vmem:[#allocation4 + $0x1e8] sm:$0xff] 0
        %1904 = vst [vmem:[#allocation4 + $0x1f0] sm:$0xff] 0
        %1905 = vst [vmem:[#allocation4 + $0x1f8] sm:$0xff] 0
        %1906 = vst [vmem:[#allocation4 + $0x200] sm:$0xff] 0
        %1907 = vst [vmem:[#allocation4 + $0x208] sm:$0xff] 0
        %1908 = vst [vmem:[#allocation4 + $0x210] sm:$0xff] 0
        %1909 = vst [vmem:[#allocation4 + $0x218] sm:$0xff] 0
        %1910 = vst [vmem:[#allocation4 + $0x220] sm:$0xff] 0
        %1911 = vst [vmem:[#allocation4 + $0x228] sm:$0xff] 0
        %1912 = vst [vmem:[#allocation4 + $0x230] sm:$0xff] 0
        %1913 = vst [vmem:[#allocation4 + $0x238] sm:$0xff] 0
        %1914 = vst [vmem:[#allocation4 + $0x240] sm:$0xff] 0
        %1915 = vst [vmem:[#allocation4 + $0x248] sm:$0xff] 0
        %1916 = vst [vmem:[#allocation4 + $0x250] sm:$0xff] 0
        %1917 = vst [vmem:[#allocation4 + $0x258] sm:$0xff] 0
        %1918 = vst [vmem:[#allocation4 + $0x260] sm:$0xff] 0
        %1919 = vst [vmem:[#allocation4 + $0x268] sm:$0xff] 0
        %1920 = vst [vmem:[#allocation4 + $0x270] sm:$0xff] 0
        %1921 = vst [vmem:[#allocation4 + $0x278] sm:$0xff] 0
        %1922 = vst [vmem:[#allocation4 + $0x280] sm:$0xff] 0
        %1923 = vst [vmem:[#allocation4 + $0x288] sm:$0xff] 0
        %1924 = vst [vmem:[#allocation4 + $0x290] sm:$0xff] 0
        %1925 = vst [vmem:[#allocation4 + $0x298] sm:$0xff] 0
        %1926 = vst [vmem:[#allocation4 + $0x2a0] sm:$0xff] 0
        %1927 = vst [vmem:[#allocation4 + $0x2a8] sm:$0xff] 0
        %1928 = vst [vmem:[#allocation4 + $0x2b0] sm:$0xff] 0
        %1929 = vst [vmem:[#allocation4 + $0x2b8] sm:$0xff] 0
        %1930 = vst [vmem:[#allocation4 + $0x2c0] sm:$0xff] 0
        %1931 = vst [vmem:[#allocation4 + $0x2c8] sm:$0xff] 0
        %1932 = vst [vmem:[#allocation4 + $0x2d0] sm:$0xff] 0
        %1933 = vst [vmem:[#allocation4 + $0x2d8] sm:$0xff] 0
        %1934 = vst [vmem:[#allocation4 + $0x2e0] sm:$0xff] 0
        %1935 = vst [vmem:[#allocation4 + $0x2e8] sm:$0xff] 0
        %1936 = vst [vmem:[#allocation4 + $0x2f0] sm:$0xff] 0
        %1937 = vst [vmem:[#allocation4 + $0x2f8] sm:$0xff] 0
        %1938 = vst [vmem:[#allocation4 + $0x300] sm:$0xff] 0
        %1939 = vst [vmem:[#allocation4 + $0x308] sm:$0xff] 0
        %1940 = vst [vmem:[#allocation4 + $0x310] sm:$0xff] 0
        %1941 = vst [vmem:[#allocation4 + $0x318] sm:$0xff] 0
        %1942 = vst [vmem:[#allocation4 + $0x320] sm:$0xff] 0
        %1943 = vst [vmem:[#allocation4 + $0x328] sm:$0xff] 0
        %1944 = vst [vmem:[#allocation4 + $0x330] sm:$0xff] 0
        %1945 = vst [vmem:[#allocation4 + $0x338] sm:$0xff] 0
        %1946 = vst [vmem:[#allocation4 + $0x340] sm:$0xff] 0
        %1947 = vst [vmem:[#allocation4 + $0x348] sm:$0xff] 0
        %1948 = vst [vmem:[#allocation4 + $0x350] sm:$0xff] 0
        %1949 = vst [vmem:[#allocation4 + $0x358] sm:$0xff] 0
        %1950 = vst [vmem:[#allocation4 + $0x360] sm:$0xff] 0
        %1951 = vst [vmem:[#allocation4 + $0x368] sm:$0xff] 0
        %1952 = vst [vmem:[#allocation4 + $0x370] sm:$0xff] 0
        %1953 = vst [vmem:[#allocation4 + $0x378] sm:$0xff] 0
        %1954 = vst [vmem:[#allocation4 + $0x380] sm:$0xff] 0
        %1955 = vst [vmem:[#allocation4 + $0x388] sm:$0xff] 0
        %1956 = vst [vmem:[#allocation4 + $0x390] sm:$0xff] 0
        %1957 = vst [vmem:[#allocation4 + $0x398] sm:$0xff] 0
        %1958 = vst [vmem:[#allocation4 + $0x3a0] sm:$0xff] 0
        %1959 = vst [vmem:[#allocation4 + $0x3a8] sm:$0xff] 0
        %1960 = vst [vmem:[#allocation4 + $0x3b0] sm:$0xff] 0
        %1961 = vst [vmem:[#allocation4 + $0x3b8] sm:$0xff] 0
        %1962 = vst [vmem:[#allocation4 + $0x3c0] sm:$0xff] 0
        %1963 = vst [vmem:[#allocation4 + $0x3c8] sm:$0xff] 0
        %1964 = vst [vmem:[#allocation4 + $0x3d0] sm:$0xff] 0
        %1965 = vst [vmem:[#allocation4 + $0x3d8] sm:$0xff] 0
        %1966 = vst [vmem:[#allocation4 + $0x3e0] sm:$0xff] 0
        %1967 = vst [vmem:[#allocation4 + $0x3e8] sm:$0xff] 0
        %1968 = vst [vmem:[#allocation4 + $0x3f0] sm:$0xff] 0
        %1969 = vst [vmem:[#allocation4 + $0x3f8] sm:$0xff] 0
        %1970 = vst [vmem:[#allocation4 + $0x20] sm:$0xff] %v1827
        %1971 = vst [vmem:[#allocation4 + $0x60] sm:$0xff] %v1828
        %1972 = vst [vmem:[#allocation4 + $0xa0] sm:$0xff] %v1829
        %1973 = vst [vmem:[#allocation4 + $0xe0] sm:$0xff] %v1830
        %1974 = vst [vmem:[#allocation4 + $0x120] sm:$0xff] %v1831
        %1975 = vst [vmem:[#allocation4 + $0x160] sm:$0xff] %v1832
        %1976 = vst [vmem:[#allocation4 + $0x1a0] sm:$0xff] %v1833
        %1977 = vst [vmem:[#allocation4 + $0x1e0] sm:$0xff] %v1834
        %1978 = vst [vmem:[#allocation4 + $0x220] sm:$0xff] %v1835
        %1979 = vst [vmem:[#allocation4 + $0x260] sm:$0xff] %v1836
        %1980 = vst [vmem:[#allocation4 + $0x2a0] sm:$0xff] %v1837
        %1981 = vst [vmem:[#allocation4 + $0x2e0] sm:$0xff] %v1838
        %1982 = vst [vmem:[#allocation4 + $0x320] sm:$0xff] %v1839
        %1983 = vst [vmem:[#allocation4 + $0x360] sm:$0xff] %v1840
        %1984 = vst [vmem:[#allocation4 + $0x3a0] sm:$0xff] %v1841
        %1985 = vst [vmem:[#allocation4 + $0x8] sm:$0xff] %v1826
        %1986 = vst [vmem:[#allocation4 + $0x48] sm:$0xff] %v1827
        %1987 = vst [vmem:[#allocation4 + $0x88] sm:$0xff] %v1828
        %1988 = vst [vmem:[#allocation4 + $0xc8] sm:$0xff] %v1829
        %1989 = vst [vmem:[#allocation4 + $0x108] sm:$0xff] %v1830
        %1990 = vst [vmem:[#allocation4 + $0x148] sm:$0xff] %v1831
        %1991 = vst [vmem:[#allocation4 + $0x188] sm:$0xff] %v1832
        %1992 = vst [vmem:[#allocation4 + $0x1c8] sm:$0xff] %v1833
        %1993 = vst [vmem:[#allocation4 + $0x208] sm:$0xff] %v1834
        %1994 = vst [vmem:[#allocation4 + $0x248] sm:$0xff] %v1835
        %1995 = vst [vmem:[#allocation4 + $0x288] sm:$0xff] %v1836
        %1996 = vst [vmem:[#allocation4 + $0x2c8] sm:$0xff] %v1837
        %1997 = vst [vmem:[#allocation4 + $0x308] sm:$0xff] %v1838
        %1998 = vst [vmem:[#allocation4 + $0x348] sm:$0xff] %v1839
        %1999 = vst [vmem:[#allocation4 + $0x388] sm:$0xff] %v1840
        %2000 = vst [vmem:[#allocation4 + $0x3c8] sm:$0xff] %v1841
        %2001 = vst [vmem:[#allocation4 + $0x30] sm:$0xff] %v1826
        %2002 = vst [vmem:[#allocation4 + $0x70] sm:$0xff] %v1827
        %2003 = vst [vmem:[#allocation4 + $0xb0] sm:$0xff] %v1828
        %2004 = vst [vmem:[#allocation4 + $0xf0] sm:$0xff] %v1829
        %2005 = vst [vmem:[#allocation4 + $0x130] sm:$0xff] %v1830
        %2006 = vst [vmem:[#allocation4 + $0x170] sm:$0xff] %v1831
        %2007 = vst [vmem:[#allocation4 + $0x1b0] sm:$0xff] %v1832
        %2008 = vst [vmem:[#allocation4 + $0x1f0] sm:$0xff] %v1833
        %2009 = vst [vmem:[#allocation4 + $0x230] sm:$0xff] %v1834
        %2010 = vst [vmem:[#allocation4 + $0x270] sm:$0xff] %v1835
        %2011 = vst [vmem:[#allocation4 + $0x2b0] sm:$0xff] %v1836
        %2012 = vst [vmem:[#allocation4 + $0x2f0] sm:$0xff] %v1837
        %2013 = vst [vmem:[#allocation4 + $0x330] sm:$0xff] %v1838
        %2014 = vst [vmem:[#allocation4 + $0x370] sm:$0xff] %v1839
        %2015 = vst [vmem:[#allocation4 + $0x3b0] sm:$0xff] %v1840
        %2016 = vst [vmem:[#allocation4 + $0x3f0] sm:$0xff] %v1841
        %2017 = vst [vmem:[#allocation4 + $0x58] sm:$0xff] %v1826
        %2018 = vst [vmem:[#allocation4 + $0x98] sm:$0xff] %v1827
        %2019 = vst [vmem:[#allocation4 + $0xd8] sm:$0xff] %v1828
        %2020 = vst [vmem:[#allocation4 + $0x118] sm:$0xff] %v1829
        %2021 = vst [vmem:[#allocation4 + $0x158] sm:$0xff] %v1830
        %2022 = vst [vmem:[#allocation4 + $0x198] sm:$0xff] %v1831
        %2023 = vst [vmem:[#allocation4 + $0x1d8] sm:$0xff] %v1832
        %2024 = vst [vmem:[#allocation4 + $0x218] sm:$0xff] %v1833
        %2025 = vst [vmem:[#allocation4 + $0x258] sm:$0xff] %v1834
        %2026 = vst [vmem:[#allocation4 + $0x298] sm:$0xff] %v1835
        %2027 = vst [vmem:[#allocation4 + $0x2d8] sm:$0xff] %v1836
        %2028 = vst [vmem:[#allocation4 + $0x318] sm:$0xff] %v1837
        %2029 = vst [vmem:[#allocation4 + $0x358] sm:$0xff] %v1838
        %2030 = vst [vmem:[#allocation4 + $0x398] sm:$0xff] %v1839
        %2031 = vst [vmem:[#allocation4 + $0x3d8] sm:$0xff] %v1840
        %v2032 = vld [vmem:[#allocation4] sm:$0xff]
        %v2033 = vld [vmem:[#allocation4 + $0x8] sm:$0xff]
        %v2034 = vld [vmem:[#allocation4 + $0x10] sm:$0xff]
        %v2035 = vld [vmem:[#allocation4 + $0x18] sm:$0xff]
        %v2036 = vld [vmem:[#allocation4 + $0x20] sm:$0xff]
        %v2037 = vld [vmem:[#allocation4 + $0x28] sm:$0xff]
        %v2038 = vld [vmem:[#allocation4 + $0x30] sm:$0xff]
        %v2039 = vld [vmem:[#allocation4 + $0x38] sm:$0xff]
        %v2040 = vld [vmem:[#allocation4 + $0x40] sm:$0xff]
        %v2041 = vld [vmem:[#allocation4 + $0x48] sm:$0xff]
        %v2042 = vld [vmem:[#allocation4 + $0x50] sm:$0xff]
        %v2043 = vld [vmem:[#allocation4 + $0x58] sm:$0xff]
        %v2044 = vld [vmem:[#allocation4 + $0x60] sm:$0xff]
        %v2045 = vld [vmem:[#allocation4 + $0x68] sm:$0xff]
        %v2046 = vld [vmem:[#allocation4 + $0x70] sm:$0xff]
        %v2047 = vld [vmem:[#allocation4 + $0x78] sm:$0xff]
        %v2048 = vld [vmem:[#allocation4 + $0x80] sm:$0xff]
        %v2049 = vld [vmem:[#allocation4 + $0x88] sm:$0xff]
        %v2050 = vld [vmem:[#allocation4 + $0x90] sm:$0xff]
        %v2051 = vld [vmem:[#allocation4 + $0x98] sm:$0xff]
        %v2052 = vld [vmem:[#allocation4 + $0xa0] sm:$0xff]
        %v2053 = vld [vmem:[#allocation4 + $0xa8] sm:$0xff]
        %v2054 = vld [vmem:[#allocation4 + $0xb0] sm:$0xff]
        %v2055 = vld [vmem:[#allocation4 + $0xb8] sm:$0xff]
        %v2056 = vld [vmem:[#allocation4 + $0xc0] sm:$0xff]
        %v2057 = vld [vmem:[#allocation4 + $0xc8] sm:$0xff]
        %v2058 = vld [vmem:[#allocation4 + $0xd0] sm:$0xff]
        %v2059 = vld [vmem:[#allocation4 + $0xd8] sm:$0xff]
        %v2060 = vld [vmem:[#allocation4 + $0xe0] sm:$0xff]
        %v2061 = vld [vmem:[#allocation4 + $0xe8] sm:$0xff]
        %v2062 = vld [vmem:[#allocation4 + $0xf0] sm:$0xff]
        %v2063 = vld [vmem:[#allocation4 + $0xf8] sm:$0xff]
        %v2064 = vld [vmem:[#allocation4 + $0x100] sm:$0xff]
        %v2065 = vld [vmem:[#allocation4 + $0x108] sm:$0xff]
        %v2066 = vld [vmem:[#allocation4 + $0x110] sm:$0xff]
        %v2067 = vld [vmem:[#allocation4 + $0x118] sm:$0xff]
        %v2068 = vld [vmem:[#allocation4 + $0x120] sm:$0xff]
        %v2069 = vld [vmem:[#allocation4 + $0x128] sm:$0xff]
        %v2070 = vld [vmem:[#allocation4 + $0x130] sm:$0xff]
        %v2071 = vld [vmem:[#allocation4 + $0x138] sm:$0xff]
        %v2072 = vld [vmem:[#allocation4 + $0x140] sm:$0xff]
        %v2073 = vld [vmem:[#allocation4 + $0x148] sm:$0xff]
        %v2074 = vld [vmem:[#allocation4 + $0x150] sm:$0xff]
        %v2075 = vld [vmem:[#allocation4 + $0x158] sm:$0xff]
        %v2076 = vld [vmem:[#allocation4 + $0x160] sm:$0xff]
        %v2077 = vld [vmem:[#allocation4 + $0x168] sm:$0xff]
        %v2078 = vld [vmem:[#allocation4 + $0x170] sm:$0xff]
        %v2079 = vld [vmem:[#allocation4 + $0x178] sm:$0xff]
        %v2080 = vld [vmem:[#allocation4 + $0x180] sm:$0xff]
        %v2081 = vld [vmem:[#allocation4 + $0x188] sm:$0xff]
        %v2082 = vld [vmem:[#allocation4 + $0x190] sm:$0xff]
        %v2083 = vld [vmem:[#allocation4 + $0x198] sm:$0xff]
        %v2084 = vld [vmem:[#allocation4 + $0x1a0] sm:$0xff]
        %v2085 = vld [vmem:[#allocation4 + $0x1a8] sm:$0xff]
        %v2086 = vld [vmem:[#allocation4 + $0x1b0] sm:$0xff]
        %v2087 = vld [vmem:[#allocation4 + $0x1b8] sm:$0xff]
        %v2088 = vld [vmem:[#allocation4 + $0x1c0] sm:$0xff]
        %v2089 = vld [vmem:[#allocation4 + $0x1c8] sm:$0xff]
        %v2090 = vld [vmem:[#allocation4 + $0x1d0] sm:$0xff]
        %v2091 = vld [vmem:[#allocation4 + $0x1d8] sm:$0xff]
        %v2092 = vld [vmem:[#allocation4 + $0x1e0] sm:$0xff]
        %v2093 = vld [vmem:[#allocation4 + $0x1e8] sm:$0xff]
        %v2094 = vld [vmem:[#allocation4 + $0x1f0] sm:$0xff]
        %v2095 = vld [vmem:[#allocation4 + $0x1f8] sm:$0xff]
        %v2096 = vld [vmem:[#allocation4 + $0x200] sm:$0xff]
        %v2097 = vld [vmem:[#allocation4 + $0x208] sm:$0xff]
        %v2098 = vld [vmem:[#allocation4 + $0x210] sm:$0xff]
        %v2099 = vld [vmem:[#allocation4 + $0x218] sm:$0xff]
        %v2100 = vld [vmem:[#allocation4 + $0x220] sm:$0xff]
        %v2101 = vld [vmem:[#allocation4 + $0x228] sm:$0xff]
        %v2102 = vld [vmem:[#allocation4 + $0x230] sm:$0xff]
        %v2103 = vld [vmem:[#allocation4 + $0x238] sm:$0xff]
        %v2104 = vld [vmem:[#allocation4 + $0x240] sm:$0xff]
        %v2105 = vld [vmem:[#allocation4 + $0x248] sm:$0xff]
        %v2106 = vld [vmem:[#allocation4 + $0x250] sm:$0xff]
        %v2107 = vld [vmem:[#allocation4 + $0x258] sm:$0xff]
        %v2108 = vld [vmem:[#allocation4 + $0x260] sm:$0xff]
        %v2109 = vld [vmem:[#allocation4 + $0x268] sm:$0xff]
        %v2110 = vld [vmem:[#allocation4 + $0x270] sm:$0xff]
        %v2111 = vld [vmem:[#allocation4 + $0x278] sm:$0xff]
        %v2112 = vld [vmem:[#allocation4 + $0x280] sm:$0xff]
        %v2113 = vld [vmem:[#allocation4 + $0x288] sm:$0xff]
        %v2114 = vld [vmem:[#allocation4 + $0x290] sm:$0xff]
        %v2115 = vld [vmem:[#allocation4 + $0x298] sm:$0xff]
        %v2116 = vld [vmem:[#allocation4 + $0x2a0] sm:$0xff]
        %v2117 = vld [vmem:[#allocation4 + $0x2a8] sm:$0xff]
        %v2118 = vld [vmem:[#allocation4 + $0x2b0] sm:$0xff]
        %v2119 = vld [vmem:[#allocation4 + $0x2b8] sm:$0xff]
        %v2120 = vld [vmem:[#allocation4 + $0x2c0] sm:$0xff]
        %v2121 = vld [vmem:[#allocation4 + $0x2c8] sm:$0xff]
        %v2122 = vld [vmem:[#allocation4 + $0x2d0] sm:$0xff]
        %v2123 = vld [vmem:[#allocation4 + $0x2d8] sm:$0xff]
        %v2124 = vld [vmem:[#allocation4 + $0x2e0] sm:$0xff]
        %v2125 = vld [vmem:[#allocation4 + $0x2e8] sm:$0xff]
        %v2126 = vld [vmem:[#allocation4 + $0x2f0] sm:$0xff]
        %v2127 = vld [vmem:[#allocation4 + $0x2f8] sm:$0xff]
        %v2128 = vld [vmem:[#allocation4 + $0x300] sm:$0xff]
        %v2129 = vld [vmem:[#allocation4 + $0x308] sm:$0xff]
        %v2130 = vld [vmem:[#allocation4 + $0x310] sm:$0xff]
        %v2131 = vld [vmem:[#allocation4 + $0x318] sm:$0xff]
        %v2132 = vld [vmem:[#allocation4 + $0x320] sm:$0xff]
        %v2133 = vld [vmem:[#allocation4 + $0x328] sm:$0xff]
        %v2134 = vld [vmem:[#allocation4 + $0x330] sm:$0xff]
        %v2135 = vld [vmem:[#allocation4 + $0x338] sm:$0xff]
        %v2136 = vld [vmem:[#allocation4 + $0x340] sm:$0xff]
        %v2137 = vld [vmem:[#allocation4 + $0x348] sm:$0xff]
        %v2138 = vld [vmem:[#allocation4 + $0x350] sm:$0xff]
        %v2139 = vld [vmem:[#allocation4 + $0x358] sm:$0xff]
        %v2140 = vld [vmem:[#allocation4 + $0x360] sm:$0xff]
        %v2141 = vld [vmem:[#allocation4 + $0x368] sm:$0xff]
        %v2142 = vld [vmem:[#allocation4 + $0x370] sm:$0xff]
        %v2143 = vld [vmem:[#allocation4 + $0x378] sm:$0xff]
        %v2144 = vld [vmem:[#allocation4 + $0x380] sm:$0xff]
        %v2145 = vld [vmem:[#allocation4 + $0x388] sm:$0xff]
        %v2146 = vld [vmem:[#allocation4 + $0x390] sm:$0xff]
        %v2147 = vld [vmem:[#allocation4 + $0x398] sm:$0xff]
        %v2148 = vld [vmem:[#allocation4 + $0x3a0] sm:$0xff]
        %v2149 = vld [vmem:[#allocation4 + $0x3a8] sm:$0xff]
        %v2150 = vld [vmem:[#allocation4 + $0x3b0] sm:$0xff]
        %v2151 = vld [vmem:[#allocation4 + $0x3b8] sm:$0xff]
        %v2152 = vld [vmem:[#allocation4 + $0x3c0] sm:$0xff]
        %v2153 = vld [vmem:[#allocation4 + $0x3c8] sm:$0xff]
        %v2154 = vld [vmem:[#allocation4 + $0x3d0] sm:$0xff]
        %v2155 = vld [vmem:[#allocation4 + $0x3d8] sm:$0xff]
        %v2156 = vld [vmem:[#allocation4 + $0x3e0] sm:$0xff]
        %v2157 = vld [vmem:[#allocation4 + $0x3e8] sm:$0xff]
        %v2158 = vld [vmem:[#allocation4 + $0x3f0] sm:$0xff]
        %v2159 = vld [vmem:[#allocation4 + $0x3f8] sm:$0xff]
        %v2160 = vld [vmem:[#allocation10] sm:$0xf]
        %v2161 = vld [vmem:[#allocation10 + $0x4] sm:$0xf]
        %v2162 = vld [vmem:[#allocation10 + $0x8] sm:$0xf]
        %v2163 = vld [vmem:[#allocation10 + $0xc] sm:$0xf]
        %v2164 = vld [vmem:[#allocation10 + $0x10] sm:$0xf]
        %v2165 = vld [vmem:[#allocation10 + $0x14] sm:$0xf]
        %v2166 = vld [vmem:[#allocation10 + $0x18] sm:$0xf]
        %v2167 = vld [vmem:[#allocation10 + $0x1c] sm:$0xf]
        %v2168 = vld [vmem:[#allocation10 + $0x20] sm:$0xf]
        %v2169 = vld [vmem:[#allocation10 + $0x24] sm:$0xf]
        %v2170 = vld [vmem:[#allocation10 + $0x28] sm:$0xf]
        %v2171 = vld [vmem:[#allocation10 + $0x2c] sm:$0xf]
        %v2172 = vld [vmem:[#allocation10 + $0x30] sm:$0xf]
        %v2173 = vld [vmem:[#allocation10 + $0x34] sm:$0xf]
        %v2174 = vld [vmem:[#allocation10 + $0x38] sm:$0xf]
        %v2175 = vld [vmem:[#allocation10 + $0x3c] sm:$0xf]
        %v2176 = vld [vmem:[#allocation10 + $0x40] sm:$0xf]
        %v2177 = vld [vmem:[#allocation10 + $0x44] sm:$0xf]
        %v2178 = vld [vmem:[#allocation10 + $0x48] sm:$0xf]
        %v2179 = vld [vmem:[#allocation10 + $0x4c] sm:$0xf]
        %v2180 = vld [vmem:[#allocation10 + $0x50] sm:$0xf]
        %v2181 = vld [vmem:[#allocation10 + $0x54] sm:$0xf]
        %v2182 = vld [vmem:[#allocation10 + $0x58] sm:$0xf]
        %v2183 = vld [vmem:[#allocation10 + $0x5c] sm:$0xf]
        %v2184 = vld [vmem:[#allocation10 + $0x60] sm:$0xf]
        %v2185 = vld [vmem:[#allocation10 + $0x64] sm:$0xf]
        %v2186 = vld [vmem:[#allocation10 + $0x68] sm:$0xf]
        %v2187 = vld [vmem:[#allocation10 + $0x6c] sm:$0xf]
        %v2188 = vld [vmem:[#allocation10 + $0x70] sm:$0xf]
        %v2189 = vld [vmem:[#allocation10 + $0x74] sm:$0xf]
        %v2190 = vld [vmem:[#allocation10 + $0x78] sm:$0xf]
        %v2191 = vld [vmem:[#allocation10 + $0x7c] sm:$0xf]
        %v2192 = vld [vmem:[#allocation10 + $0x80] sm:$0xf]
        %v2193 = vld [vmem:[#allocation10 + $0x84] sm:$0xf]
        %v2194 = vld [vmem:[#allocation10 + $0x88] sm:$0xf]
        %v2195 = vld [vmem:[#allocation10 + $0x8c] sm:$0xf]
        %v2196 = vld [vmem:[#allocation10 + $0x90] sm:$0xf]
        %v2197 = vld [vmem:[#allocation10 + $0x94] sm:$0xf]
        %v2198 = vld [vmem:[#allocation10 + $0x98] sm:$0xf]
        %v2199 = vld [vmem:[#allocation10 + $0x9c] sm:$0xf]
        %v2200 = vld [vmem:[#allocation10 + $0xa0] sm:$0xf]
        %v2201 = vld [vmem:[#allocation10 + $0xa4] sm:$0xf]
        %v2202 = vld [vmem:[#allocation10 + $0xa8] sm:$0xf]
        %v2203 = vld [vmem:[#allocation10 + $0xac] sm:$0xf]
        %v2204 = vld [vmem:[#allocation10 + $0xb0] sm:$0xf]
        %v2205 = vld [vmem:[#allocation10 + $0xb4] sm:$0xf]
        %v2206 = vld [vmem:[#allocation10 + $0xb8] sm:$0xf]
        %v2207 = vld [vmem:[#allocation10 + $0xbc] sm:$0xf]
        %v2208 = vld [vmem:[#allocation10 + $0xc0] sm:$0xf]
        %v2209 = vld [vmem:[#allocation10 + $0xc4] sm:$0xf]
        %v2210 = vld [vmem:[#allocation10 + $0xc8] sm:$0xf]
        %v2211 = vld [vmem:[#allocation10 + $0xcc] sm:$0xf]
        %v2212 = vld [vmem:[#allocation10 + $0xd0] sm:$0xf]
        %v2213 = vld [vmem:[#allocation10 + $0xd4] sm:$0xf]
        %v2214 = vld [vmem:[#allocation10 + $0xd8] sm:$0xf]
        %v2215 = vld [vmem:[#allocation10 + $0xdc] sm:$0xf]
        %v2216 = vld [vmem:[#allocation10 + $0xe0] sm:$0xf]
        %v2217 = vld [vmem:[#allocation10 + $0xe4] sm:$0xf]
        %v2218 = vld [vmem:[#allocation10 + $0xe8] sm:$0xf]
        %v2219 = vld [vmem:[#allocation10 + $0xec] sm:$0xf]
        %v2220 = vld [vmem:[#allocation10 + $0xf0] sm:$0xf]
        %v2221 = vld [vmem:[#allocation10 + $0xf4] sm:$0xf]
        %v2222 = vld [vmem:[#allocation10 + $0xf8] sm:$0xf]
        %v2223 = vld [vmem:[#allocation10 + $0xfc] sm:$0xf]
        %v2288 = vunpack.c.l.b16 %v2160
        %v2289 = vunpack.c.l.b16 %v2161
        %v2290 = vunpack.c.l.b16 %v2162
        %v2291 = vunpack.c.l.b16 %v2163
        %v2292 = vunpack.c.l.b16 %v2164
        %v2293 = vunpack.c.l.b16 %v2165
        %v2294 = vunpack.c.l.b16 %v2166
        %v2295 = vunpack.c.l.b16 %v2167
        %v2296 = vunpack.c.l.b16 %v2168
        %v2297 = vunpack.c.l.b16 %v2169
        %v2298 = vunpack.c.l.b16 %v2170
        %v2299 = vunpack.c.l.b16 %v2171
        %v2300 = vunpack.c.l.b16 %v2172
        %v2301 = vunpack.c.l.b16 %v2173
        %v2302 = vunpack.c.l.b16 %v2174
        %v2303 = vunpack.c.l.b16 %v2175
        %v2304 = vunpack.c.l.b16 %v2176
        %v2305 = vunpack.c.l.b16 %v2177
        %v2306 = vunpack.c.l.b16 %v2178
        %v2307 = vunpack.c.l.b16 %v2179
        %v2308 = vunpack.c.l.b16 %v2180
        %v2309 = vunpack.c.l.b16 %v2181
        %v2310 = vunpack.c.l.b16 %v2182
        %v2311 = vunpack.c.l.b16 %v2183
        %v2312 = vunpack.c.l.b16 %v2184
        %v2313 = vunpack.c.l.b16 %v2185
        %v2314 = vunpack.c.l.b16 %v2186
        %v2315 = vunpack.c.l.b16 %v2187
        %v2316 = vunpack.c.l.b16 %v2188
        %v2317 = vunpack.c.l.b16 %v2189
        %v2318 = vunpack.c.l.b16 %v2190
        %v2319 = vunpack.c.l.b16 %v2191
        %v2320 = vunpack.c.l.b16 %v2192
        %v2321 = vunpack.c.l.b16 %v2193
        %v2322 = vunpack.c.l.b16 %v2194
        %v2323 = vunpack.c.l.b16 %v2195
        %v2324 = vunpack.c.l.b16 %v2196
        %v2325 = vunpack.c.l.b16 %v2197
        %v2326 = vunpack.c.l.b16 %v2198
        %v2327 = vunpack.c.l.b16 %v2199
        %v2328 = vunpack.c.l.b16 %v2200
        %v2329 = vunpack.c.l.b16 %v2201
        %v2330 = vunpack.c.l.b16 %v2202
        %v2331 = vunpack.c.l.b16 %v2203
        %v2332 = vunpack.c.l.b16 %v2204
        %v2333 = vunpack.c.l.b16 %v2205
        %v2334 = vunpack.c.l.b16 %v2206
        %v2335 = vunpack.c.l.b16 %v2207
        %v2336 = vunpack.c.l.b16 %v2208
        %v2337 = vunpack.c.l.b16 %v2209
        %v2338 = vunpack.c.l.b16 %v2210
        %v2339 = vunpack.c.l.b16 %v2211
        %v2340 = vunpack.c.l.b16 %v2212
        %v2341 = vunpack.c.l.b16 %v2213
        %v2342 = vunpack.c.l.b16 %v2214
        %v2343 = vunpack.c.l.b16 %v2215
        %v2344 = vunpack.c.l.b16 %v2216
        %v2345 = vunpack.c.l.b16 %v2217
        %v2346 = vunpack.c.l.b16 %v2218
        %v2347 = vunpack.c.l.b16 %v2219
        %v2348 = vunpack.c.l.b16 %v2220
        %v2349 = vunpack.c.l.b16 %v2221
        %v2350 = vunpack.c.l.b16 %v2222
        %v2351 = vunpack.c.l.b16 %v2223
        %v2352 = vpack.c.b16 %v2289, %v2288
        %v2353 = vpack.c.b16 %v2291, %v2290
        %v2354 = vpack.c.b16 %v2293, %v2292
        %v2355 = vpack.c.b16 %v2295, %v2294
        %v2356 = vpack.c.b16 %v2297, %v2296
        %v2357 = vpack.c.b16 %v2299, %v2298
        %v2358 = vpack.c.b16 %v2301, %v2300
        %v2359 = vpack.c.b16 %v2303, %v2302
        %v2360 = vpack.c.b16 %v2305, %v2304
        %v2361 = vpack.c.b16 %v2307, %v2306
        %v2362 = vpack.c.b16 %v2309, %v2308
        %v2363 = vpack.c.b16 %v2311, %v2310
        %v2364 = vpack.c.b16 %v2313, %v2312
        %v2365 = vpack.c.b16 %v2315, %v2314
        %v2366 = vpack.c.b16 %v2317, %v2316
        %v2367 = vpack.c.b16 %v2319, %v2318
        %v2368 = vpack.c.b16 %v2321, %v2320
        %v2369 = vpack.c.b16 %v2323, %v2322
        %v2370 = vpack.c.b16 %v2325, %v2324
        %v2371 = vpack.c.b16 %v2327, %v2326
        %v2372 = vpack.c.b16 %v2329, %v2328
        %v2373 = vpack.c.b16 %v2331, %v2330
        %v2374 = vpack.c.b16 %v2333, %v2332
        %v2375 = vpack.c.b16 %v2335, %v2334
        %v2376 = vpack.c.b16 %v2337, %v2336
        %v2377 = vpack.c.b16 %v2339, %v2338
        %v2378 = vpack.c.b16 %v2341, %v2340
        %v2379 = vpack.c.b16 %v2343, %v2342
        %v2380 = vpack.c.b16 %v2345, %v2344
        %v2381 = vpack.c.b16 %v2347, %v2346
        %v2382 = vpack.c.b16 %v2349, %v2348
        %v2383 = vpack.c.b16 %v2351, %v2350
        %2416 = vmatprep.subr.bf16.mxu0 0
        %2417 = vmatpush1.bf16.msra.mxu0 %v2352
        %2418 = vmatprep.subr.bf16.mxu0 0
        %2419 = vmatpush1.bf16.msra.mxu0 %v2353
        %2420 = vmatprep.subr.bf16.mxu0 0
        %2421 = vmatpush1.bf16.msra.mxu0 %v2354
        %2422 = vmatprep.subr.bf16.mxu0 0
        %2423 = vmatpush1.bf16.msra.mxu0 %v2355
        %2424 = vmatprep.subr.bf16.mxu0 0
        %2425 = vmatpush1.bf16.msra.mxu0 %v2356
        %2426 = vmatprep.subr.bf16.mxu0 0
        %2427 = vmatpush1.bf16.msra.mxu0 %v2357
        %2428 = vmatprep.subr.bf16.mxu0 0
        %2429 = vmatpush1.bf16.msra.mxu0 %v2358
        %2430 = vmatprep.subr.bf16.mxu0 0
        %2431 = vmatpush1.bf16.msra.mxu0 %v2359
        %2432 = vmatprep.subr.bf16.mxu0 0
        %2433 = vmatpush1.bf16.msra.mxu0 %v2360
        %2434 = vmatprep.subr.bf16.mxu0 0
        %2435 = vmatpush1.bf16.msra.mxu0 %v2361
        %2436 = vmatprep.subr.bf16.mxu0 0
        %2437 = vmatpush1.bf16.msra.mxu0 %v2362
        %2438 = vmatprep.subr.bf16.mxu0 0
        %2439 = vmatpush1.bf16.msra.mxu0 %v2363
        %2440 = vmatprep.subr.bf16.mxu0 0
        %2441 = vmatpush1.bf16.msra.mxu0 %v2364
        %2442 = vmatprep.subr.bf16.mxu0 0
        %2443 = vmatpush1.bf16.msra.mxu0 %v2365
        %2444 = vmatprep.subr.bf16.mxu0 0
        %2445 = vmatpush1.bf16.msra.mxu0 %v2366
        %2446 = vmatprep.subr.bf16.mxu0 0
        %2447 = vmatpush1.bf16.msra.mxu0 %v2367
        %2448 = vmatprep.mubr.bf16.mxu0 %v2033
        %2449 = vmatmul.mubr.bf16.gmra.mrb[0].mxu0 %v2032
        %v2450 = vpop.f32.mrb[0].mxu0
        %v2451 = vadd.f32 0.0, %v2450
        %v2452 = vpop.f32.mrb[0].mxu0
        %v2453 = vpop.f32.mrb[0].mxu0
        %v2454 = vadd.f32 0.0, %v2453
        %v2455 = vpop.f32.mrb[0].mxu0
        %2456 = vmatprep.mubr.bf16.mxu0 %v2037
        %2457 = vmatmul.mubr.bf16.gmra.mrb[0].mxu0 %v2036
        %v2458 = vpop.f32.mrb[0].mxu0
        %v2459 = vadd.f32 0.0, %v2458
        %v2460 = vpop.f32.mrb[0].mxu0
        %v2461 = vpop.f32.mrb[0].mxu0
        %v2462 = vadd.f32 0.0, %v2461
        %v2463 = vpop.f32.mrb[0].mxu0
        %2464 = vmatprep.mubr.bf16.mxu0 %v2041
        %2465 = vmatmul.mubr.bf16.gmra.mrb[0].mxu0 %v2040
        %v2466 = vpop.f32.mrb[0].mxu0
        %v2467 = vadd.f32 0.0, %v2466
        %v2468 = vpop.f32.mrb[0].mxu0
        %v2469 = vpop.f32.mrb[0].mxu0
        %v2470 = vadd.f32 0.0, %v2469
        %v2471 = vpop.f32.mrb[0].mxu0
        %2472 = vmatprep.mubr.bf16.mxu0 %v2045
        %2473 = vmatmul.mubr.bf16.gmra.mrb[0].mxu0 %v2044
        %v2474 = vpop.f32.mrb[0].mxu0
        %v2475 = vadd.f32 0.0, %v2474
        %v2476 = vpop.f32.mrb[0].mxu0
        %v2477 = vpop.f32.mrb[0].mxu0
        %v2478 = vadd.f32 0.0, %v2477
        %v2479 = vpop.f32.mrb[0].mxu0
        %2480 = vmatprep.mubr.bf16.mxu0 %v2049
        %2481 = vmatmul.mubr.bf16.gmra.mrb[0].mxu0 %v2048
        %v2482 = vpop.f32.mrb[0].mxu0
        %v2483 = vadd.f32 0.0, %v2482
        %v2484 = vpop.f32.mrb[0].mxu0
        %v2485 = vpop.f32.mrb[0].mxu0
        %v2486 = vadd.f32 0.0, %v2485
        %v2487 = vpop.f32.mrb[0].mxu0
        %2488 = vmatprep.mubr.bf16.mxu0 %v2053
        %2489 = vmatmul.mubr.bf16.gmra.mrb[0].mxu0 %v2052
        %v2490 = vpop.f32.mrb[0].mxu0
        %v2491 = vadd.f32 0.0, %v2490
        %v2492 = vpop.f32.mrb[0].mxu0
        %v2493 = vpop.f32.mrb[0].mxu0
        %v2494 = vadd.f32 0.0, %v2493
        %v2495 = vpop.f32.mrb[0].mxu0
        %2496 = vmatprep.mubr.bf16.mxu0 %v2057
        %2497 = vmatmul.mubr.bf16.gmra.mrb[0].mxu0 %v2056
        %v2498 = vpop.f32.mrb[0].mxu0
        %v2499 = vadd.f32 0.0, %v2498
        %v2500 = vpop.f32.mrb[0].mxu0
        %v2501 = vpop.f32.mrb[0].mxu0
        %v2502 = vadd.f32 0.0, %v2501
        %v2503 = vpop.f32.mrb[0].mxu0
        %2504 = vmatprep.mubr.bf16.mxu0 %v2061
        %2505 = vmatmul.mubr.bf16.gmra.mrb[0].mxu0 %v2060
        %v2506 = vpop.f32.mrb[0].mxu0
        %v2507 = vadd.f32 0.0, %v2506
        %v2508 = vpop.f32.mrb[0].mxu0
        %v2509 = vpop.f32.mrb[0].mxu0
        %v2510 = vadd.f32 0.0, %v2509
        %v2511 = vpop.f32.mrb[0].mxu0
        %2512 = vmatprep.mubr.bf16.mxu0 %v2065
        %2513 = vmatmul.mubr.bf16.gmra.mrb[0].mxu0 %v2064
        %v2514 = vpop.f32.mrb[0].mxu0
        %v2515 = vadd.f32 0.0, %v2514
        %v2516 = vpop.f32.mrb[0].mxu0
        %v2517 = vpop.f32.mrb[0].mxu0
        %v2518 = vadd.f32 0.0, %v2517
        %v2519 = vpop.f32.mrb[0].mxu0
        %2520 = vmatprep.mubr.bf16.mxu0 %v2069
        %2521 = vmatmul.mubr.bf16.gmra.mrb[0].mxu0 %v2068
        %v2522 = vpop.f32.mrb[0].mxu0
        %v2523 = vadd.f32 0.0, %v2522
        %v2524 = vpop.f32.mrb[0].mxu0
        %v2525 = vpop.f32.mrb[0].mxu0
        %v2526 = vadd.f32 0.0, %v2525
        %v2527 = vpop.f32.mrb[0].mxu0
        %2528 = vmatprep.mubr.bf16.mxu0 %v2073
        %2529 = vmatmul.mubr.bf16.gmra.mrb[0].mxu0 %v2072
        %v2530 = vpop.f32.mrb[0].mxu0
        %v2531 = vadd.f32 0.0, %v2530
        %v2532 = vpop.f32.mrb[0].mxu0
        %v2533 = vpop.f32.mrb[0].mxu0
        %v2534 = vadd.f32 0.0, %v2533
        %v2535 = vpop.f32.mrb[0].mxu0
        %2536 = vmatprep.mubr.bf16.mxu0 %v2077
        %2537 = vmatmul.mubr.bf16.gmra.mrb[0].mxu0 %v2076
        %v2538 = vpop.f32.mrb[0].mxu0
        %v2539 = vadd.f32 0.0, %v2538
        %v2540 = vpop.f32.mrb[0].mxu0
        %v2541 = vpop.f32.mrb[0].mxu0
        %v2542 = vadd.f32 0.0, %v2541
        %v2543 = vpop.f32.mrb[0].mxu0
        %2544 = vmatprep.mubr.bf16.mxu0 %v2081
        %2545 = vmatmul.mubr.bf16.gmra.mrb[0].mxu0 %v2080
        %v2546 = vpop.f32.mrb[0].mxu0
        %v2547 = vadd.f32 0.0, %v2546
        %v2548 = vpop.f32.mrb[0].mxu0
        %v2549 = vpop.f32.mrb[0].mxu0
        %v2550 = vadd.f32 0.0, %v2549
        %v2551 = vpop.f32.mrb[0].mxu0
        %2552 = vmatprep.mubr.bf16.mxu0 %v2085
        %2553 = vmatmul.mubr.bf16.gmra.mrb[0].mxu0 %v2084
        %v2554 = vpop.f32.mrb[0].mxu0
        %v2555 = vadd.f32 0.0, %v2554
        %v2556 = vpop.f32.mrb[0].mxu0
        %v2557 = vpop.f32.mrb[0].mxu0
        %v2558 = vadd.f32 0.0, %v2557
        %v2559 = vpop.f32.mrb[0].mxu0
        %2560 = vmatprep.mubr.bf16.mxu0 %v2089
        %2561 = vmatmul.mubr.bf16.gmra.mrb[0].mxu0 %v2088
        %v2562 = vpop.f32.mrb[0].mxu0
        %v2563 = vadd.f32 0.0, %v2562
        %v2564 = vpop.f32.mrb[0].mxu0
        %v2565 = vpop.f32.mrb[0].mxu0
        %v2566 = vadd.f32 0.0, %v2565
        %v2567 = vpop.f32.mrb[0].mxu0
        %2568 = vmatprep.mubr.bf16.mxu0 %v2093
        %2569 = vmatmul.mubr.bf16.gmra.mrb[0].mxu0 %v2092
        %v2570 = vpop.f32.mrb[0].mxu0
        %v2571 = vadd.f32 0.0, %v2570
        %v2572 = vpop.f32.mrb[0].mxu0
        %v2573 = vpop.f32.mrb[0].mxu0
        %v2574 = vadd.f32 0.0, %v2573
        %v2575 = vpop.f32.mrb[0].mxu0
        %2576 = vmatprep.mubr.bf16.mxu0 %v2097
        %2577 = vmatmul.mubr.bf16.gmra.mrb[0].mxu0 %v2096
        %v2578 = vpop.f32.mrb[0].mxu0
        %v2579 = vadd.f32 0.0, %v2578
        %v2580 = vpop.f32.mrb[0].mxu0
        %v2581 = vpop.f32.mrb[0].mxu0
        %v2582 = vadd.f32 0.0, %v2581
        %v2583 = vpop.f32.mrb[0].mxu0
        %2584 = vmatprep.mubr.bf16.mxu0 %v2101
        %2585 = vmatmul.mubr.bf16.gmra.mrb[0].mxu0 %v2100
        %v2586 = vpop.f32.mrb[0].mxu0
        %v2587 = vadd.f32 0.0, %v2586
        %v2588 = vpop.f32.mrb[0].mxu0
        %v2589 = vpop.f32.mrb[0].mxu0
        %v2590 = vadd.f32 0.0, %v2589
        %v2591 = vpop.f32.mrb[0].mxu0
        %2592 = vmatprep.mubr.bf16.mxu0 %v2105
        %2593 = vmatmul.mubr.bf16.gmra.mrb[0].mxu0 %v2104
        %v2594 = vpop.f32.mrb[0].mxu0
        %v2595 = vadd.f32 0.0, %v2594
        %v2596 = vpop.f32.mrb[0].mxu0
        %v2597 = vpop.f32.mrb[0].mxu0
        %v2598 = vadd.f32 0.0, %v2597
        %v2599 = vpop.f32.mrb[0].mxu0
        %2600 = vmatprep.mubr.bf16.mxu0 %v2109
        %2601 = vmatmul.mubr.bf16.gmra.mrb[0].mxu0 %v2108
        %v2602 = vpop.f32.mrb[0].mxu0
        %v2603 = vadd.f32 0.0, %v2602
        %v2604 = vpop.f32.mrb[0].mxu0
        %v2605 = vpop.f32.mrb[0].mxu0
        %v2606 = vadd.f32 0.0, %v2605
        %v2607 = vpop.f32.mrb[0].mxu0
        %2608 = vmatprep.mubr.bf16.mxu0 %v2113
        %2609 = vmatmul.mubr.bf16.gmra.mrb[0].mxu0 %v2112
        %v2610 = vpop.f32.mrb[0].mxu0
        %v2611 = vadd.f32 0.0, %v2610
        %v2612 = vpop.f32.mrb[0].mxu0
        %v2613 = vpop.f32.mrb[0].mxu0
        %v2614 = vadd.f32 0.0, %v2613
        %v2615 = vpop.f32.mrb[0].mxu0
        %2616 = vmatprep.mubr.bf16.mxu0 %v2117
        %2617 = vmatmul.mubr.bf16.gmra.mrb[0].mxu0 %v2116
        %v2618 = vpop.f32.mrb[0].mxu0
        %v2619 = vadd.f32 0.0, %v2618
        %v2620 = vpop.f32.mrb[0].mxu0
        %v2621 = vpop.f32.mrb[0].mxu0
        %v2622 = vadd.f32 0.0, %v2621
        %v2623 = vpop.f32.mrb[0].mxu0
        %2624 = vmatprep.mubr.bf16.mxu0 %v2121
        %2625 = vmatmul.mubr.bf16.gmra.mrb[0].mxu0 %v2120
        %v2626 = vpop.f32.mrb[0].mxu0
        %v2627 = vadd.f32 0.0, %v2626
        %v2628 = vpop.f32.mrb[0].mxu0
        %v2629 = vpop.f32.mrb[0].mxu0
        %v2630 = vadd.f32 0.0, %v2629
        %v2631 = vpop.f32.mrb[0].mxu0
        %2632 = vmatprep.mubr.bf16.mxu0 %v2125
        %2633 = vmatmul.mubr.bf16.gmra.mrb[0].mxu0 %v2124
        %v2634 = vpop.f32.mrb[0].mxu0
        %v2635 = vadd.f32 0.0, %v2634
        %v2636 = vpop.f32.mrb[0].mxu0
        %v2637 = vpop.f32.mrb[0].mxu0
        %v2638 = vadd.f32 0.0, %v2637
        %v2639 = vpop.f32.mrb[0].mxu0
        %2640 = vmatprep.mubr.bf16.mxu0 %v2129
        %2641 = vmatmul.mubr.bf16.gmra.mrb[0].mxu0 %v2128
        %v2642 = vpop.f32.mrb[0].mxu0
        %v2643 = vadd.f32 0.0, %v2642
        %v2644 = vpop.f32.mrb[0].mxu0
        %v2645 = vpop.f32.mrb[0].mxu0
        %v2646 = vadd.f32 0.0, %v2645
        %v2647 = vpop.f32.mrb[0].mxu0
        %2648 = vmatprep.mubr.bf16.mxu0 %v2133
        %2649 = vmatmul.mubr.bf16.gmra.mrb[0].mxu0 %v2132
        %v2650 = vpop.f32.mrb[0].mxu0
        %v2651 = vadd.f32 0.0, %v2650
        %v2652 = vpop.f32.mrb[0].mxu0
        %v2653 = vpop.f32.mrb[0].mxu0
        %v2654 = vadd.f32 0.0, %v2653
        %v2655 = vpop.f32.mrb[0].mxu0
        %2656 = vmatprep.mubr.bf16.mxu0 %v2137
        %2657 = vmatmul.mubr.bf16.gmra.mrb[0].mxu0 %v2136
        %v2658 = vpop.f32.mrb[0].mxu0
        %v2659 = vadd.f32 0.0, %v2658
        %v2660 = vpop.f32.mrb[0].mxu0
        %v2661 = vpop.f32.mrb[0].mxu0
        %v2662 = vadd.f32 0.0, %v2661
        %v2663 = vpop.f32.mrb[0].mxu0
        %2664 = vmatprep.mubr.bf16.mxu0 %v2141
        %2665 = vmatmul.mubr.bf16.gmra.mrb[0].mxu0 %v2140
        %v2666 = vpop.f32.mrb[0].mxu0
        %v2667 = vadd.f32 0.0, %v2666
        %v2668 = vpop.f32.mrb[0].mxu0
        %v2669 = vpop.f32.mrb[0].mxu0
        %v2670 = vadd.f32 0.0, %v2669
        %v2671 = vpop.f32.mrb[0].mxu0
        %2672 = vmatprep.mubr.bf16.mxu0 %v2145
        %2673 = vmatmul.mubr.bf16.gmra.mrb[0].mxu0 %v2144
        %v2674 = vpop.f32.mrb[0].mxu0
        %v2675 = vadd.f32 0.0, %v2674
        %v2676 = vpop.f32.mrb[0].mxu0
        %v2677 = vpop.f32.mrb[0].mxu0
        %v2678 = vadd.f32 0.0, %v2677
        %v2679 = vpop.f32.mrb[0].mxu0
        %2680 = vmatprep.mubr.bf16.mxu0 %v2149
        %2681 = vmatmul.mubr.bf16.gmra.mrb[0].mxu0 %v2148
        %v2682 = vpop.f32.mrb[0].mxu0
        %v2683 = vadd.f32 0.0, %v2682
        %v2684 = vpop.f32.mrb[0].mxu0
        %v2685 = vpop.f32.mrb[0].mxu0
        %v2686 = vadd.f32 0.0, %v2685
        %v2687 = vpop.f32.mrb[0].mxu0
        %2688 = vmatprep.mubr.bf16.mxu0 %v2153
        %2689 = vmatmul.mubr.bf16.gmra.mrb[0].mxu0 %v2152
        %v2690 = vpop.f32.mrb[0].mxu0
        %v2691 = vadd.f32 0.0, %v2690
        %v2692 = vpop.f32.mrb[0].mxu0
        %v2693 = vpop.f32.mrb[0].mxu0
        %v2694 = vadd.f32 0.0, %v2693
        %v2695 = vpop.f32.mrb[0].mxu0
        %2696 = vmatprep.mubr.bf16.mxu0 %v2157
        %2697 = vmatmul.mubr.bf16.gmra.mrb[0].mxu0 %v2156
        %v2698 = vpop.f32.mrb[0].mxu0
        %v2699 = vadd.f32 0.0, %v2698
        %v2700 = vpop.f32.mrb[0].mxu0
        %v2701 = vpop.f32.mrb[0].mxu0
        %v2702 = vadd.f32 0.0, %v2701
        %v2703 = vpop.f32.mrb[0].mxu0
        %2704 = vdwg.mxu0
        %2705 = vmatprep.subr.bf16.mxu0 0
        %2706 = vmatpush1.bf16.msra.mxu0 %v2368
        %2707 = vmatprep.subr.bf16.mxu0 0
        %2708 = vmatpush1.bf16.msra.mxu0 %v2369
        %2709 = vmatprep.subr.bf16.mxu0 0
        %2710 = vmatpush1.bf16.msra.mxu0 %v2370
        %2711 = vmatprep.subr.bf16.mxu0 0
        %2712 = vmatpush1.bf16.msra.mxu0 %v2371
        %2713 = vmatprep.subr.bf16.mxu0 0
        %2714 = vmatpush1.bf16.msra.mxu0 %v2372
        %2715 = vmatprep.subr.bf16.mxu0 0
        %2716 = vmatpush1.bf16.msra.mxu0 %v2373
        %2717 = vmatprep.subr.bf16.mxu0 0
        %2718 = vmatpush1.bf16.msra.mxu0 %v2374
        %2719 = vmatprep.subr.bf16.mxu0 0
        %2720 = vmatpush1.bf16.msra.mxu0 %v2375
        %2721 = vmatprep.subr.bf16.mxu0 0
        %2722 = vmatpush1.bf16.msra.mxu0 %v2376
        %2723 = vmatprep.subr.bf16.mxu0 0
        %2724 = vmatpush1.bf16.msra.mxu0 %v2377
        %2725 = vmatprep.subr.bf16.mxu0 0
        %2726 = vmatpush1.bf16.msra.mxu0 %v2378
        %2727 = vmatprep.subr.bf16.mxu0 0
        %2728 = vmatpush1.bf16.msra.mxu0 %v2379
        %2729 = vmatprep.subr.bf16.mxu0 0
        %2730 = vmatpush1.bf16.msra.mxu0 %v2380
        %2731 = vmatprep.subr.bf16.mxu0 0
        %2732 = vmatpush1.bf16.msra.mxu0 %v2381
        %2733 = vmatprep.subr.bf16.mxu0 0
        %2734 = vmatpush1.bf16.msra.mxu0 %v2382
        %2735 = vmatprep.subr.bf16.mxu0 0
        %2736 = vmatpush1.bf16.msra.mxu0 %v2383
        %2737 = vmatprep.mubr.bf16.mxu0 %v2035
        %2738 = vmatmul.mubr.bf16.gmra.mrb[0].mxu0 %v2034
        %v2739 = vpop.f32.mrb[0].mxu0
        %v2740 = vadd.f32 %v2451, %v2739
        %v2741 = vpop.f32.mrb[0].mxu0
        %v2742 = vpop.f32.mrb[0].mxu0
        %v2743 = vadd.f32 %v2454, %v2742
        %v2744 = vpop.f32.mrb[0].mxu0
        %2745 = vmatprep.mubr.bf16.mxu0 %v2039
        %2746 = vmatmul.mubr.bf16.gmra.mrb[0].mxu0 %v2038
        %v2747 = vpop.f32.mrb[0].mxu0
        %v2748 = vadd.f32 %v2459, %v2747
        %v2749 = vpop.f32.mrb[0].mxu0
        %v2750 = vpop.f32.mrb[0].mxu0
        %v2751 = vadd.f32 %v2462, %v2750
        %v2752 = vpop.f32.mrb[0].mxu0
        %2753 = vmatprep.mubr.bf16.mxu0 %v2043
        %2754 = vmatmul.mubr.bf16.gmra.mrb[0].mxu0 %v2042
        %v2755 = vpop.f32.mrb[0].mxu0
        %v2756 = vadd.f32 %v2467, %v2755
        %v2757 = vpop.f32.mrb[0].mxu0
        %v2758 = vpop.f32.mrb[0].mxu0
        %v2759 = vadd.f32 %v2470, %v2758
        %v2760 = vpop.f32.mrb[0].mxu0
        %2761 = vmatprep.mubr.bf16.mxu0 %v2047
        %2762 = vmatmul.mubr.bf16.gmra.mrb[0].mxu0 %v2046
        %v2763 = vpop.f32.mrb[0].mxu0
        %v2764 = vadd.f32 %v2475, %v2763
        %v2765 = vpop.f32.mrb[0].mxu0
        %v2766 = vpop.f32.mrb[0].mxu0
        %v2767 = vadd.f32 %v2478, %v2766
        %v2768 = vpop.f32.mrb[0].mxu0
        %2769 = vmatprep.mubr.bf16.mxu0 %v2051
        %2770 = vmatmul.mubr.bf16.gmra.mrb[0].mxu0 %v2050
        %v2771 = vpop.f32.mrb[0].mxu0
        %v2772 = vadd.f32 %v2483, %v2771
        %v2773 = vpop.f32.mrb[0].mxu0
        %v2774 = vpop.f32.mrb[0].mxu0
        %v2775 = vadd.f32 %v2486, %v2774
        %v2776 = vpop.f32.mrb[0].mxu0
        %2777 = vmatprep.mubr.bf16.mxu0 %v2055
        %2778 = vmatmul.mubr.bf16.gmra.mrb[0].mxu0 %v2054
        %v2779 = vpop.f32.mrb[0].mxu0
        %v2780 = vadd.f32 %v2491, %v2779
        %v2781 = vpop.f32.mrb[0].mxu0
        %v2782 = vpop.f32.mrb[0].mxu0
        %v2783 = vadd.f32 %v2494, %v2782
        %v2784 = vpop.f32.mrb[0].mxu0
        %2785 = vmatprep.mubr.bf16.mxu0 %v2059
        %2786 = vmatmul.mubr.bf16.gmra.mrb[0].mxu0 %v2058
        %v2787 = vpop.f32.mrb[0].mxu0
        %v2788 = vadd.f32 %v2499, %v2787
        %v2789 = vpop.f32.mrb[0].mxu0
        %v2790 = vpop.f32.mrb[0].mxu0
        %v2791 = vadd.f32 %v2502, %v2790
        %v2792 = vpop.f32.mrb[0].mxu0
        %2793 = vmatprep.mubr.bf16.mxu0 %v2063
        %2794 = vmatmul.mubr.bf16.gmra.mrb[0].mxu0 %v2062
        %v2795 = vpop.f32.mrb[0].mxu0
        %v2796 = vadd.f32 %v2507, %v2795
        %v2797 = vpop.f32.mrb[0].mxu0
        %v2798 = vpop.f32.mrb[0].mxu0
        %v2799 = vadd.f32 %v2510, %v2798
        %v2800 = vpop.f32.mrb[0].mxu0
        %2801 = vmatprep.mubr.bf16.mxu0 %v2067
        %2802 = vmatmul.mubr.bf16.gmra.mrb[0].mxu0 %v2066
        %v2803 = vpop.f32.mrb[0].mxu0
        %v2804 = vadd.f32 %v2515, %v2803
        %v2805 = vpop.f32.mrb[0].mxu0
        %v2806 = vpop.f32.mrb[0].mxu0
        %v2807 = vadd.f32 %v2518, %v2806
        %v2808 = vpop.f32.mrb[0].mxu0
        %2809 = vmatprep.mubr.bf16.mxu0 %v2071
        %2810 = vmatmul.mubr.bf16.gmra.mrb[0].mxu0 %v2070
        %v2811 = vpop.f32.mrb[0].mxu0
        %v2812 = vadd.f32 %v2523, %v2811
        %v2813 = vpop.f32.mrb[0].mxu0
        %v2814 = vpop.f32.mrb[0].mxu0
        %v2815 = vadd.f32 %v2526, %v2814
        %v2816 = vpop.f32.mrb[0].mxu0
        %2817 = vmatprep.mubr.bf16.mxu0 %v2075
        %2818 = vmatmul.mubr.bf16.gmra.mrb[0].mxu0 %v2074
        %v2819 = vpop.f32.mrb[0].mxu0
        %v2820 = vadd.f32 %v2531, %v2819
        %v2821 = vpop.f32.mrb[0].mxu0
        %v2822 = vpop.f32.mrb[0].mxu0
        %v2823 = vadd.f32 %v2534, %v2822
        %v2824 = vpop.f32.mrb[0].mxu0
        %2825 = vmatprep.mubr.bf16.mxu0 %v2079
        %2826 = vmatmul.mubr.bf16.gmra.mrb[0].mxu0 %v2078
        %v2827 = vpop.f32.mrb[0].mxu0
        %v2828 = vadd.f32 %v2539, %v2827
        %v2829 = vpop.f32.mrb[0].mxu0
        %v2830 = vpop.f32.mrb[0].mxu0
        %v2831 = vadd.f32 %v2542, %v2830
        %v2832 = vpop.f32.mrb[0].mxu0
        %2833 = vmatprep.mubr.bf16.mxu0 %v2083
        %2834 = vmatmul.mubr.bf16.gmra.mrb[0].mxu0 %v2082
        %v2835 = vpop.f32.mrb[0].mxu0
        %v2836 = vadd.f32 %v2547, %v2835
        %v2837 = vpop.f32.mrb[0].mxu0
        %v2838 = vpop.f32.mrb[0].mxu0
        %v2839 = vadd.f32 %v2550, %v2838
        %v2840 = vpop.f32.mrb[0].mxu0
        %2841 = vmatprep.mubr.bf16.mxu0 %v2087
        %2842 = vmatmul.mubr.bf16.gmra.mrb[0].mxu0 %v2086
        %v2843 = vpop.f32.mrb[0].mxu0
        %v2844 = vadd.f32 %v2555, %v2843
        %v2845 = vpop.f32.mrb[0].mxu0
        %v2846 = vpop.f32.mrb[0].mxu0
        %v2847 = vadd.f32 %v2558, %v2846
        %v2848 = vpop.f32.mrb[0].mxu0
        %2849 = vmatprep.mubr.bf16.mxu0 %v2091
        %2850 = vmatmul.mubr.bf16.gmra.mrb[0].mxu0 %v2090
        %v2851 = vpop.f32.mrb[0].mxu0
        %v2852 = vadd.f32 %v2563, %v2851
        %v2853 = vpop.f32.mrb[0].mxu0
        %v2854 = vpop.f32.mrb[0].mxu0
        %v2855 = vadd.f32 %v2566, %v2854
        %v2856 = vpop.f32.mrb[0].mxu0
        %2857 = vmatprep.mubr.bf16.mxu0 %v2095
        %2858 = vmatmul.mubr.bf16.gmra.mrb[0].mxu0 %v2094
        %v2859 = vpop.f32.mrb[0].mxu0
        %v2860 = vadd.f32 %v2571, %v2859
        %v2861 = vpop.f32.mrb[0].mxu0
        %v2862 = vpop.f32.mrb[0].mxu0
        %v2863 = vadd.f32 %v2574, %v2862
        %v2864 = vpop.f32.mrb[0].mxu0
        %2865 = vmatprep.mubr.bf16.mxu0 %v2099
        %2866 = vmatmul.mubr.bf16.gmra.mrb[0].mxu0 %v2098
        %v2867 = vpop.f32.mrb[0].mxu0
        %v2868 = vadd.f32 %v2579, %v2867
        %v2869 = vpop.f32.mrb[0].mxu0
        %v2870 = vpop.f32.mrb[0].mxu0
        %v2871 = vadd.f32 %v2582, %v2870
        %v2872 = vpop.f32.mrb[0].mxu0
        %2873 = vmatprep.mubr.bf16.mxu0 %v2103
        %2874 = vmatmul.mubr.bf16.gmra.mrb[0].mxu0 %v2102
        %v2875 = vpop.f32.mrb[0].mxu0
        %v2876 = vadd.f32 %v2587, %v2875
        %v2877 = vpop.f32.mrb[0].mxu0
        %v2878 = vpop.f32.mrb[0].mxu0
        %v2879 = vadd.f32 %v2590, %v2878
        %v2880 = vpop.f32.mrb[0].mxu0
        %2881 = vmatprep.mubr.bf16.mxu0 %v2107
        %2882 = vmatmul.mubr.bf16.gmra.mrb[0].mxu0 %v2106
        %v2883 = vpop.f32.mrb[0].mxu0
        %v2884 = vadd.f32 %v2595, %v2883
        %v2885 = vpop.f32.mrb[0].mxu0
        %v2886 = vpop.f32.mrb[0].mxu0
        %v2887 = vadd.f32 %v2598, %v2886
        %v2888 = vpop.f32.mrb[0].mxu0
        %2889 = vmatprep.mubr.bf16.mxu0 %v2111
        %2890 = vmatmul.mubr.bf16.gmra.mrb[0].mxu0 %v2110
        %v2891 = vpop.f32.mrb[0].mxu0
        %v2892 = vadd.f32 %v2603, %v2891
        %v2893 = vpop.f32.mrb[0].mxu0
        %v2894 = vpop.f32.mrb[0].mxu0
        %v2895 = vadd.f32 %v2606, %v2894
        %v2896 = vpop.f32.mrb[0].mxu0
        %2897 = vmatprep.mubr.bf16.mxu0 %v2115
        %2898 = vmatmul.mubr.bf16.gmra.mrb[0].mxu0 %v2114
        %v2899 = vpop.f32.mrb[0].mxu0
        %v2900 = vadd.f32 %v2611, %v2899
        %v2901 = vpop.f32.mrb[0].mxu0
        %v2902 = vpop.f32.mrb[0].mxu0
        %v2903 = vadd.f32 %v2614, %v2902
        %v2904 = vpop.f32.mrb[0].mxu0
        %2905 = vmatprep.mubr.bf16.mxu0 %v2119
        %2906 = vmatmul.mubr.bf16.gmra.mrb[0].mxu0 %v2118
        %v2907 = vpop.f32.mrb[0].mxu0
        %v2908 = vadd.f32 %v2619, %v2907
        %v2909 = vpop.f32.mrb[0].mxu0
        %v2910 = vpop.f32.mrb[0].mxu0
        %v2911 = vadd.f32 %v2622, %v2910
        %v2912 = vpop.f32.mrb[0].mxu0
        %2913 = vmatprep.mubr.bf16.mxu0 %v2123
        %2914 = vmatmul.mubr.bf16.gmra.mrb[0].mxu0 %v2122
        %v2915 = vpop.f32.mrb[0].mxu0
        %v2916 = vadd.f32 %v2627, %v2915
        %v2917 = vpop.f32.mrb[0].mxu0
        %v2918 = vpop.f32.mrb[0].mxu0
        %v2919 = vadd.f32 %v2630, %v2918
        %v2920 = vpop.f32.mrb[0].mxu0
        %2921 = vmatprep.mubr.bf16.mxu0 %v2127
        %2922 = vmatmul.mubr.bf16.gmra.mrb[0].mxu0 %v2126
        %v2923 = vpop.f32.mrb[0].mxu0
        %v2924 = vadd.f32 %v2635, %v2923
        %v2925 = vpop.f32.mrb[0].mxu0
        %v2926 = vpop.f32.mrb[0].mxu0
        %v2927 = vadd.f32 %v2638, %v2926
        %v2928 = vpop.f32.mrb[0].mxu0
        %2929 = vmatprep.mubr.bf16.mxu0 %v2131
        %2930 = vmatmul.mubr.bf16.gmra.mrb[0].mxu0 %v2130
        %v2931 = vpop.f32.mrb[0].mxu0
        %v2932 = vadd.f32 %v2643, %v2931
        %v2933 = vpop.f32.mrb[0].mxu0
        %v2934 = vpop.f32.mrb[0].mxu0
        %v2935 = vadd.f32 %v2646, %v2934
        %v2936 = vpop.f32.mrb[0].mxu0
        %2937 = vmatprep.mubr.bf16.mxu0 %v2135
        %2938 = vmatmul.mubr.bf16.gmra.mrb[0].mxu0 %v2134
        %v2939 = vpop.f32.mrb[0].mxu0
        %v2940 = vadd.f32 %v2651, %v2939
        %v2941 = vpop.f32.mrb[0].mxu0
        %v2942 = vpop.f32.mrb[0].mxu0
        %v2943 = vadd.f32 %v2654, %v2942
        %v2944 = vpop.f32.mrb[0].mxu0
        %2945 = vmatprep.mubr.bf16.mxu0 %v2139
        %2946 = vmatmul.mubr.bf16.gmra.mrb[0].mxu0 %v2138
        %v2947 = vpop.f32.mrb[0].mxu0
        %v2948 = vadd.f32 %v2659, %v2947
        %v2949 = vpop.f32.mrb[0].mxu0
        %v2950 = vpop.f32.mrb[0].mxu0
        %v2951 = vadd.f32 %v2662, %v2950
        %v2952 = vpop.f32.mrb[0].mxu0
        %2953 = vmatprep.mubr.bf16.mxu0 %v2143
        %2954 = vmatmul.mubr.bf16.gmra.mrb[0].mxu0 %v2142
        %v2955 = vpop.f32.mrb[0].mxu0
        %v2956 = vadd.f32 %v2667, %v2955
        %v2957 = vpop.f32.mrb[0].mxu0
        %v2958 = vpop.f32.mrb[0].mxu0
        %v2959 = vadd.f32 %v2670, %v2958
        %v2960 = vpop.f32.mrb[0].mxu0
        %2961 = vmatprep.mubr.bf16.mxu0 %v2147
        %2962 = vmatmul.mubr.bf16.gmra.mrb[0].mxu0 %v2146
        %v2963 = vpop.f32.mrb[0].mxu0
        %v2964 = vadd.f32 %v2675, %v2963
        %v2965 = vpop.f32.mrb[0].mxu0
        %v2966 = vpop.f32.mrb[0].mxu0
        %v2967 = vadd.f32 %v2678, %v2966
        %v2968 = vpop.f32.mrb[0].mxu0
        %2969 = vmatprep.mubr.bf16.mxu0 %v2151
        %2970 = vmatmul.mubr.bf16.gmra.mrb[0].mxu0 %v2150
        %v2971 = vpop.f32.mrb[0].mxu0
        %v2972 = vadd.f32 %v2683, %v2971
        %v2973 = vpop.f32.mrb[0].mxu0
        %v2974 = vpop.f32.mrb[0].mxu0
        %v2975 = vadd.f32 %v2686, %v2974
        %v2976 = vpop.f32.mrb[0].mxu0
        %2977 = vmatprep.mubr.bf16.mxu0 %v2155
        %2978 = vmatmul.mubr.bf16.gmra.mrb[0].mxu0 %v2154
        %v2979 = vpop.f32.mrb[0].mxu0
        %v2980 = vadd.f32 %v2691, %v2979
        %v2981 = vpop.f32.mrb[0].mxu0
        %v2982 = vpop.f32.mrb[0].mxu0
        %v2983 = vadd.f32 %v2694, %v2982
        %v2984 = vpop.f32.mrb[0].mxu0
        %2985 = vmatprep.mubr.bf16.mxu0 %v2159
        %2986 = vmatmul.mubr.bf16.gmra.mrb[0].mxu0 %v2158
        %v2987 = vpop.f32.mrb[0].mxu0
        %v2988 = vadd.f32 %v2699, %v2987
        %v2989 = vpop.f32.mrb[0].mxu0
        %v2990 = vpop.f32.mrb[0].mxu0
        %v2991 = vadd.f32 %v2702, %v2990
        %v2992 = vpop.f32.mrb[0].mxu0
        %2993 = vdwg.mxu0
        %v2994 = vtanh.pop %v2740
        %v2995 = vtanh.pop %v2743
        %v2996 = vtanh.pop %v2748
        %v2997 = vtanh.pop %v2751
        %v2998 = vtanh.pop %v2756
        %v2999 = vtanh.pop %v2759
        %v3000 = vtanh.pop %v2764
        %v3001 = vtanh.pop %v2767
        %v3002 = vtanh.pop %v2772
        %v3003 = vtanh.pop %v2775
        %v3004 = vtanh.pop %v2780
        %v3005 = vtanh.pop %v2783
        %v3006 = vtanh.pop %v2788
        %v3007 = vtanh.pop %v2791
        %v3008 = vtanh.pop %v2796
        %v3009 = vtanh.pop %v2799
        %v3010 = vtanh.pop %v2804
        %v3011 = vtanh.pop %v2807
        %v3012 = vtanh.pop %v2812
        %v3013 = vtanh.pop %v2815
        %v3014 = vtanh.pop %v2820
        %v3015 = vtanh.pop %v2823
        %v3016 = vtanh.pop %v2828
        %v3017 = vtanh.pop %v2831
        %v3018 = vtanh.pop %v2836
        %v3019 = vtanh.pop %v2839
        %v3020 = vtanh.pop %v2844
        %v3021 = vtanh.pop %v2847
        %v3022 = vtanh.pop %v2852
        %v3023 = vtanh.pop %v2855
        %v3024 = vtanh.pop %v2860
        %v3025 = vtanh.pop %v2863
        %v3026 = vtanh.pop %v2868
        %v3027 = vtanh.pop %v2871
        %v3028 = vtanh.pop %v2876
        %v3029 = vtanh.pop %v2879
        %v3030 = vtanh.pop %v2884
        %v3031 = vtanh.pop %v2887
        %v3032 = vtanh.pop %v2892
        %v3033 = vtanh.pop %v2895
        %v3034 = vtanh.pop %v2900
        %v3035 = vtanh.pop %v2903
        %v3036 = vtanh.pop %v2908
        %v3037 = vtanh.pop %v2911
        %v3038 = vtanh.pop %v2916
        %v3039 = vtanh.pop %v2919
        %v3040 = vtanh.pop %v2924
        %v3041 = vtanh.pop %v2927
        %v3042 = vtanh.pop %v2932
        %v3043 = vtanh.pop %v2935
        %v3044 = vtanh.pop %v2940
        %v3045 = vtanh.pop %v2943
        %v3046 = vtanh.pop %v2948
        %v3047 = vtanh.pop %v2951
        %v3048 = vtanh.pop %v2956
        %v3049 = vtanh.pop %v2959
        %v3050 = vtanh.pop %v2964
        %v3051 = vtanh.pop %v2967
        %v3052 = vtanh.pop %v2972
        %v3053 = vtanh.pop %v2975
        %v3054 = vtanh.pop %v2980
        %v3055 = vtanh.pop %v2983
        %v3056 = vtanh.pop %v2988
        %v3057 = vtanh.pop %v2991
        %3058 = vst [vmem:[%s285] sm:$0xff] %v2994
        %3059 = vst [vmem:[%s285 + $0x8] sm:$0xff] %v2995
        %3060 = vst [vmem:[%s285 + $0x10] sm:$0xff] %v2996
        %3061 = vst [vmem:[%s285 + $0x18] sm:$0xff] %v2997
        %3062 = vst [vmem:[%s285 + $0x20] sm:$0xff] %v2998
        %3063 = vst [vmem:[%s285 + $0x28] sm:$0xff] %v2999
        %3064 = vst [vmem:[%s285 + $0x30] sm:$0xff] %v3000
        %3065 = vst [vmem:[%s285 + $0x38] sm:$0xff] %v3001
        %3066 = vst [vmem:[%s285 + $0x40] sm:$0xff] %v3002
        %3067 = vst [vmem:[%s285 + $0x48] sm:$0xff] %v3003
        %3068 = vst [vmem:[%s285 + $0x50] sm:$0xff] %v3004
        %3069 = vst [vmem:[%s285 + $0x58] sm:$0xff] %v3005
        %3070 = vst [vmem:[%s285 + $0x60] sm:$0xff] %v3006
        %3071 = vst [vmem:[%s285 + $0x68] sm:$0xff] %v3007
        %3072 = vst [vmem:[%s285 + $0x70] sm:$0xff] %v3008
        %3073 = vst [vmem:[%s285 + $0x78] sm:$0xff] %v3009
        %3074 = vst [vmem:[%s285 + $0x80] sm:$0xff] %v3010
        %3075 = vst [vmem:[%s285 + $0x88] sm:$0xff] %v3011
        %3076 = vst [vmem:[%s285 + $0x90] sm:$0xff] %v3012
        %3077 = vst [vmem:[%s285 + $0x98] sm:$0xff] %v3013
        %3078 = vst [vmem:[%s285 + $0xa0] sm:$0xff] %v3014
        %3079 = vst [vmem:[%s285 + $0xa8] sm:$0xff] %v3015
        %3080 = vst [vmem:[%s285 + $0xb0] sm:$0xff] %v3016
        %3081 = vst [vmem:[%s285 + $0xb8] sm:$0xff] %v3017
        %3082 = vst [vmem:[%s285 + $0xc0] sm:$0xff] %v3018
        %3083 = vst [vmem:[%s285 + $0xc8] sm:$0xff] %v3019
        %3084 = vst [vmem:[%s285 + $0xd0] sm:$0xff] %v3020
        %3085 = vst [vmem:[%s285 + $0xd8] sm:$0xff] %v3021
        %3086 = vst [vmem:[%s285 + $0xe0] sm:$0xff] %v3022
        %3087 = vst [vmem:[%s285 + $0xe8] sm:$0xff] %v3023
        %3088 = vst [vmem:[%s285 + $0xf0] sm:$0xff] %v3024
        %3089 = vst [vmem:[%s285 + $0xf8] sm:$0xff] %v3025
        %3090 = vst [vmem:[%s285 + $0x100] sm:$0xff] %v3026
        %3091 = vst [vmem:[%s285 + $0x108] sm:$0xff] %v3027
        %3092 = vst [vmem:[%s285 + $0x110] sm:$0xff] %v3028
        %3093 = vst [vmem:[%s285 + $0x118] sm:$0xff] %v3029
        %3094 = vst [vmem:[%s285 + $0x120] sm:$0xff] %v3030
        %3095 = vst [vmem:[%s285 + $0x128] sm:$0xff] %v3031
        %3096 = vst [vmem:[%s285 + $0x130] sm:$0xff] %v3032
        %3097 = vst [vmem:[%s285 + $0x138] sm:$0xff] %v3033
        %3098 = vst [vmem:[%s285 + $0x140] sm:$0xff] %v3034
        %3099 = vst [vmem:[%s285 + $0x148] sm:$0xff] %v3035
        %3100 = vst [vmem:[%s285 + $0x150] sm:$0xff] %v3036
        %3101 = vst [vmem:[%s285 + $0x158] sm:$0xff] %v3037
        %3102 = vst [vmem:[%s285 + $0x160] sm:$0xff] %v3038
        %3103 = vst [vmem:[%s285 + $0x168] sm:$0xff] %v3039
        %3104 = vst [vmem:[%s285 + $0x170] sm:$0xff] %v3040
        %3105 = vst [vmem:[%s285 + $0x178] sm:$0xff] %v3041
        %3106 = vst [vmem:[%s285 + $0x180] sm:$0xff] %v3042
        %3107 = vst [vmem:[%s285 + $0x188] sm:$0xff] %v3043
        %3108 = vst [vmem:[%s285 + $0x190] sm:$0xff] %v3044
        %3109 = vst [vmem:[%s285 + $0x198] sm:$0xff] %v3045
        %3110 = vst [vmem:[%s285 + $0x1a0] sm:$0xff] %v3046
        %3111 = vst [vmem:[%s285 + $0x1a8] sm:$0xff] %v3047
        %3112 = vst [vmem:[%s285 + $0x1b0] sm:$0xff] %v3048
        %3113 = vst [vmem:[%s285 + $0x1b8] sm:$0xff] %v3049
        %3114 = vst [vmem:[%s285 + $0x1c0] sm:$0xff] %v3050
        %3115 = vst [vmem:[%s285 + $0x1c8] sm:$0xff] %v3051
        %3116 = vst [vmem:[%s285 + $0x1d0] sm:$0xff] %v3052
        %3117 = vst [vmem:[%s285 + $0x1d8] sm:$0xff] %v3053
        %3118 = vst [vmem:[%s285 + $0x1e0] sm:$0xff] %v3054
        %3119 = vst [vmem:[%s285 + $0x1e8] sm:$0xff] %v3055
        %3120 = vst [vmem:[%s285 + $0x1f0] sm:$0xff] %v3056
        %3121 = vst [vmem:[%s285 + $0x1f8] sm:$0xff] %v3057
        %s3122 = smul.u32 64, %s19
        %p3123 = scmp.lt.s32.totalorder %s3122, 127
        %s3124 = scalar_select %p3123, %s3122, 127
        %s3125 = smul.addr %s3124, 8
        %s3126 = scalar_lea.vmem %s5, %s3125
        // Predicated region
        $region57: #{dcgan_generator_forward.1} parent=39 // pred_check
          %p3127 = pneg %p147
        $region58: #{dcgan_generator_forward.1} parent=39 // pred_check_branch
          %3129 = sbr.rel (%p3127) target = $region60
        $region59: #{dcgan_generator_forward.1} parent=39 // pred_region
          %s3130 = smul.u32 64, %s19
        $region60: #{dcgan_generator_forward.1} parent=39 // pred_fallthru
          _
      $region40: #{dcgan_generator_forward.1} parent=5 // pred_fallthru
        _
      %p3131 = scmp.le.s32.totalorder 2, %s14
      // Predicated region
      $region61: #{dcgan_generator_forward.1} parent=5 // pred_check
        %p3132 = pneg %p3131
      $region62: #{dcgan_generator_forward.1} parent=5 // pred_check_branch
        %3134 = sbr.rel (%p3132) target = $region64
      $region63: #{dcgan_generator_forward.1} parent=5 // pred_region
        %s3135 = ssub.s32 %s14, 2
        // Predicated region
        $region65: #{dcgan_generator_forward.1} parent=63 // pred_check
          %p3136 = pneg %p153
        $region66: #{dcgan_generator_forward.1} parent=63 // pred_check_branch
          %3138 = sbr.rel (%p3136) target = $region68
        $region67: #{dcgan_generator_forward.1} parent=63 // pred_region
          %s3139 = smul.u32 64, %s20
          %p3140 = scmp.lt.s32.totalorder %s3139, 127
          %s3141 = scalar_select %p3140, %s3139, 127
          %s3142 = smul.addr %s3141, 8
          %s3143 = scalar_lea.vmem %s5, %s3142
        $region68: #{dcgan_generator_forward.1} parent=63 // pred_fallthru
          _
      $region64: #{dcgan_generator_forward.1} parent=5 // pred_fallthru
        _
    $region6: #{dcgan_generator_forward.1} parent=1 // loop_footer
      %s18 = sadd.s32 1, %s14
    $region7: #{dcgan_generator_forward.1} parent=1 // loop_footer_branch
      %13 = sbr.rel target = $region3
    $region8: #{dcgan_generator_forward.1} parent=1 // loop_exit
      _
    %3144 = vsyncpa [#allocation6], 1
    %s3145 = scalar_lea.sflag [#allocation6], 1
    %3146 = vsyncpa %s3145, 1
    %3147 = vsyncpa [#allocation8], 1
    %3148 = vsyncpa [#allocation11], 1

</llo_original>
